<compile_context>
chip_gen: v7x
topology: tpu7x:2x2x1
jax: 0.10.0
libtpu: 0.0.40
codegen_flags: <defaults>
</compile_context>

<pallas_src>
import functools

import jax
import jax.numpy as jnp
from jax import lax
from jax.experimental import pallas as pl
from jax.experimental.pallas import tpu as pltpu

LEAKY_SLOPE = 0.05


def _round_up(x, m):
    return (x + m - 1) // m * m


def _tiles(M, K, Nn):
    """Padded dims + tile sizes for an (M, K) @ (K, Nn) GEMM."""
    Mp = _round_up(M, 8)
    if Mp <= 1024:
        bm = Mp                      # single M tile, no 128-row padding waste
    else:
        bm = 512
        Mp = _round_up(M, bm)        # multi-tile: keeps >=2 parallel steps
    Kp = _round_up(K, 128)
    bk = Kp if Kp <= 512 else (256 if Kp % 256 == 0 else 128)
    Np = _round_up(Nn, 128)
    bn = 256 if Np % 256 == 0 else 128
    return Mp, Kp, Np, bm, bk, bn


# ----------------------------- Pallas kernels -----------------------------

def _gemm_bias_act_kernel(a_ref, b_ref, bias_ref, y_ref, acc_ref, *, act):
    """y = act(a @ b + bias) with f32 accumulation on the MXU."""
    @pl.when(pl.program_id(2) == 0)
    def _():
        acc_ref[...] = jnp.zeros_like(acc_ref)

    acc_ref[...] += jnp.dot(a_ref[...], b_ref[...],
                            preferred_element_type=jnp.float32)

    @pl.when(pl.program_id(2) == pl.num_programs(2) - 1)
    def _():
        y = acc_ref[...] + bias_ref[...]
        if act == "tanh":
            y = jnp.tanh(y)
        elif act == "leaky_relu":
            y = jnp.where(y > 0, y, LEAKY_SLOPE * y)
        y_ref[...] = y.astype(y_ref.dtype)


def _phase_gemm_stats_kernel(a_ref, b_ref, rm_ref, oh_ref,
                             y_ref, s_ref, q_ref, acc_ref):
    """Phase-decomposed deconv GEMM with fused (masked) BN batch statistics.

    rm_ref: (bm, 4) f32 -- row validity per output phase.
    oh_ref: (4, bn) f32 -- one-hot mapping of GEMM columns to phases.
    s_ref/q_ref: (8, bn) partial column sum / sum-of-squares (row 0 used).
    """
    @pl.when(pl.program_id(2) == 0)
    def _():
        acc_ref[...] = jnp.zeros_like(acc_ref)

    acc_ref[...] += jnp.dot(a_ref[...], b_ref[...],
                            preferred_element_type=jnp.float32)

    @pl.when(pl.program_id(2) == pl.num_programs(2) - 1)
    def _():
        y = acc_ref[...]
        y_ref[...] = y.astype(y_ref.dtype)

        rm = rm_ref[...]                                   # (bm, 4)
        oh = oh_ref[...]                                   # (4, bn)
        mask = rm[:, 0:1] * oh[0:1, :]
        for p in range(1, 4):
            mask = mask + rm[:, p:p + 1] * oh[p:p + 1, :]  # (bm, bn) in {0,1}
        ym = y * mask

        s_ref[...] = jnp.zeros_like(s_ref)
        q_ref[...] = jnp.zeros_like(q_ref)
        s_ref[0:1, :] = jnp.sum(ym, axis=0, keepdims=True)
        q_ref[0:1, :] = jnp.sum(ym * y, axis=0, keepdims=True)


def _scale_shift_act_kernel(x_ref, scale_ref, shift_ref, o_ref, *, act):
    y = x_ref[...] * scale_ref[...] + shift_ref[...]
    if act == "leaky_relu":
        y = jnp.where(y > 0, y, LEAKY_SLOPE * y)
    elif act == "tanh":
        y = jnp.tanh(y)
    o_ref[...] = y.astype(o_ref.dtype)


# ----------------------------- pallas wrappers -----------------------------

def fused_gemm_bias_act(a, b, bias, act):
    """act((a @ b) + bias); a:(M,K) b:(K,Nn) bias:(Nn,).  Returns (Mp, Np) f32."""
    M, K = a.shape
    _, Nn = b.shape
    Mp, Kp, Np, bm, bk, bn = _tiles(M, K, Nn)
    a_p = jnp.pad(a, ((0, Mp - M), (0, Kp - K))).astype(jnp.bfloat16)
    b_p = jnp.pad(b, ((0, Kp - K), (0, Np - Nn))).astype(jnp.bfloat16)
    bias_p = jnp.pad(bias.astype(jnp.float32), (0, Np - Nn)).reshape(1, Np)
    grid = (Mp // bm, Np // bn, Kp // bk)
    return pl.pallas_call(
        functools.partial(_gemm_bias_act_kernel, act=act),
        out_shape=jax.ShapeDtypeStruct((Mp, Np), jnp.float32),
        grid_spec=pltpu.PrefetchScalarGridSpec(
            num_scalar_prefetch=0,
            grid=grid,
            in_specs=[
                pl.BlockSpec((bm, bk), lambda i, j, k: (i, k)),
                pl.BlockSpec((bk, bn), lambda i, j, k: (k, j)),
                pl.BlockSpec((1, bn), lambda i, j, k: (0, j)),
            ],
            out_specs=pl.BlockSpec((bm, bn), lambda i, j, k: (i, j)),
            scratch_shapes=[pltpu.VMEM((bm, bn), jnp.float32)],
        ),
        compiler_params=pltpu.CompilerParams(
            dimension_semantics=("parallel", "parallel", "arbitrary")),
    )(a_p, b_p, bias_p)


def phase_gemm_stats(a, b, rowmask, colph):
    """Phase GEMM + fused masked BN stats.

    Returns y:(Mp,Np) f32, s/q:(num_m_tiles*8, Np) partial column sums.
    """
    M, K = a.shape
    _, Nn = b.shape
    Mp, Kp, Np, bm, bk, bn = _tiles(M, K, Nn)
    a_p = jnp.pad(a, ((0, Mp - M), (0, Kp - K))).astype(jnp.bfloat16)
    b_p = jnp.pad(b, ((0, Kp - K), (0, Np - Nn))).astype(jnp.bfloat16)
    rm_p = jnp.pad(rowmask.astype(jnp.float32), ((0, Mp - M), (0, 0)))
    oh_p = jnp.pad(colph.astype(jnp.float32), ((0, 0), (0, Np - Nn)))
    nmt = Mp // bm
    grid = (nmt, Np // bn, Kp // bk)
    return pl.pallas_call(
        _phase_gemm_stats_kernel,
        out_shape=(jax.ShapeDtypeStruct((Mp, Np), jnp.float32),
                   jax.ShapeDtypeStruct((nmt * 8, Np), jnp.float32),
                   jax.ShapeDtypeStruct((nmt * 8, Np), jnp.float32)),
        grid_spec=pltpu.PrefetchScalarGridSpec(
            num_scalar_prefetch=0,
            grid=grid,
            in_specs=[
                pl.BlockSpec((bm, bk), lambda i, j, k: (i, k)),
                pl.BlockSpec((bk, bn), lambda i, j, k: (k, j)),
                pl.BlockSpec((bm, 4), lambda i, j, k: (i, 0)),
                pl.BlockSpec((4, bn), lambda i, j, k: (0, j)),
            ],
            out_specs=(pl.BlockSpec((bm, bn), lambda i, j, k: (i, j)),
                       pl.BlockSpec((8, bn), lambda i, j, k: (i, j)),
                       pl.BlockSpec((8, bn), lambda i, j, k: (i, j))),
            scratch_shapes=[pltpu.VMEM((bm, bn), jnp.float32)],
        ),
        compiler_params=pltpu.CompilerParams(
            dimension_semantics=("parallel", "parallel", "arbitrary")),
    )(a_p, b_p, rm_p, oh_p)


def scale_shift_act(y, scale, shift, act):
    Mp, Np = y.shape
    bm = Mp if Mp <= 1024 else 512
    bn = 256 if Np % 256 == 0 else 128
    return pl.pallas_call(
        functools.partial(_scale_shift_act_kernel, act=act),
        out_shape=jax.ShapeDtypeStruct((Mp, Np), jnp.float32),
        grid_spec=pltpu.PrefetchScalarGridSpec(
            num_scalar_prefetch=0,
            grid=(Mp // bm, Np // bn),
            in_specs=[
                pl.BlockSpec((bm, bn), lambda i, j: (i, j)),
                pl.BlockSpec((1, bn), lambda i, j: (0, j)),
                pl.BlockSpec((1, bn), lambda i, j: (0, j)),
            ],
            out_specs=pl.BlockSpec((bm, bn), lambda i, j: (i, j)),
        ),
        compiler_params=pltpu.CompilerParams(
            dimension_semantics=("parallel", "parallel")),
    )(y, scale, shift)


# ------------------------------- JAX glue ---------------------------------
# Phase decomposition of ConvTranspose2d(k=4, stride=2, pad=1):
#   out[n, 2j+py, 2i+px, co] = sum_{a,b in {0,1}} sum_ci
#       x_pad[n, j+py+a, i+px+b, ci] * w[ci, co, 3-py-2a, 3-px-2b]
# where x_pad is x zero-padded by 1 on each spatial side.

def _phase_patches(x):
    """x:(N,H,W,C) -> (N*(H+1)*(W+1), 4*C) 2x2 windows of the 1-padded input."""
    N, H, W, C = x.shape
    xp = jnp.pad(x, ((0, 0), (1, 1), (1, 1), (0, 0)))
    cols = [xp[:, a:a + H + 1, b:b + W + 1, :] for a in (0, 1) for b in (0, 1)]
    P = jnp.stack(cols, axis=3)                      # (N, H+1, W+1, 4, C)
    return P.reshape(N * (H + 1) * (W + 1), 4 * C)


def _phase_weight(w):
    """PyTorch ConvTranspose2d weight (Cin,Cout,4,4) -> (4*Cin, 4*Cout) GEMM matrix."""
    Cin, Cout, kh, kw = w.shape
    assert kh == 4 and kw == 4
    blocks = []
    for a in (0, 1):
        for b in (0, 1):
            sub = jnp.stack(
                [jnp.stack([w[:, :, 3 - py - 2 * a, 3 - px - 2 * b]
                            for px in (0, 1)], axis=1)
                 for py in (0, 1)], axis=1)          # (Cin, 2, 2, Cout)
            blocks.append(sub.reshape(Cin, 4 * Cout))
    return jnp.concatenate(blocks, axis=0)           # rows: (a,b,ci)  cols: (py,px,co)


def _phase_rowmask(N, H, W):
    """(M, 4) f32: patch position (n, j, i) contributes to output phase (py, px)."""
    M = N * (H + 1) * (W + 1)
    r = jnp.arange(M, dtype=jnp.int32)
    rem = r % ((H + 1) * (W + 1))
    jr = rem // (W + 1)
    ir = rem % (W + 1)
    cols = []
    for py in (0, 1):
        for px in (0, 1):
            cols.append((jr >= py) & (jr < H + py) & (ir >= px) & (ir < W + px))
    return jnp.stack(cols, axis=1).astype(jnp.float32)


def _phase_colmask(Cout):
    """(4, 4*Cout) f32 one-hot: GEMM column (ph, co) belongs to phase ph."""
    c = jnp.arange(4 * Cout, dtype=jnp.int32)
    return (c[None, :] // Cout == jnp.arange(4, dtype=jnp.int32)[:, None]
            ).astype(jnp.float32)


def _assemble_phases(y, N, H, W, Cout):
    """(N*(H+1)*(W+1), 4*Cout) phase GEMM output -> (N, 2H, 2W, Cout)."""
    # TODO(synk): the phase interleave is pure data movement; kept in XLA glue.
    Yr = y.reshape(N, H + 1, W + 1, 2, 2, Cout)
    rows = []
    for py in (0, 1):
        rows.append(jnp.stack(
            [Yr[:, py:py + H, px:px + W, py, px, :] for px in (0, 1)], axis=3))
    out = jnp.stack(rows, axis=2)                    # (N, H, 2, W, 2, Cout)
    return out.reshape(N, 2 * H, 2 * W, Cout)


def fc_layer(z, w, b):
    """ConvTranspose2d(z_dim, Cout, k, stride=1, pad=0) on a 1x1 input = GEMM."""
    Nb, _ = z.shape
    Cin, Cout, k, _ = w.shape
    B = w.reshape(Cin, Cout * k * k)                 # cols ordered (co, ky, kx)
    bias = jnp.repeat(b, k * k)
    y = fused_gemm_bias_act(z, B, bias, act="none")
    y = y[:Nb, :Cout * k * k].reshape(Nb, Cout, k, k)
    return jnp.transpose(y, (0, 2, 3, 1))            # NHWC


def deconv_stride2_layer(x, w, b, *, use_bn, gamma=None, beta=None,
                         act="none", eps=1e-5):
    """ConvTranspose2d(k=4, s=2, p=1) [+BN] + activation; x NHWC -> NHWC."""
    N, H, W, _ = x.shape
    Cout = w.shape[1]
    A = _phase_patches(x)
    B = _phase_weight(w)
    M = A.shape[0]

    if use_bn:
        # Conv bias cancels exactly under the following BatchNorm, so it is
        # dropped; padded GEMM rows/cols then stay exactly zero and the masked
        # in-kernel statistics are exact.
        rowmask = _phase_rowmask(N, H, W)
        colph = _phase_colmask(Cout)
        y, s, q = phase_gemm_stats(A, B, rowmask, colph)
        Np = y.shape[1]
        s_c = jnp.sum(s, axis=0)[:4 * Cout].reshape(4, Cout).sum(axis=0)
        q_c = jnp.sum(q, axis=0)[:4 * Cout].reshape(4, Cout).sum(axis=0)
        cnt = float(N * (2 * H) * (2 * W))
        mean = s_c / cnt
        var = jnp.maximum(q_c / cnt - mean * mean, 0.0)     # biased (training BN)
        sc = gamma * lax.rsqrt(var + eps)
        sh = beta - mean * sc
        scale = jnp.pad(jnp.tile(sc, 4), (0, Np - 4 * Cout)).reshape(1, Np)
        shift = jnp.pad(jnp.tile(sh, 4), (0, Np - 4 * Cout)).reshape(1, Np)
        y = scale_shift_act(y, scale, shift, act)
    else:
        y = fused_gemm_bias_act(A, B, jnp.tile(b, 4), act)

    return _assemble_phases(y[:M, :4 * Cout], N, H, W, Cout)


def generator_forward(z, p):
    """z: (N, z_dim) -> image (N, 3, image_size, image_size), NCHW."""
    x = fc_layer(z, p["fc_w"], p["fc_b"])
    x = deconv_stride2_layer(x, p["d1_w"], p["d1_b"], use_bn=True,
                             gamma=p["d1_g"], beta=p["d1_be"], act="leaky_relu")
    x = deconv_stride2_layer(x, p["d2_w"], p["d2_b"], use_bn=True,
                             gamma=p["d2_g"], beta=p["d2_be"], act="leaky_relu")
    x = deconv_stride2_layer(x, p["d3_w"], p["d3_b"], use_bn=True,
                             gamma=p["d3_g"], beta=p["d3_be"], act="leaky_relu")
    x = deconv_stride2_layer(x, p["d4_w"], p["d4_b"], use_bn=False, act="tanh")
    return x.transpose(0, 3, 1, 2)                   # NHWC -> NCHW


def init_params(key, z_dim, image_size, conv_dim):
    ks = jax.random.split(key, 16)
    k_fc = image_size // 16

    def w(kk, shape, scale=0.05):
        return scale * jax.random.normal(kk, shape, jnp.float32)

    c = conv_dim
    return {
        "fc_w": w(ks[0], (z_dim, c * 8, k_fc, k_fc)), "fc_b": w(ks[1], (c * 8,)),
        "d1_w": w(ks[2], (c * 8, c * 4, 4, 4)), "d1_b": w(ks[3], (c * 4,)),
        "d1_g": 1.0 + 0.1 * jax.random.normal(ks[4], (c * 4,), jnp.float32),
        "d1_be": 0.1 * jax.random.normal(ks[5], (c * 4,), jnp.float32),
        "d2_w": w(ks[6], (c * 4, c * 2, 4, 4)), "d2_b": w(ks[7], (c * 2,)),
        "d2_g": 1.0 + 0.1 * jax.random.normal(ks[8], (c * 2,), jnp.float32),
        "d2_be": 0.1 * jax.random.normal(ks[9], (c * 2,), jnp.float32),
        "d3_w": w(ks[10], (c * 2, c, 4, 4)), "d3_b": w(ks[11], (c,)),
        "d3_g": 1.0 + 0.1 * jax.random.normal(ks[12], (c,), jnp.float32),
        "d3_be": 0.1 * jax.random.normal(ks[13], (c,), jnp.float32),
        "d4_w": w(ks[14], (c, 3, 4, 4)), "d4_b": w(ks[15], (3,)),
    }


# ------------------------- pure-JAX reference check ------------------------

def _ref_deconv(x_nhwc, w, b, stride, pad, cast):
    if cast is not None:   # match the kernel's bf16 operand rounding
        x_nhwc = x_nhwc.astype(cast).astype(jnp.float32)
        w = w.astype(cast).astype(jnp.float32)
    k = w.shape[2]
    wc = jnp.transpose(w[:, :, ::-1, ::-1], (2, 3, 0, 1))   # HWIO
    p = k - 1 - pad
    out = lax.conv_general_dilated(
        x_nhwc, wc, window_strides=(1, 1), padding=[(p, p), (p, p)],
        lhs_dilation=(stride, stride),
        dimension_numbers=("NHWC", "HWIO", "NHWC"),
        precision=lax.Precision.HIGHEST)
    return out + b[None, None, None, :]


def reference_forward(z, p, cast=None, eps=1e-5):
    def bn(x, g, be):
        mean = jnp.mean(x, axis=(0, 1, 2), keepdims=True)
        var = jnp.mean((x - mean) ** 2, axis=(0, 1, 2), keepdims=True)
        return (x - mean) * lax.rsqrt(var + eps) * g + be

    def lrelu(x):
        return jnp.where(x > 0, x, LEAKY_SLOPE * x)

    N, zd = z.shape
    x = z.reshape(N, zd, 1, 1).transpose(0, 2, 3, 1)
    x = _ref_deconv(x, p["fc_w"], p["fc_b"], 1, 0, cast)
    x = lrelu(bn(_ref_deconv(x, p["d1_w"], p["d1_b"], 2, 1, cast), p["d1_g"], p["d1_be"]))
    x = lrelu(bn(_ref_deconv(x, p["d2_w"], p["d2_b"], 2, 1, cast), p["d2_g"], p["d2_be"]))
    x = lrelu(bn(_ref_deconv(x, p["d3_w"], p["d3_b"], 2, 1, cast), p["d3_g"], p["d3_be"]))
    x = jnp.tanh(_ref_deconv(x, p["d4_w"], p["d4_b"], 2, 1, cast))
    return x.transpose(0, 3, 1, 2)


if __name__ == "__main__":
    # Small config consistent with the module: z_dim=64, image_size=32,
    # conv_dim=16, batch=2 -> output (2, 3, 32, 32).
    z_dim, image_size, conv_dim, batch = 64, 32, 16, 2
    key = jax.random.PRNGKey(0)
    pkey, zkey = jax.random.split(key)
    params = init_params(pkey, z_dim, image_size, conv_dim)
    z = jax.random.normal(zkey, (batch, z_dim), jnp.float32)

    out = jax.jit(generator_forward)(z, params)
    out = jax.block_until_ready(out)
    assert out.shape == (batch, 3, image_size, image_size), out.shape

    # (1) matched-precision check: reference with the same bf16 operand
    # rounding -> validates the phase-GEMM / fused-BN kernel math tightly.
    ref_matched = reference_forward(z, params, cast=jnp.bfloat16)
    err_matched = float(jnp.max(jnp.abs(out - ref_matched)))
    assert err_matched < 3e-3, ("matched-precision mismatch", err_matched)

    # (2) full-precision check: bound on end-to-end bf16 drift vs f32 module.
    ref_f32 = reference_forward(z, params, cast=None)
    err_full = float(jnp.max(jnp.abs(out - ref_f32)))
    assert err_full < 7.5e-2, ("f32 reference mismatch", err_full)

    print("KERNEL_OK")
</pallas_src>

<mosaic_0001>
module attributes {stable_mosaic.version = 11 : i64} {
  func.func @_gemm_bias_act_kernel(%arg0: i32, %arg1: i32, %arg2: i32, %arg3: memref<8x128xbf16, #tpu.memory_space<vmem>>, %arg4: memref<128x256xbf16, #tpu.memory_space<vmem>>, %arg5: memref<1x256xf32, #tpu.memory_space<vmem>>, %arg6: memref<8x256xf32, #tpu.memory_space<vmem>>, %arg7: memref<8x256xf32, #tpu.memory_space<vmem>>) attributes {dimension_semantics = [#tpu.dimension_semantics<parallel>, #tpu.dimension_semantics<parallel>, #tpu.dimension_semantics<arbitrary>], iteration_bounds = array<i64: 1, 2, 1>, scalar_prefetch = 0 : i64, scratch_operands = 1 : i64, tpu.core_type = #tpu.core_type<tc>, window_params = [{transform_indices = @transform_0, window_bounds = array<i64: 8, 128>}, {transform_indices = @transform_1, window_bounds = array<i64: 128, 256>}, {transform_indices = @transform_2, window_bounds = array<i64: 1, 256>}, {transform_indices = @transform_3, window_bounds = array<i64: 8, 256>}]} {
    %c0_i32 = arith.constant 0 : i32
    %0 = arith.cmpi eq, %arg2, %c0_i32 : i32
    %1 = arith.extui %0 : i1 to i32
    %c0_i32_0 = arith.constant 0 : i32
    %2 = arith.cmpi ne, %1, %c0_i32_0 : i32
    scf.if %2 {
      %cst_10 = arith.constant 0.000000e+00 : f32
      %12 = vector.broadcast %cst_10 : f32 to vector<8x256xf32>
      %c0_11 = arith.constant 0 : index
      %c0_12 = arith.constant 0 : index
      %13 = vector.load %arg7[%c0_11, %c0_12] : memref<8x256xf32, #tpu.memory_space<vmem>>, vector<8x256xf32>
      tpu.vector_store %arg7[%c0_11, %c0_12], %12 {strides = array<i32>} : memref<8x256xf32, #tpu.memory_space<vmem>>, vector<8x256xf32>,
    } else {
    }
    %c0 = arith.constant 0 : index
    %c0_1 = arith.constant 0 : index
    %3 = vector.load %arg7[%c0, %c0_1] : memref<8x256xf32, #tpu.memory_space<vmem>>, vector<8x256xf32>
    %c0_2 = arith.constant 0 : index
    %c0_3 = arith.constant 0 : index
    %4 = vector.load %arg3[%c0_2, %c0_3] : memref<8x128xbf16, #tpu.memory_space<vmem>>, vector<8x128xbf16>
    %c0_4 = arith.constant 0 : index
    %c0_5 = arith.constant 0 : index
    %5 = vector.load %arg4[%c0_4, %c0_5] : memref<128x256xbf16, #tpu.memory_space<vmem>>, vector<128x256xbf16>
    %cst = arith.constant dense<0.000000e+00> : vector<8x256xf32>
    %6 = tpu.matmul %4, %5, %cst {dimension_numbers = #tpu.dot_dimension_numbers<[1], [0], [0], [1], [0, 0, 1, 1], [], []>} : vector<8x128xbf16>, vector<128x256xbf16>, vector<8x256xf32> -> vector<8x256xf32>
    %7 = arith.addf %3, %6 : vector<8x256xf32>
    %c0_6 = arith.constant 0 : index
    %c0_7 = arith.constant 0 : index
    %8 = vector.load %arg7[%c0_6, %c0_7] : memref<8x256xf32, #tpu.memory_space<vmem>>, vector<8x256xf32>
    tpu.vector_store %arg7[%c0_6, %c0_7], %7 {strides = array<i32>} : memref<8x256xf32, #tpu.memory_space<vmem>>, vector<8x256xf32>,
    %c0_i32_8 = arith.constant 0 : i32
    %9 = arith.cmpi eq, %arg2, %c0_i32_8 : i32
    %10 = arith.extui %9 : i1 to i32
    %c0_i32_9 = arith.constant 0 : i32
    %11 = arith.cmpi ne, %10, %c0_i32_9 : i32
    scf.if %11 {
      %c0_10 = arith.constant 0 : index
      %c0_11 = arith.constant 0 : index
      %12 = vector.load %arg7[%c0_10, %c0_11] : memref<8x256xf32, #tpu.memory_space<vmem>>, vector<8x256xf32>
      %c0_12 = arith.constant 0 : index
      %c0_13 = arith.constant 0 : index
      %13 = vector.load %arg5[%c0_12, %c0_13] : memref<1x256xf32, #tpu.memory_space<vmem>>, vector<1x256xf32>
      %14 = vector.broadcast %13 : vector<1x256xf32> to vector<8x256xf32>
      %15 = arith.addf %12, %14 : vector<8x256xf32>
      %c0_14 = arith.constant 0 : index
      %c0_15 = arith.constant 0 : index
      %16 = vector.load %arg6[%c0_14, %c0_15] : memref<8x256xf32, #tpu.memory_space<vmem>>, vector<8x256xf32>
      tpu.vector_store %arg6[%c0_14, %c0_15], %15 {strides = array<i32>} : memref<8x256xf32, #tpu.memory_space<vmem>>, vector<8x256xf32>,
    } else {
    }
    return
  }
  func.func @transform_0(%arg0: i32, %arg1: i32, %arg2: i32) -> (i32, i32) {
    %c0_i32 = arith.constant 0 : i32
    return %arg0, %arg2 : i32, i32
  }
  func.func @transform_1(%arg0: i32, %arg1: i32, %arg2: i32) -> (i32, i32) {
    %c0_i32 = arith.constant 0 : i32
    return %arg2, %arg1 : i32, i32
  }
  func.func @transform_2(%arg0: i32, %arg1: i32, %arg2: i32) -> (i32, i32) {
    %c0_i32 = arith.constant 0 : i32
    %c0_i32_0 = arith.constant 0 : i32
    return %c0_i32, %arg1 : i32, i32
  }
  func.func @transform_3(%arg0: i32, %arg1: i32, %arg2: i32) -> (i32, i32) {
    %c0_i32 = arith.constant 0 : i32
    return %arg0, %arg1 : i32, i32
  }
}

module attributes {stable_mosaic.version = 11 : i64} {
  func.func @_phase_gemm_stats_kernel(%arg0: i32, %arg1: i32, %arg2: i32, %arg3: memref<24x512xbf16, #tpu.memory_space<vmem>>, %arg4: memref<512x256xbf16, #tpu.memory_space<vmem>>, %arg5: memref<24x4xf32, #tpu.memory_space<vmem>>, %arg6: memref<4x256xf32, #tpu.memory_space<vmem>>, %arg7: memref<24x256xf32, #tpu.memory_space<vmem>>, %arg8: memref<8x256xf32, #tpu.memory_space<vmem>>, %arg9: memref<8x256xf32, #tpu.memory_space<vmem>>, %arg10: memref<24x256xf32, #tpu.memory_space<vmem>>) attributes {dimension_semantics = [#tpu.dimension_semantics<parallel>, #tpu.dimension_semantics<parallel>, #tpu.dimension_semantics<arbitrary>], iteration_bounds = array<i64: 1, 1, 1>, scalar_prefetch = 0 : i64, scratch_operands = 1 : i64, tpu.core_type = #tpu.core_type<tc>, window_params = [{transform_indices = @transform_0, window_bounds = array<i64: 24, 512>}, {transform_indices = @transform_1, window_bounds = array<i64: 512, 256>}, {transform_indices = @transform_2, window_bounds = array<i64: 24, 4>}, {transform_indices = @transform_3, window_bounds = array<i64: 4, 256>}, {transform_indices = @transform_4, window_bounds = array<i64: 24, 256>}, {transform_indices = @transform_5, window_bounds = array<i64: 8, 256>}, {transform_indices = @transform_6, window_bounds = array<i64: 8, 256>}]} {
    %c0_i32 = arith.constant 0 : i32
    %0 = arith.cmpi eq, %arg2, %c0_i32 : i32
    %1 = arith.extui %0 : i1 to i32
    %c0_i32_0 = arith.constant 0 : i32
    %2 = arith.cmpi ne, %1, %c0_i32_0 : i32
    scf.if %2 {
      %cst_10 = arith.constant 0.000000e+00 : f32
      %12 = vector.broadcast %cst_10 : f32 to vector<24x256xf32>
      %c0_11 = arith.constant 0 : index
      %c0_12 = arith.constant 0 : index
      %13 = vector.load %arg10[%c0_11, %c0_12] : memref<24x256xf32, #tpu.memory_space<vmem>>, vector<24x256xf32>
      tpu.vector_store %arg10[%c0_11, %c0_12], %12 {strides = array<i32>} : memref<24x256xf32, #tpu.memory_space<vmem>>, vector<24x256xf32>,
    } else {
    }
    %c0 = arith.constant 0 : index
    %c0_1 = arith.constant 0 : index
    %3 = vector.load %arg10[%c0, %c0_1] : memref<24x256xf32, #tpu.memory_space<vmem>>, vector<24x256xf32>
    %c0_2 = arith.constant 0 : index
    %c0_3 = arith.constant 0 : index
    %4 = vector.load %arg3[%c0_2, %c0_3] : memref<24x512xbf16, #tpu.memory_space<vmem>>, vector<24x512xbf16>
    %c0_4 = arith.constant 0 : index
    %c0_5 = arith.constant 0 : index
    %5 = vector.load %arg4[%c0_4, %c0_5] : memref<512x256xbf16, #tpu.memory_space<vmem>>, vector<512x256xbf16>
    %cst = arith.constant dense<0.000000e+00> : vector<24x256xf32>
    %6 = tpu.matmul %4, %5, %cst {dimension_numbers = #tpu.dot_dimension_numbers<[1], [0], [0], [1], [0, 0, 1, 1], [], []>} : vector<24x512xbf16>, vector<512x256xbf16>, vector<24x256xf32> -> vector<24x256xf32>
    %7 = arith.addf %3, %6 : vector<24x256xf32>
    %c0_6 = arith.constant 0 : index
    %c0_7 = arith.constant 0 : index
    %8 = vector.load %arg10[%c0_6, %c0_7] : memref<24x256xf32, #tpu.memory_space<vmem>>, vector<24x256xf32>
    tpu.vector_store %arg10[%c0_6, %c0_7], %7 {strides = array<i32>} : memref<24x256xf32, #tpu.memory_space<vmem>>, vector<24x256xf32>,
    %c0_i32_8 = arith.constant 0 : i32
    %9 = arith.cmpi eq, %arg2, %c0_i32_8 : i32
    %10 = arith.extui %9 : i1 to i32
    %c0_i32_9 = arith.constant 0 : i32
    %11 = arith.cmpi ne, %10, %c0_i32_9 : i32
    scf.if %11 {
      %c0_10 = arith.constant 0 : index
      %c0_11 = arith.constant 0 : index
      %12 = vector.load %arg10[%c0_10, %c0_11] : memref<24x256xf32, #tpu.memory_space<vmem>>, vector<24x256xf32>
      %c0_12 = arith.constant 0 : index
      %c0_13 = arith.constant 0 : index
      %13 = vector.load %arg7[%c0_12, %c0_13] : memref<24x256xf32, #tpu.memory_space<vmem>>, vector<24x256xf32>
      tpu.vector_store %arg7[%c0_12, %c0_13], %12 {strides = array<i32>} : memref<24x256xf32, #tpu.memory_space<vmem>>, vector<24x256xf32>,
      %c0_14 = arith.constant 0 : index
      %c0_15 = arith.constant 0 : index
      %14 = vector.load %arg5[%c0_14, %c0_15] : memref<24x4xf32, #tpu.memory_space<vmem>>, vector<24x4xf32>
      %c0_16 = arith.constant 0 : index
      %c0_17 = arith.constant 0 : index
      %15 = vector.load %arg6[%c0_16, %c0_17] : memref<4x256xf32, #tpu.memory_space<vmem>>, vector<4x256xf32>
      %16 = vector.extract_strided_slice %14 {offsets = [0, 0], sizes = [24, 1], strides = [1, 1]} : vector<24x4xf32> to vector<24x1xf32>
      %17 = vector.extract_strided_slice %15 {offsets = [0, 0], sizes = [1, 256], strides = [1, 1]} : vector<4x256xf32> to vector<1x256xf32>
      %18 = vector.broadcast %16 : vector<24x1xf32> to vector<24x256xf32>
      %19 = vector.broadcast %17 : vector<1x256xf32> to vector<24x256xf32>
      %20 = arith.mulf %18, %19 : vector<24x256xf32>
      %21 = vector.extract_strided_slice %14 {offsets = [0, 1], sizes = [24, 1], strides = [1, 1]} : vector<24x4xf32> to vector<24x1xf32>
      %22 = vector.extract_strided_slice %15 {offsets = [1, 0], sizes = [1, 256], strides = [1, 1]} : vector<4x256xf32> to vector<1x256xf32>
      %23 = vector.broadcast %21 : vector<24x1xf32> to vector<24x256xf32>
      %24 = vector.broadcast %22 : vector<1x256xf32> to vector<24x256xf32>
      %25 = arith.mulf %23, %24 : vector<24x256xf32>
      %26 = arith.addf %20, %25 : vector<24x256xf32>
      %27 = vector.extract_strided_slice %14 {offsets = [0, 2], sizes = [24, 1], strides = [1, 1]} : vector<24x4xf32> to vector<24x1xf32>
      %28 = vector.extract_strided_slice %15 {offsets = [2, 0], sizes = [1, 256], strides = [1, 1]} : vector<4x256xf32> to vector<1x256xf32>
      %29 = vector.broadcast %27 : vector<24x1xf32> to vector<24x256xf32>
      %30 = vector.broadcast %28 : vector<1x256xf32> to vector<24x256xf32>
      %31 = arith.mulf %29, %30 : vector<24x256xf32>
      %32 = arith.addf %26, %31 : vector<24x256xf32>
      %33 = vector.extract_strided_slice %14 {offsets = [0, 3], sizes = [24, 1], strides = [1, 1]} : vector<24x4xf32> to vector<24x1xf32>
      %34 = vector.extract_strided_slice %15 {offsets = [3, 0], sizes = [1, 256], strides = [1, 1]} : vector<4x256xf32> to vector<1x256xf32>
      %35 = vector.broadcast %33 : vector<24x1xf32> to vector<24x256xf32>
      %36 = vector.broadcast %34 : vector<1x256xf32> to vector<24x256xf32>
      %37 = arith.mulf %35, %36 : vector<24x256xf32>
      %38 = arith.addf %32, %37 : vector<24x256xf32>
      %39 = arith.mulf %12, %38 : vector<24x256xf32>
      %cst_18 = arith.constant 0.000000e+00 : f32
      %40 = vector.broadcast %cst_18 : f32 to vector<8x256xf32>
      %c0_19 = arith.constant 0 : index
      %c0_20 = arith.constant 0 : index
      %41 = vector.load %arg8[%c0_19, %c0_20] : memref<8x256xf32, #tpu.memory_space<vmem>>, vector<8x256xf32>
      tpu.vector_store %arg8[%c0_19, %c0_20], %40 {strides = array<i32>} : memref<8x256xf32, #tpu.memory_space<vmem>>, vector<8x256xf32>,
      %cst_21 = arith.constant 0.000000e+00 : f32
      %42 = vector.broadcast %cst_21 : f32 to vector<8x256xf32>
      %c0_22 = arith.constant 0 : index
      %c0_23 = arith.constant 0 : index
      %43 = vector.load %arg9[%c0_22, %c0_23] : memref<8x256xf32, #tpu.memory_space<vmem>>, vector<8x256xf32>
      tpu.vector_store %arg9[%c0_22, %c0_23], %42 {strides = array<i32>} : memref<8x256xf32, #tpu.memory_space<vmem>>, vector<8x256xf32>,
      %cst_24 = arith.constant dense<0.000000e+00> : vector<256xf32>
      %44 = vector.multi_reduction <add>, %39, %cst_24 [0] : vector<24x256xf32> to vector<256xf32>
      %45 = vector.shape_cast %44 : vector<256xf32> to vector<1x256xf32>
      %c0_25 = arith.constant 0 : index
      %c0_26 = arith.constant 0 : index
      %46 = vector.load %arg8[%c0_25, %c0_26] : memref<8x256xf32, #tpu.memory_space<vmem>>, vector<1x256xf32>
      tpu.vector_store %arg8[%c0_25, %c0_26], %45 {strides = array<i32>} : memref<8x256xf32, #tpu.memory_space<vmem>>, vector<1x256xf32>,
      %47 = arith.mulf %39, %12 : vector<24x256xf32>
      %cst_27 = arith.constant dense<0.000000e+00> : vector<256xf32>
      %48 = vector.multi_reduction <add>, %47, %cst_27 [0] : vector<24x256xf32> to vector<256xf32>
      %49 = vector.shape_cast %48 : vector<256xf32> to vector<1x256xf32>
      %c0_28 = arith.constant 0 : index
      %c0_29 = arith.constant 0 : index
      %50 = vector.load %arg9[%c0_28, %c0_29] : memref<8x256xf32, #tpu.memory_space<vmem>>, vector<1x256xf32>
      tpu.vector_store %arg9[%c0_28, %c0_29], %49 {strides = array<i32>} : memref<8x256xf32, #tpu.memory_space<vmem>>, vector<1x256xf32>,
    } else {
    }
    return
  }
  func.func @transform_0(%arg0: i32, %arg1: i32, %arg2: i32) -> (i32, i32) {
    %c0_i32 = arith.constant 0 : i32
    return %arg0, %arg2 : i32, i32
  }
  func.func @transform_1(%arg0: i32, %arg1: i32, %arg2: i32) -> (i32, i32) {
    %c0_i32 = arith.constant 0 : i32
    return %arg2, %arg1 : i32, i32
  }
  func.func @transform_2(%arg0: i32, %arg1: i32, %arg2: i32) -> (i32, i32) {
    %c0_i32 = arith.constant 0 : i32
    %c0_i32_0 = arith.constant 0 : i32
    return %arg0, %c0_i32 : i32, i32
  }
  func.func @transform_3(%arg0: i32, %arg1: i32, %arg2: i32) -> (i32, i32) {
    %c0_i32 = arith.constant 0 : i32
    %c0_i32_0 = arith.constant 0 : i32
    return %c0_i32, %arg1 : i32, i32
  }
  func.func @transform_4(%arg0: i32, %arg1: i32, %arg2: i32) -> (i32, i32) {
    %c0_i32 = arith.constant 0 : i32
    return %arg0, %arg1 : i32, i32
  }
  func.func @transform_5(%arg0: i32, %arg1: i32, %arg2: i32) -> (i32, i32) {
    %c0_i32 = arith.constant 0 : i32
    return %arg0, %arg1 : i32, i32
  }
  func.func @transform_6(%arg0: i32, %arg1: i32, %arg2: i32) -> (i32, i32) {
    %c0_i32 = arith.constant 0 : i32
    return %arg0, %arg1 : i32, i32
  }
}

module attributes {stable_mosaic.version = 11 : i64} {
  func.func @_scale_shift_act_kernel(%arg0: i32, %arg1: i32, %arg2: memref<24x256xf32, #tpu.memory_space<vmem>>, %arg3: memref<1x256xf32, #tpu.memory_space<vmem>>, %arg4: memref<1x256xf32, #tpu.memory_space<vmem>>, %arg5: memref<24x256xf32, #tpu.memory_space<vmem>>) attributes {dimension_semantics = [#tpu.dimension_semantics<parallel>, #tpu.dimension_semantics<parallel>], iteration_bounds = array<i64: 1, 1>, scalar_prefetch = 0 : i64, scratch_operands = 0 : i64, tpu.core_type = #tpu.core_type<tc>, window_params = [{transform_indices = @transform_0, window_bounds = array<i64: 24, 256>}, {transform_indices = @transform_1, window_bounds = array<i64: 1, 256>}, {transform_indices = @transform_2, window_bounds = array<i64: 1, 256>}, {transform_indices = @transform_3, window_bounds = array<i64: 24, 256>}]} {
    %c0 = arith.constant 0 : index
    %c0_0 = arith.constant 0 : index
    %0 = vector.load %arg2[%c0, %c0_0] : memref<24x256xf32, #tpu.memory_space<vmem>>, vector<24x256xf32>
    %c0_1 = arith.constant 0 : index
    %c0_2 = arith.constant 0 : index
    %1 = vector.load %arg3[%c0_1, %c0_2] : memref<1x256xf32, #tpu.memory_space<vmem>>, vector<1x256xf32>
    %2 = vector.broadcast %1 : vector<1x256xf32> to vector<24x256xf32>
    %3 = arith.mulf %0, %2 : vector<24x256xf32>
    %c0_3 = arith.constant 0 : index
    %c0_4 = arith.constant 0 : index
    %4 = vector.load %arg4[%c0_3, %c0_4] : memref<1x256xf32, #tpu.memory_space<vmem>>, vector<1x256xf32>
    %5 = vector.broadcast %4 : vector<1x256xf32> to vector<24x256xf32>
    %6 = arith.addf %3, %5 : vector<24x256xf32>
    %cst = arith.constant 0.000000e+00 : f32
    %7 = vector.broadcast %cst : f32 to vector<24x256xf32>
    %8 = arith.cmpf ogt, %6, %7 : vector<24x256xf32>
    %cst_5 = arith.constant 5.000000e-02 : f32
    %9 = vector.broadcast %cst_5 : f32 to vector<24x256xf32>
    %10 = arith.mulf %9, %6 : vector<24x256xf32>
    %11 = arith.select %8, %6, %10 : vector<24x256xi1>, vector<24x256xf32>
    %c0_6 = arith.constant 0 : index
    %c0_7 = arith.constant 0 : index
    %12 = vector.load %arg5[%c0_6, %c0_7] : memref<24x256xf32, #tpu.memory_space<vmem>>, vector<24x256xf32>
    tpu.vector_store %arg5[%c0_6, %c0_7], %11 {strides = array<i32>} : memref<24x256xf32, #tpu.memory_space<vmem>>, vector<24x256xf32>,
    return
  }
  func.func @transform_0(%arg0: i32, %arg1: i32) -> (i32, i32) {
    %c0_i32 = arith.constant 0 : i32
    return %arg0, %arg1 : i32, i32
  }
  func.func @transform_1(%arg0: i32, %arg1: i32) -> (i32, i32) {
    %c0_i32 = arith.constant 0 : i32
    %c0_i32_0 = arith.constant 0 : i32
    return %c0_i32, %arg1 : i32, i32
  }
  func.func @transform_2(%arg0: i32, %arg1: i32) -> (i32, i32) {
    %c0_i32 = arith.constant 0 : i32
    %c0_i32_0 = arith.constant 0 : i32
    return %c0_i32, %arg1 : i32, i32
  }
  func.func @transform_3(%arg0: i32, %arg1: i32) -> (i32, i32) {
    %c0_i32 = arith.constant 0 : i32
    return %arg0, %arg1 : i32, i32
  }
}

module attributes {stable_mosaic.version = 11 : i64} {
  func.func @_phase_gemm_stats_kernel(%arg0: i32, %arg1: i32, %arg2: i32, %arg3: memref<56x256xbf16, #tpu.memory_space<vmem>>, %arg4: memref<256x128xbf16, #tpu.memory_space<vmem>>, %arg5: memref<56x4xf32, #tpu.memory_space<vmem>>, %arg6: memref<4x128xf32, #tpu.memory_space<vmem>>, %arg7: memref<56x128xf32, #tpu.memory_space<vmem>>, %arg8: memref<8x128xf32, #tpu.memory_space<vmem>>, %arg9: memref<8x128xf32, #tpu.memory_space<vmem>>, %arg10: memref<56x128xf32, #tpu.memory_space<vmem>>) attributes {dimension_semantics = [#tpu.dimension_semantics<parallel>, #tpu.dimension_semantics<parallel>, #tpu.dimension_semantics<arbitrary>], iteration_bounds = array<i64: 1, 1, 1>, scalar_prefetch = 0 : i64, scratch_operands = 1 : i64, tpu.core_type = #tpu.core_type<tc>, window_params = [{transform_indices = @transform_0, window_bounds = array<i64: 56, 256>}, {transform_indices = @transform_1, window_bounds = array<i64: 256, 128>}, {transform_indices = @transform_2, window_bounds = array<i64: 56, 4>}, {transform_indices = @transform_3, window_bounds = array<i64: 4, 128>}, {transform_indices = @transform_4, window_bounds = array<i64: 56, 128>}, {transform_indices = @transform_5, window_bounds = array<i64: 8, 128>}, {transform_indices = @transform_6, window_bounds = array<i64: 8, 128>}]} {
    %c0_i32 = arith.constant 0 : i32
    %0 = arith.cmpi eq, %arg2, %c0_i32 : i32
    %1 = arith.extui %0 : i1 to i32
    %c0_i32_0 = arith.constant 0 : i32
    %2 = arith.cmpi ne, %1, %c0_i32_0 : i32
    scf.if %2 {
      %cst_10 = arith.constant 0.000000e+00 : f32
      %12 = vector.broadcast %cst_10 : f32 to vector<56x128xf32>
      %c0_11 = arith.constant 0 : index
      %c0_12 = arith.constant 0 : index
      %13 = vector.load %arg10[%c0_11, %c0_12] : memref<56x128xf32, #tpu.memory_space<vmem>>, vector<56x128xf32>
      tpu.vector_store %arg10[%c0_11, %c0_12], %12 {strides = array<i32>} : memref<56x128xf32, #tpu.memory_space<vmem>>, vector<56x128xf32>,
    } else {
    }
    %c0 = arith.constant 0 : index
    %c0_1 = arith.constant 0 : index
    %3 = vector.load %arg10[%c0, %c0_1] : memref<56x128xf32, #tpu.memory_space<vmem>>, vector<56x128xf32>
    %c0_2 = arith.constant 0 : index
    %c0_3 = arith.constant 0 : index
    %4 = vector.load %arg3[%c0_2, %c0_3] : memref<56x256xbf16, #tpu.memory_space<vmem>>, vector<56x256xbf16>
    %c0_4 = arith.constant 0 : index
    %c0_5 = arith.constant 0 : index
    %5 = vector.load %arg4[%c0_4, %c0_5] : memref<256x128xbf16, #tpu.memory_space<vmem>>, vector<256x128xbf16>
    %cst = arith.constant dense<0.000000e+00> : vector<56x128xf32>
    %6 = tpu.matmul %4, %5, %cst {dimension_numbers = #tpu.dot_dimension_numbers<[1], [0], [0], [1], [0, 0, 1, 1], [], []>} : vector<56x256xbf16>, vector<256x128xbf16>, vector<56x128xf32> -> vector<56x128xf32>
    %7 = arith.addf %3, %6 : vector<56x128xf32>
    %c0_6 = arith.constant 0 : index
    %c0_7 = arith.constant 0 : index
    %8 = vector.load %arg10[%c0_6, %c0_7] : memref<56x128xf32, #tpu.memory_space<vmem>>, vector<56x128xf32>
    tpu.vector_store %arg10[%c0_6, %c0_7], %7 {strides = array<i32>} : memref<56x128xf32, #tpu.memory_space<vmem>>, vector<56x128xf32>,
    %c0_i32_8 = arith.constant 0 : i32
    %9 = arith.cmpi eq, %arg2, %c0_i32_8 : i32
    %10 = arith.extui %9 : i1 to i32
    %c0_i32_9 = arith.constant 0 : i32
    %11 = arith.cmpi ne, %10, %c0_i32_9 : i32
    scf.if %11 {
      %c0_10 = arith.constant 0 : index
      %c0_11 = arith.constant 0 : index
      %12 = vector.load %arg10[%c0_10, %c0_11] : memref<56x128xf32, #tpu.memory_space<vmem>>, vector<56x128xf32>
      %c0_12 = arith.constant 0 : index
      %c0_13 = arith.constant 0 : index
      %13 = vector.load %arg7[%c0_12, %c0_13] : memref<56x128xf32, #tpu.memory_space<vmem>>, vector<56x128xf32>
      tpu.vector_store %arg7[%c0_12, %c0_13], %12 {strides = array<i32>} : memref<56x128xf32, #tpu.memory_space<vmem>>, vector<56x128xf32>,
      %c0_14 = arith.constant 0 : index
      %c0_15 = arith.constant 0 : index
      %14 = vector.load %arg5[%c0_14, %c0_15] : memref<56x4xf32, #tpu.memory_space<vmem>>, vector<56x4xf32>
      %c0_16 = arith.constant 0 : index
      %c0_17 = arith.constant 0 : index
      %15 = vector.load %arg6[%c0_16, %c0_17] : memref<4x128xf32, #tpu.memory_space<vmem>>, vector<4x128xf32>
      %16 = vector.extract_strided_slice %14 {offsets = [0, 0], sizes = [56, 1], strides = [1, 1]} : vector<56x4xf32> to vector<56x1xf32>
      %17 = vector.extract_strided_slice %15 {offsets = [0, 0], sizes = [1, 128], strides = [1, 1]} : vector<4x128xf32> to vector<1x128xf32>
      %18 = vector.broadcast %16 : vector<56x1xf32> to vector<56x128xf32>
      %19 = vector.broadcast %17 : vector<1x128xf32> to vector<56x128xf32>
      %20 = arith.mulf %18, %19 : vector<56x128xf32>
      %21 = vector.extract_strided_slice %14 {offsets = [0, 1], sizes = [56, 1], strides = [1, 1]} : vector<56x4xf32> to vector<56x1xf32>
      %22 = vector.extract_strided_slice %15 {offsets = [1, 0], sizes = [1, 128], strides = [1, 1]} : vector<4x128xf32> to vector<1x128xf32>
      %23 = vector.broadcast %21 : vector<56x1xf32> to vector<56x128xf32>
      %24 = vector.broadcast %22 : vector<1x128xf32> to vector<56x128xf32>
      %25 = arith.mulf %23, %24 : vector<56x128xf32>
      %26 = arith.addf %20, %25 : vector<56x128xf32>
      %27 = vector.extract_strided_slice %14 {offsets = [0, 2], sizes = [56, 1], strides = [1, 1]} : vector<56x4xf32> to vector<56x1xf32>
      %28 = vector.extract_strided_slice %15 {offsets = [2, 0], sizes = [1, 128], strides = [1, 1]} : vector<4x128xf32> to vector<1x128xf32>
      %29 = vector.broadcast %27 : vector<56x1xf32> to vector<56x128xf32>
      %30 = vector.broadcast %28 : vector<1x128xf32> to vector<56x128xf32>
      %31 = arith.mulf %29, %30 : vector<56x128xf32>
      %32 = arith.addf %26, %31 : vector<56x128xf32>
      %33 = vector.extract_strided_slice %14 {offsets = [0, 3], sizes = [56, 1], strides = [1, 1]} : vector<56x4xf32> to vector<56x1xf32>
      %34 = vector.extract_strided_slice %15 {offsets = [3, 0], sizes = [1, 128], strides = [1, 1]} : vector<4x128xf32> to vector<1x128xf32>
      %35 = vector.broadcast %33 : vector<56x1xf32> to vector<56x128xf32>
      %36 = vector.broadcast %34 : vector<1x128xf32> to vector<56x128xf32>
      %37 = arith.mulf %35, %36 : vector<56x128xf32>
      %38 = arith.addf %32, %37 : vector<56x128xf32>
      %39 = arith.mulf %12, %38 : vector<56x128xf32>
      %cst_18 = arith.constant 0.000000e+00 : f32
      %40 = vector.broadcast %cst_18 : f32 to vector<8x128xf32>
      %c0_19 = arith.constant 0 : index
      %c0_20 = arith.constant 0 : index
      %41 = vector.load %arg8[%c0_19, %c0_20] : memref<8x128xf32, #tpu.memory_space<vmem>>, vector<8x128xf32>
      tpu.vector_store %arg8[%c0_19, %c0_20], %40 {strides = array<i32>} : memref<8x128xf32, #tpu.memory_space<vmem>>, vector<8x128xf32>,
      %cst_21 = arith.constant 0.000000e+00 : f32
      %42 = vector.broadcast %cst_21 : f32 to vector<8x128xf32>
      %c0_22 = arith.constant 0 : index
      %c0_23 = arith.constant 0 : index
      %43 = vector.load %arg9[%c0_22, %c0_23] : memref<8x128xf32, #tpu.memory_space<vmem>>, vector<8x128xf32>
      tpu.vector_store %arg9[%c0_22, %c0_23], %42 {strides = array<i32>} : memref<8x128xf32, #tpu.memory_space<vmem>>, vector<8x128xf32>,
      %cst_24 = arith.constant dense<0.000000e+00> : vector<128xf32>
      %44 = vector.multi_reduction <add>, %39, %cst_24 [0] : vector<56x128xf32> to vector<128xf32>
      %45 = vector.shape_cast %44 : vector<128xf32> to vector<1x128xf32>
      %c0_25 = arith.constant 0 : index
      %c0_26 = arith.constant 0 : index
      %46 = vector.load %arg8[%c0_25, %c0_26] : memref<8x128xf32, #tpu.memory_space<vmem>>, vector<1x128xf32>
      tpu.vector_store %arg8[%c0_25, %c0_26], %45 {strides = array<i32>} : memref<8x128xf32, #tpu.memory_space<vmem>>, vector<1x128xf32>,
      %47 = arith.mulf %39, %12 : vector<56x128xf32>
      %cst_27 = arith.constant dense<0.000000e+00> : vector<128xf32>
      %48 = vector.multi_reduction <add>, %47, %cst_27 [0] : vector<56x128xf32> to vector<128xf32>
      %49 = vector.shape_cast %48 : vector<128xf32> to vector<1x128xf32>
      %c0_28 = arith.constant 0 : index
      %c0_29 = arith.constant 0 : index
      %50 = vector.load %arg9[%c0_28, %c0_29] : memref<8x128xf32, #tpu.memory_space<vmem>>, vector<1x128xf32>
      tpu.vector_store %arg9[%c0_28, %c0_29], %49 {strides = array<i32>} : memref<8x128xf32, #tpu.memory_space<vmem>>, vector<1x128xf32>,
    } else {
    }
    return
  }
  func.func @transform_0(%arg0: i32, %arg1: i32, %arg2: i32) -> (i32, i32) {
    %c0_i32 = arith.constant 0 : i32
    return %arg0, %arg2 : i32, i32
  }
  func.func @transform_1(%arg0: i32, %arg1: i32, %arg2: i32) -> (i32, i32) {
    %c0_i32 = arith.constant 0 : i32
    return %arg2, %arg1 : i32, i32
  }
  func.func @transform_2(%arg0: i32, %arg1: i32, %arg2: i32) -> (i32, i32) {
    %c0_i32 = arith.constant 0 : i32
    %c0_i32_0 = arith.constant 0 : i32
    return %arg0, %c0_i32 : i32, i32
  }
  func.func @transform_3(%arg0: i32, %arg1: i32, %arg2: i32) -> (i32, i32) {
    %c0_i32 = arith.constant 0 : i32
    %c0_i32_0 = arith.constant 0 : i32
    return %c0_i32, %arg1 : i32, i32
  }
  func.func @transform_4(%arg0: i32, %arg1: i32, %arg2: i32) -> (i32, i32) {
    %c0_i32 = arith.constant 0 : i32
    return %arg0, %arg1 : i32, i32
  }
  func.func @transform_5(%arg0: i32, %arg1: i32, %arg2: i32) -> (i32, i32) {
    %c0_i32 = arith.constant 0 : i32
    return %arg0, %arg1 : i32, i32
  }
  func.func @transform_6(%arg0: i32, %arg1: i32, %arg2: i32) -> (i32, i32) {
    %c0_i32 = arith.constant 0 : i32
    return %arg0, %arg1 : i32, i32
  }
}

module attributes {stable_mosaic.version = 11 : i64} {
  func.func @_scale_shift_act_kernel(%arg0: i32, %arg1: i32, %arg2: memref<56x128xf32, #tpu.memory_space<vmem>>, %arg3: memref<1x128xf32, #tpu.memory_space<vmem>>, %arg4: memref<1x128xf32, #tpu.memory_space<vmem>>, %arg5: memref<56x128xf32, #tpu.memory_space<vmem>>) attributes {dimension_semantics = [#tpu.dimension_semantics<parallel>, #tpu.dimension_semantics<parallel>], iteration_bounds = array<i64: 1, 1>, scalar_prefetch = 0 : i64, scratch_operands = 0 : i64, tpu.core_type = #tpu.core_type<tc>, window_params = [{transform_indices = @transform_0, window_bounds = array<i64: 56, 128>}, {transform_indices = @transform_1, window_bounds = array<i64: 1, 128>}, {transform_indices = @transform_2, window_bounds = array<i64: 1, 128>}, {transform_indices = @transform_3, window_bounds = array<i64: 56, 128>}]} {
    %c0 = arith.constant 0 : index
    %c0_0 = arith.constant 0 : index
    %0 = vector.load %arg2[%c0, %c0_0] : memref<56x128xf32, #tpu.memory_space<vmem>>, vector<56x128xf32>
    %c0_1 = arith.constant 0 : index
    %c0_2 = arith.constant 0 : index
    %1 = vector.load %arg3[%c0_1, %c0_2] : memref<1x128xf32, #tpu.memory_space<vmem>>, vector<1x128xf32>
    %2 = vector.broadcast %1 : vector<1x128xf32> to vector<56x128xf32>
    %3 = arith.mulf %0, %2 : vector<56x128xf32>
    %c0_3 = arith.constant 0 : index
    %c0_4 = arith.constant 0 : index
    %4 = vector.load %arg4[%c0_3, %c0_4] : memref<1x128xf32, #tpu.memory_space<vmem>>, vector<1x128xf32>
    %5 = vector.broadcast %4 : vector<1x128xf32> to vector<56x128xf32>
    %6 = arith.addf %3, %5 : vector<56x128xf32>
    %cst = arith.constant 0.000000e+00 : f32
    %7 = vector.broadcast %cst : f32 to vector<56x128xf32>
    %8 = arith.cmpf ogt, %6, %7 : vector<56x128xf32>
    %cst_5 = arith.constant 5.000000e-02 : f32
    %9 = vector.broadcast %cst_5 : f32 to vector<56x128xf32>
    %10 = arith.mulf %9, %6 : vector<56x128xf32>
    %11 = arith.select %8, %6, %10 : vector<56x128xi1>, vector<56x128xf32>
    %c0_6 = arith.constant 0 : index
    %c0_7 = arith.constant 0 : index
    %12 = vector.load %arg5[%c0_6, %c0_7] : memref<56x128xf32, #tpu.memory_space<vmem>>, vector<56x128xf32>
    tpu.vector_store %arg5[%c0_6, %c0_7], %11 {strides = array<i32>} : memref<56x128xf32, #tpu.memory_space<vmem>>, vector<56x128xf32>,
    return
  }
  func.func @transform_0(%arg0: i32, %arg1: i32) -> (i32, i32) {
    %c0_i32 = arith.constant 0 : i32
    return %arg0, %arg1 : i32, i32
  }
  func.func @transform_1(%arg0: i32, %arg1: i32) -> (i32, i32) {
    %c0_i32 = arith.constant 0 : i32
    %c0_i32_0 = arith.constant 0 : i32
    return %c0_i32, %arg1 : i32, i32
  }
  func.func @transform_2(%arg0: i32, %arg1: i32) -> (i32, i32) {
    %c0_i32 = arith.constant 0 : i32
    %c0_i32_0 = arith.constant 0 : i32
    return %c0_i32, %arg1 : i32, i32
  }
  func.func @transform_3(%arg0: i32, %arg1: i32) -> (i32, i32) {
    %c0_i32 = arith.constant 0 : i32
    return %arg0, %arg1 : i32, i32
  }
}

module attributes {stable_mosaic.version = 11 : i64} {
  func.func @_phase_gemm_stats_kernel(%arg0: i32, %arg1: i32, %arg2: i32, %arg3: memref<168x128xbf16, #tpu.memory_space<vmem>>, %arg4: memref<128x128xbf16, #tpu.memory_space<vmem>>, %arg5: memref<168x4xf32, #tpu.memory_space<vmem>>, %arg6: memref<4x128xf32, #tpu.memory_space<vmem>>, %arg7: memref<168x128xf32, #tpu.memory_space<vmem>>, %arg8: memref<8x128xf32, #tpu.memory_space<vmem>>, %arg9: memref<8x128xf32, #tpu.memory_space<vmem>>, %arg10: memref<168x128xf32, #tpu.memory_space<vmem>>) attributes {dimension_semantics = [#tpu.dimension_semantics<parallel>, #tpu.dimension_semantics<parallel>, #tpu.dimension_semantics<arbitrary>], iteration_bounds = array<i64: 1, 1, 1>, scalar_prefetch = 0 : i64, scratch_operands = 1 : i64, tpu.core_type = #tpu.core_type<tc>, window_params = [{transform_indices = @transform_0, window_bounds = array<i64: 168, 128>}, {transform_indices = @transform_1, window_bounds = array<i64: 128, 128>}, {transform_indices = @transform_2, window_bounds = array<i64: 168, 4>}, {transform_indices = @transform_3, window_bounds = array<i64: 4, 128>}, {transform_indices = @transform_4, window_bounds = array<i64: 168, 128>}, {transform_indices = @transform_5, window_bounds = array<i64: 8, 128>}, {transform_indices = @transform_6, window_bounds = array<i64: 8, 128>}]} {
    %c0_i32 = arith.constant 0 : i32
    %0 = arith.cmpi eq, %arg2, %c0_i32 : i32
    %1 = arith.extui %0 : i1 to i32
    %c0_i32_0 = arith.constant 0 : i32
    %2 = arith.cmpi ne, %1, %c0_i32_0 : i32
    scf.if %2 {
      %cst_10 = arith.constant 0.000000e+00 : f32
      %12 = vector.broadcast %cst_10 : f32 to vector<168x128xf32>
      %c0_11 = arith.constant 0 : index
      %c0_12 = arith.constant 0 : index
      %13 = vector.load %arg10[%c0_11, %c0_12] : memref<168x128xf32, #tpu.memory_space<vmem>>, vector<168x128xf32>
      tpu.vector_store %arg10[%c0_11, %c0_12], %12 {strides = array<i32>} : memref<168x128xf32, #tpu.memory_space<vmem>>, vector<168x128xf32>,
    } else {
    }
    %c0 = arith.constant 0 : index
    %c0_1 = arith.constant 0 : index
    %3 = vector.load %arg10[%c0, %c0_1] : memref<168x128xf32, #tpu.memory_space<vmem>>, vector<168x128xf32>
    %c0_2 = arith.constant 0 : index
    %c0_3 = arith.constant 0 : index
    %4 = vector.load %arg3[%c0_2, %c0_3] : memref<168x128xbf16, #tpu.memory_space<vmem>>, vector<168x128xbf16>
    %c0_4 = arith.constant 0 : index
    %c0_5 = arith.constant 0 : index
    %5 = vector.load %arg4[%c0_4, %c0_5] : memref<128x128xbf16, #tpu.memory_space<vmem>>, vector<128x128xbf16>
    %cst = arith.constant dense<0.000000e+00> : vector<168x128xf32>
    %6 = tpu.matmul %4, %5, %cst {dimension_numbers = #tpu.dot_dimension_numbers<[1], [0], [0], [1], [0, 0, 1, 1], [], []>} : vector<168x128xbf16>, vector<128x128xbf16>, vector<168x128xf32> -> vector<168x128xf32>
    %7 = arith.addf %3, %6 : vector<168x128xf32>
    %c0_6 = arith.constant 0 : index
    %c0_7 = arith.constant 0 : index
    %8 = vector.load %arg10[%c0_6, %c0_7] : memref<168x128xf32, #tpu.memory_space<vmem>>, vector<168x128xf32>
    tpu.vector_store %arg10[%c0_6, %c0_7], %7 {strides = array<i32>} : memref<168x128xf32, #tpu.memory_space<vmem>>, vector<168x128xf32>,
    %c0_i32_8 = arith.constant 0 : i32
    %9 = arith.cmpi eq, %arg2, %c0_i32_8 : i32
    %10 = arith.extui %9 : i1 to i32
    %c0_i32_9 = arith.constant 0 : i32
    %11 = arith.cmpi ne, %10, %c0_i32_9 : i32
    scf.if %11 {
      %c0_10 = arith.constant 0 : index
      %c0_11 = arith.constant 0 : index
      %12 = vector.load %arg10[%c0_10, %c0_11] : memref<168x128xf32, #tpu.memory_space<vmem>>, vector<168x128xf32>
      %c0_12 = arith.constant 0 : index
      %c0_13 = arith.constant 0 : index
      %13 = vector.load %arg7[%c0_12, %c0_13] : memref<168x128xf32, #tpu.memory_space<vmem>>, vector<168x128xf32>
      tpu.vector_store %arg7[%c0_12, %c0_13], %12 {strides = array<i32>} : memref<168x128xf32, #tpu.memory_space<vmem>>, vector<168x128xf32>,
      %c0_14 = arith.constant 0 : index
      %c0_15 = arith.constant 0 : index
      %14 = vector.load %arg5[%c0_14, %c0_15] : memref<168x4xf32, #tpu.memory_space<vmem>>, vector<168x4xf32>
      %c0_16 = arith.constant 0 : index
      %c0_17 = arith.constant 0 : index
      %15 = vector.load %arg6[%c0_16, %c0_17] : memref<4x128xf32, #tpu.memory_space<vmem>>, vector<4x128xf32>
      %16 = vector.extract_strided_slice %14 {offsets = [0, 0], sizes = [168, 1], strides = [1, 1]} : vector<168x4xf32> to vector<168x1xf32>
      %17 = vector.extract_strided_slice %15 {offsets = [0, 0], sizes = [1, 128], strides = [1, 1]} : vector<4x128xf32> to vector<1x128xf32>
      %18 = vector.broadcast %16 : vector<168x1xf32> to vector<168x128xf32>
      %19 = vector.broadcast %17 : vector<1x128xf32> to vector<168x128xf32>
      %20 = arith.mulf %18, %19 : vector<168x128xf32>
      %21 = vector.extract_strided_slice %14 {offsets = [0, 1], sizes = [168, 1], strides = [1, 1]} : vector<168x4xf32> to vector<168x1xf32>
      %22 = vector.extract_strided_slice %15 {offsets = [1, 0], sizes = [1, 128], strides = [1, 1]} : vector<4x128xf32> to vector<1x128xf32>
      %23 = vector.broadcast %21 : vector<168x1xf32> to vector<168x128xf32>
      %24 = vector.broadcast %22 : vector<1x128xf32> to vector<168x128xf32>
      %25 = arith.mulf %23, %24 : vector<168x128xf32>
      %26 = arith.addf %20, %25 : vector<168x128xf32>
      %27 = vector.extract_strided_slice %14 {offsets = [0, 2], sizes = [168, 1], strides = [1, 1]} : vector<168x4xf32> to vector<168x1xf32>
      %28 = vector.extract_strided_slice %15 {offsets = [2, 0], sizes = [1, 128], strides = [1, 1]} : vector<4x128xf32> to vector<1x128xf32>
      %29 = vector.broadcast %27 : vector<168x1xf32> to vector<168x128xf32>
      %30 = vector.broadcast %28 : vector<1x128xf32> to vector<168x128xf32>
      %31 = arith.mulf %29, %30 : vector<168x128xf32>
      %32 = arith.addf %26, %31 : vector<168x128xf32>
      %33 = vector.extract_strided_slice %14 {offsets = [0, 3], sizes = [168, 1], strides = [1, 1]} : vector<168x4xf32> to vector<168x1xf32>
      %34 = vector.extract_strided_slice %15 {offsets = [3, 0], sizes = [1, 128], strides = [1, 1]} : vector<4x128xf32> to vector<1x128xf32>
      %35 = vector.broadcast %33 : vector<168x1xf32> to vector<168x128xf32>
      %36 = vector.broadcast %34 : vector<1x128xf32> to vector<168x128xf32>
      %37 = arith.mulf %35, %36 : vector<168x128xf32>
      %38 = arith.addf %32, %37 : vector<168x128xf32>
      %39 = arith.mulf %12, %38 : vector<168x128xf32>
      %cst_18 = arith.constant 0.000000e+00 : f32
      %40 = vector.broadcast %cst_18 : f32 to vector<8x128xf32>
      %c0_19 = arith.constant 0 : index
      %c0_20 = arith.constant 0 : index
      %41 = vector.load %arg8[%c0_19, %c0_20] : memref<8x128xf32, #tpu.memory_space<vmem>>, vector<8x128xf32>
      tpu.vector_store %arg8[%c0_19, %c0_20], %40 {strides = array<i32>} : memref<8x128xf32, #tpu.memory_space<vmem>>, vector<8x128xf32>,
      %cst_21 = arith.constant 0.000000e+00 : f32
      %42 = vector.broadcast %cst_21 : f32 to vector<8x128xf32>
      %c0_22 = arith.constant 0 : index
      %c0_23 = arith.constant 0 : index
      %43 = vector.load %arg9[%c0_22, %c0_23] : memref<8x128xf32, #tpu.memory_space<vmem>>, vector<8x128xf32>
      tpu.vector_store %arg9[%c0_22, %c0_23], %42 {strides = array<i32>} : memref<8x128xf32, #tpu.memory_space<vmem>>, vector<8x128xf32>,
      %cst_24 = arith.constant dense<0.000000e+00> : vector<128xf32>
      %44 = vector.multi_reduction <add>, %39, %cst_24 [0] : vector<168x128xf32> to vector<128xf32>
      %45 = vector.shape_cast %44 : vector<128xf32> to vector<1x128xf32>
      %c0_25 = arith.constant 0 : index
      %c0_26 = arith.constant 0 : index
      %46 = vector.load %arg8[%c0_25, %c0_26] : memref<8x128xf32, #tpu.memory_space<vmem>>, vector<1x128xf32>
      tpu.vector_store %arg8[%c0_25, %c0_26], %45 {strides = array<i32>} : memref<8x128xf32, #tpu.memory_space<vmem>>, vector<1x128xf32>,
      %47 = arith.mulf %39, %12 : vector<168x128xf32>
      %cst_27 = arith.constant dense<0.000000e+00> : vector<128xf32>
      %48 = vector.multi_reduction <add>, %47, %cst_27 [0] : vector<168x128xf32> to vector<128xf32>
      %49 = vector.shape_cast %48 : vector<128xf32> to vector<1x128xf32>
      %c0_28 = arith.constant 0 : index
      %c0_29 = arith.constant 0 : index
      %50 = vector.load %arg9[%c0_28, %c0_29] : memref<8x128xf32, #tpu.memory_space<vmem>>, vector<1x128xf32>
      tpu.vector_store %arg9[%c0_28, %c0_29], %49 {strides = array<i32>} : memref<8x128xf32, #tpu.memory_space<vmem>>, vector<1x128xf32>,
    } else {
    }
    return
  }
  func.func @transform_0(%arg0: i32, %arg1: i32, %arg2: i32) -> (i32, i32) {
    %c0_i32 = arith.constant 0 : i32
    return %arg0, %arg2 : i32, i32
  }
  func.func @transform_1(%arg0: i32, %arg1: i32, %arg2: i32) -> (i32, i32) {
    %c0_i32 = arith.constant 0 : i32
    return %arg2, %arg1 : i32, i32
  }
  func.func @transform_2(%arg0: i32, %arg1: i32, %arg2: i32) -> (i32, i32) {
    %c0_i32 = arith.constant 0 : i32
    %c0_i32_0 = arith.constant 0 : i32
    return %arg0, %c0_i32 : i32, i32
  }
  func.func @transform_3(%arg0: i32, %arg1: i32, %arg2: i32) -> (i32, i32) {
    %c0_i32 = arith.constant 0 : i32
    %c0_i32_0 = arith.constant 0 : i32
    return %c0_i32, %arg1 : i32, i32
  }
  func.func @transform_4(%arg0: i32, %arg1: i32, %arg2: i32) -> (i32, i32) {
    %c0_i32 = arith.constant 0 : i32
    return %arg0, %arg1 : i32, i32
  }
  func.func @transform_5(%arg0: i32, %arg1: i32, %arg2: i32) -> (i32, i32) {
    %c0_i32 = arith.constant 0 : i32
    return %arg0, %arg1 : i32, i32
  }
  func.func @transform_6(%arg0: i32, %arg1: i32, %arg2: i32) -> (i32, i32) {
    %c0_i32 = arith.constant 0 : i32
    return %arg0, %arg1 : i32, i32
  }
}

module attributes {stable_mosaic.version = 11 : i64} {
  func.func @_scale_shift_act_kernel(%arg0: i32, %arg1: i32, %arg2: memref<168x128xf32, #tpu.memory_space<vmem>>, %arg3: memref<1x128xf32, #tpu.memory_space<vmem>>, %arg4: memref<1x128xf32, #tpu.memory_space<vmem>>, %arg5: memref<168x128xf32, #tpu.memory_space<vmem>>) attributes {dimension_semantics = [#tpu.dimension_semantics<parallel>, #tpu.dimension_semantics<parallel>], iteration_bounds = array<i64: 1, 1>, scalar_prefetch = 0 : i64, scratch_operands = 0 : i64, tpu.core_type = #tpu.core_type<tc>, window_params = [{transform_indices = @transform_0, window_bounds = array<i64: 168, 128>}, {transform_indices = @transform_1, window_bounds = array<i64: 1, 128>}, {transform_indices = @transform_2, window_bounds = array<i64: 1, 128>}, {transform_indices = @transform_3, window_bounds = array<i64: 168, 128>}]} {
    %c0 = arith.constant 0 : index
    %c0_0 = arith.constant 0 : index
    %0 = vector.load %arg2[%c0, %c0_0] : memref<168x128xf32, #tpu.memory_space<vmem>>, vector<168x128xf32>
    %c0_1 = arith.constant 0 : index
    %c0_2 = arith.constant 0 : index
    %1 = vector.load %arg3[%c0_1, %c0_2] : memref<1x128xf32, #tpu.memory_space<vmem>>, vector<1x128xf32>
    %2 = vector.broadcast %1 : vector<1x128xf32> to vector<168x128xf32>
    %3 = arith.mulf %0, %2 : vector<168x128xf32>
    %c0_3 = arith.constant 0 : index
    %c0_4 = arith.constant 0 : index
    %4 = vector.load %arg4[%c0_3, %c0_4] : memref<1x128xf32, #tpu.memory_space<vmem>>, vector<1x128xf32>
    %5 = vector.broadcast %4 : vector<1x128xf32> to vector<168x128xf32>
    %6 = arith.addf %3, %5 : vector<168x128xf32>
    %cst = arith.constant 0.000000e+00 : f32
    %7 = vector.broadcast %cst : f32 to vector<168x128xf32>
    %8 = arith.cmpf ogt, %6, %7 : vector<168x128xf32>
    %cst_5 = arith.constant 5.000000e-02 : f32
    %9 = vector.broadcast %cst_5 : f32 to vector<168x128xf32>
    %10 = arith.mulf %9, %6 : vector<168x128xf32>
    %11 = arith.select %8, %6, %10 : vector<168x128xi1>, vector<168x128xf32>
    %c0_6 = arith.constant 0 : index
    %c0_7 = arith.constant 0 : index
    %12 = vector.load %arg5[%c0_6, %c0_7] : memref<168x128xf32, #tpu.memory_space<vmem>>, vector<168x128xf32>
    tpu.vector_store %arg5[%c0_6, %c0_7], %11 {strides = array<i32>} : memref<168x128xf32, #tpu.memory_space<vmem>>, vector<168x128xf32>,
    return
  }
  func.func @transform_0(%arg0: i32, %arg1: i32) -> (i32, i32) {
    %c0_i32 = arith.constant 0 : i32
    return %arg0, %arg1 : i32, i32
  }
  func.func @transform_1(%arg0: i32, %arg1: i32) -> (i32, i32) {
    %c0_i32 = arith.constant 0 : i32
    %c0_i32_0 = arith.constant 0 : i32
    return %c0_i32, %arg1 : i32, i32
  }
  func.func @transform_2(%arg0: i32, %arg1: i32) -> (i32, i32) {
    %c0_i32 = arith.constant 0 : i32
    %c0_i32_0 = arith.constant 0 : i32
    return %c0_i32, %arg1 : i32, i32
  }
  func.func @transform_3(%arg0: i32, %arg1: i32) -> (i32, i32) {
    %c0_i32 = arith.constant 0 : i32
    return %arg0, %arg1 : i32, i32
  }
}

module attributes {stable_mosaic.version = 11 : i64} {
  func.func @_gemm_bias_act_kernel(%arg0: i32, %arg1: i32, %arg2: i32, %arg3: memref<584x128xbf16, #tpu.memory_space<vmem>>, %arg4: memref<128x128xbf16, #tpu.memory_space<vmem>>, %arg5: memref<1x128xf32, #tpu.memory_space<vmem>>, %arg6: memref<584x128xf32, #tpu.memory_space<vmem>>, %arg7: memref<584x128xf32, #tpu.memory_space<vmem>>) attributes {dimension_semantics = [#tpu.dimension_semantics<parallel>, #tpu.dimension_semantics<parallel>, #tpu.dimension_semantics<arbitrary>], iteration_bounds = array<i64: 1, 1, 1>, scalar_prefetch = 0 : i64, scratch_operands = 1 : i64, tpu.core_type = #tpu.core_type<tc>, window_params = [{transform_indices = @transform_0, window_bounds = array<i64: 584, 128>}, {transform_indices = @transform_1, window_bounds = array<i64: 128, 128>}, {transform_indices = @transform_2, window_bounds = array<i64: 1, 128>}, {transform_indices = @transform_3, window_bounds = array<i64: 584, 128>}]} {
    %c0_i32 = arith.constant 0 : i32
    %0 = arith.cmpi eq, %arg2, %c0_i32 : i32
    %1 = arith.extui %0 : i1 to i32
    %c0_i32_0 = arith.constant 0 : i32
    %2 = arith.cmpi ne, %1, %c0_i32_0 : i32
    scf.if %2 {
      %cst_10 = arith.constant 0.000000e+00 : f32
      %12 = vector.broadcast %cst_10 : f32 to vector<584x128xf32>
      %c0_11 = arith.constant 0 : index
      %c0_12 = arith.constant 0 : index
      %13 = vector.load %arg7[%c0_11, %c0_12] : memref<584x128xf32, #tpu.memory_space<vmem>>, vector<584x128xf32>
      tpu.vector_store %arg7[%c0_11, %c0_12], %12 {strides = array<i32>} : memref<584x128xf32, #tpu.memory_space<vmem>>, vector<584x128xf32>,
    } else {
    }
    %c0 = arith.constant 0 : index
    %c0_1 = arith.constant 0 : index
    %3 = vector.load %arg7[%c0, %c0_1] : memref<584x128xf32, #tpu.memory_space<vmem>>, vector<584x128xf32>
    %c0_2 = arith.constant 0 : index
    %c0_3 = arith.constant 0 : index
    %4 = vector.load %arg3[%c0_2, %c0_3] : memref<584x128xbf16, #tpu.memory_space<vmem>>, vector<584x128xbf16>
    %c0_4 = arith.constant 0 : index
    %c0_5 = arith.constant 0 : index
    %5 = vector.load %arg4[%c0_4, %c0_5] : memref<128x128xbf16, #tpu.memory_space<vmem>>, vector<128x128xbf16>
    %cst = arith.constant dense<0.000000e+00> : vector<584x128xf32>
    %6 = tpu.matmul %4, %5, %cst {dimension_numbers = #tpu.dot_dimension_numbers<[1], [0], [0], [1], [0, 0, 1, 1], [], []>} : vector<584x128xbf16>, vector<128x128xbf16>, vector<584x128xf32> -> vector<584x128xf32>
    %7 = arith.addf %3, %6 : vector<584x128xf32>
    %c0_6 = arith.constant 0 : index
    %c0_7 = arith.constant 0 : index
    %8 = vector.load %arg7[%c0_6, %c0_7] : memref<584x128xf32, #tpu.memory_space<vmem>>, vector<584x128xf32>
    tpu.vector_store %arg7[%c0_6, %c0_7], %7 {strides = array<i32>} : memref<584x128xf32, #tpu.memory_space<vmem>>, vector<584x128xf32>,
    %c0_i32_8 = arith.constant 0 : i32
    %9 = arith.cmpi eq, %arg2, %c0_i32_8 : i32
    %10 = arith.extui %9 : i1 to i32
    %c0_i32_9 = arith.constant 0 : i32
    %11 = arith.cmpi ne, %10, %c0_i32_9 : i32
    scf.if %11 {
      %c0_10 = arith.constant 0 : index
      %c0_11 = arith.constant 0 : index
      %12 = vector.load %arg7[%c0_10, %c0_11] : memref<584x128xf32, #tpu.memory_space<vmem>>, vector<584x128xf32>
      %c0_12 = arith.constant 0 : index
      %c0_13 = arith.constant 0 : index
      %13 = vector.load %arg5[%c0_12, %c0_13] : memref<1x128xf32, #tpu.memory_space<vmem>>, vector<1x128xf32>
      %14 = vector.broadcast %13 : vector<1x128xf32> to vector<584x128xf32>
      %15 = arith.addf %12, %14 : vector<584x128xf32>
      %16 = math.tanh %15 : vector<584x128xf32>
      %c0_14 = arith.constant 0 : index
      %c0_15 = arith.constant 0 : index
      %17 = vector.load %arg6[%c0_14, %c0_15] : memref<584x128xf32, #tpu.memory_space<vmem>>, vector<584x128xf32>
      tpu.vector_store %arg6[%c0_14, %c0_15], %16 {strides = array<i32>} : memref<584x128xf32, #tpu.memory_space<vmem>>, vector<584x128xf32>,
    } else {
    }
    return
  }
  func.func @transform_0(%arg0: i32, %arg1: i32, %arg2: i32) -> (i32, i32) {
    %c0_i32 = arith.constant 0 : i32
    return %arg0, %arg2 : i32, i32
  }
  func.func @transform_1(%arg0: i32, %arg1: i32, %arg2: i32) -> (i32, i32) {
    %c0_i32 = arith.constant 0 : i32
    return %arg2, %arg1 : i32, i32
  }
  func.func @transform_2(%arg0: i32, %arg1: i32, %arg2: i32) -> (i32, i32) {
    %c0_i32 = arith.constant 0 : i32
    %c0_i32_0 = arith.constant 0 : i32
    return %c0_i32, %arg1 : i32, i32
  }
  func.func @transform_3(%arg0: i32, %arg1: i32, %arg2: i32) -> (i32, i32) {
    %c0_i32 = arith.constant 0 : i32
    return %arg0, %arg1 : i32, i32
  }
}

</mosaic_0001>

<llo_original>
// kernel: generator_forward.8
$region0: #{generator_forward.8}
  #allocation0 [shape = 'u32[]', space=smem, size = 0x4, offset = 0x4, fixed_abs, tag = 'smem constant byte address 0x4 - core index']
  #allocation1 [shape = 'u32[144,128]{1,0:T(1,128)}', space=vmem, size = 0x12000, scoped, tag = 'internal scratch']
  #allocation2 [shape = 'f32[8,256]{1,0:T(8,128)}', space=vmem, size = 0x2000, scoped, tag = 'scratch operand']
  %s0 = inlined_call_operand.vmem [shape: bf16[8,128], index: 0, kind: input, shape index: {}]
  %s1 = inlined_call_operand.vmem [shape: bf16[128,512], index: 1, kind: input, shape index: {}]
  %s2 = inlined_call_operand.vmem [shape: f32[1,512], index: 2, kind: input, shape index: {}]
  %s3 = inlined_call_operand.vmem [shape: f32[8,512], index: 3, kind: output, shape index: {}]
  %s4 = sld [smem:[#allocation0]]
  $region91: #{generator_forward.8} parent=0
    _
  %s6 = ssub.s32 1, %s4
  %s7 = scalar_select 0, %s6, %s4
  $region1: #{generator_forward.8} parent=0
    #allocation3 [shape = 'u8[131072]{0}', space=vmem, size = 0x20000, scoped, tag = 'input window, operand 1']
    loop: start=0, step=1, limit=4
    $region2: #{generator_forward.8} parent=1 // loop_pre_header
      _
    $region3: #{generator_forward.8} parent=1 // loop_header
      %s9 = sphi 0, %s13
      %p10 = scmp.ge.s32.totalorder %s9, 4
      %s16 = sphi 0, %s35
      %s17 = sphi 0, %s31
      %s18 = sphi 0, %s27
      %s19 = sphi 0, %s16
      %s20 = sphi 0, %s17
      %s21 = sphi 0, %s18
      %s22 = sphi 0, %s19
      %s23 = sphi 0, %s20
      %s24 = sphi 0, %s21
      %s40 = sphi 0, %s42
      %s43 = sphi 0, %s40
      %s44 = sphi 0, %s43
      %s60 = sphi 0, %s44
      %s68 = sphi 0, %s70
      %s71 = sphi 0, %s68
      %s72 = sphi 0, %s71
      %s88 = sphi 0, %s72
      %s94 = sphi 0, %s96
      %s97 = sphi 0, %s94
      %s98 = sphi 0, %s97
      %s114 = sphi 0, %s98
      %s122 = sphi 0, %s124
      %s125 = sphi 0, %s122
      %s126 = sphi 0, %s125
      %s142 = sphi 0, %s126
    $region4: #{generator_forward.8} parent=1 // loop_header_branch
      %12 = sbr.rel (%p10) target = $region8
    $region5: #{generator_forward.8} parent=1 // loop_body
      %s14 = ssub.s32 %s9, 1
      %s15 = ssub.s32 %s9, 2
      %s25 = sadd.s32 1, %s18
      %p26 = scmp.ge.s32.totalorder %s25, 1
      %s27 = scalar_select %p26, 0, %s25
      %s28 = sadd.s32 1, %s17
      %s29 = scalar_select %p26, %s28, %s17
      %p30 = scmp.ge.s32.totalorder %s29, 2
      %s31 = scalar_select %p30, 0, %s29
      %s32 = sadd.s32 1, %s16
      %s33 = scalar_select %p30, %s32, %s16
      %p34 = scmp.ge.s32.totalorder %s33, 1
      %s35 = scalar_select %p34, 0, %s33
      %s36 = ssub.s32 %s16, %s35
      %s37 = ssub.s32 %s18, %s27
      %s38 = sor.u32 %s36, %s37
      %p39 = scmp.eq.s32.totalorder %s38, 0
      %s41 = sadd.s32 %s40, 1
      %s42 = scalar_select %p39, %s40, %s41
      %p45 = pneg %p39
      %p46 = scmp.eq.s32.totalorder %s9, 1
      %p47 = por %p45, %p46
      %p48 = scmp.ne.s32.totalorder %s40, %s43
      %p49 = scmp.eq.s32.totalorder %s9, 0
      %p50 = por %p48, %p49
      %p51 = scmp.ne.s32.totalorder %s40, %s43
      %p52 = scmp.eq.s32.totalorder %s14, 1
      %p53 = por %p51, %p52
      %p54 = scmp.ne.s32.totalorder %s43, %s44
      %p55 = scmp.eq.s32.totalorder %s14, 0
      %p56 = por %p54, %p55
      %p57 = scmp.ne.s32.totalorder %s43, %s44
      %p58 = scmp.eq.s32.totalorder %s15, 1
      %p59 = por %p57, %p58
      %p61 = scmp.ne.s32.totalorder %s44, %s60
      %p62 = scmp.eq.s32.totalorder %s15, 0
      %p63 = por %p61, %p62
      %s64 = ssub.s32 %s18, %s27
      %s65 = ssub.s32 %s17, %s31
      %s66 = sor.u32 %s64, %s65
      %p67 = scmp.eq.s32.totalorder %s66, 0
      %s69 = sadd.s32 %s68, 1
      %s70 = scalar_select %p67, %s68, %s69
      %p73 = pneg %p67
      %p74 = scmp.eq.s32.totalorder %s9, 1
      %p75 = por %p73, %p74
      %p76 = scmp.ne.s32.totalorder %s68, %s71
      %p77 = scmp.eq.s32.totalorder %s9, 0
      %p78 = por %p76, %p77
      %p79 = scmp.ne.s32.totalorder %s68, %s71
      %p80 = scmp.eq.s32.totalorder %s14, 1
      %p81 = por %p79, %p80
      %p82 = scmp.ne.s32.totalorder %s71, %s72
      %p83 = scmp.eq.s32.totalorder %s14, 0
      %p84 = por %p82, %p83
      %p85 = scmp.ne.s32.totalorder %s71, %s72
      %p86 = scmp.eq.s32.totalorder %s15, 1
      %p87 = por %p85, %p86
      %p89 = scmp.ne.s32.totalorder %s72, %s88
      %p90 = scmp.eq.s32.totalorder %s15, 0
      %p91 = por %p89, %p90
      %s92 = ssub.s32 %s17, %s31
      %p93 = scmp.eq.s32.totalorder %s92, 0
      %s95 = sadd.s32 %s94, 1
      %s96 = scalar_select %p93, %s94, %s95
      %p99 = pneg %p93
      %p100 = scmp.eq.s32.totalorder %s9, 1
      %p101 = por %p99, %p100
      %p102 = scmp.ne.s32.totalorder %s94, %s97
      %p103 = scmp.eq.s32.totalorder %s9, 0
      %p104 = por %p102, %p103
      %p105 = scmp.ne.s32.totalorder %s94, %s97
      %p106 = scmp.eq.s32.totalorder %s14, 1
      %p107 = por %p105, %p106
      %p108 = scmp.ne.s32.totalorder %s97, %s98
      %p109 = scmp.eq.s32.totalorder %s14, 0
      %p110 = por %p108, %p109
      %p111 = scmp.ne.s32.totalorder %s97, %s98
      %p112 = scmp.eq.s32.totalorder %s15, 1
      %p113 = por %p111, %p112
      %p115 = scmp.ne.s32.totalorder %s98, %s114
      %p116 = scmp.eq.s32.totalorder %s15, 0
      %p117 = por %p115, %p116
      %s118 = ssub.s32 %s16, %s35
      %s119 = ssub.s32 %s17, %s31
      %s120 = sor.u32 %s118, %s119
      %p121 = scmp.eq.s32.totalorder %s120, 0
      %s123 = sadd.s32 %s122, 1
      %s124 = scalar_select %p121, %s122, %s123
      %p127 = pneg %p121
      %p128 = scmp.eq.s32.totalorder %s9, 1
      %p129 = por %p127, %p128
      %p130 = scmp.ne.s32.totalorder %s122, %s125
      %p131 = scmp.eq.s32.totalorder %s9, 0
      %p132 = por %p130, %p131
      %p133 = scmp.ne.s32.totalorder %s122, %s125
      %p134 = scmp.eq.s32.totalorder %s14, 1
      %p135 = por %p133, %p134
      %p136 = scmp.ne.s32.totalorder %s125, %s126
      %p137 = scmp.eq.s32.totalorder %s14, 0
      %p138 = por %p136, %p137
      %p139 = scmp.ne.s32.totalorder %s125, %s126
      %p140 = scmp.eq.s32.totalorder %s15, 1
      %p141 = por %p139, %p140
      %p143 = scmp.ne.s32.totalorder %s126, %s142
      %p144 = scmp.eq.s32.totalorder %s15, 0
      %p145 = por %p143, %p144
      %p146 = scmp.le.s32.totalorder 1, %s9
      %p147 = scmp.lt.s32.totalorder %s9, 3
      %p148 = pnand %p146, %p147
      %p149 = pneg %p148
      // Predicated region
      $region9: #{generator_forward.8} parent=5 // pred_check
        _
      $region10: #{generator_forward.8} parent=5 // pred_check_branch
        %151 = sbr.rel (%p148) target = $region12
      $region11: #{generator_forward.8} parent=5 // pred_region
        %s152 = ssub.s32 %s9, 1
        // Predicated region
        $region13: #{generator_forward.8} parent=11 // pred_check
          %p153 = pneg %p56
        $region14: #{generator_forward.8} parent=11 // pred_check_branch
          %155 = sbr.rel (%p153) target = $region16
        $region15: #{generator_forward.8} parent=11 // pred_region
          %p156 = scmp.lt.s32.totalorder %s19, 0
          %s157 = scalar_select %p156, %s19, 0
          %p158 = scmp.lt.s32.totalorder %s21, 0
          %s159 = scalar_select %p158, %s21, 0
          %s160 = sadd.s32 %s159, %s157
          %s161 = smul.addr %s160, 4
          %s162 = scalar_lea.vmem %s0, %s161
        $region16: #{generator_forward.8} parent=11 // pred_fallthru
          _
      $region12: #{generator_forward.8} parent=5 // pred_fallthru
        _
      %p163 = scmp.lt.s32.totalorder %s9, 2
      // Predicated region
      $region17: #{generator_forward.8} parent=5 // pred_check
        %p164 = pneg %p163
      $region18: #{generator_forward.8} parent=5 // pred_check_branch
        %166 = sbr.rel (%p164) target = $region20
      $region19: #{generator_forward.8} parent=5 // pred_region
        // Predicated region
        $region21: #{generator_forward.8} parent=19 // pred_check
          %p167 = pneg %p78
        $region22: #{generator_forward.8} parent=19 // pred_check_branch
          %169 = sbr.rel (%p167) target = $region24
        $region23: #{generator_forward.8} parent=19 // pred_region
          %s170 = sand.u32 %s68, 1
          %s171 = sand.u32 %s68, 1
          %s172 = smul.addr %s171, 128
          %s173 = scalar_lea.vmem [#allocation3], %s172
          %s174 = smul.u32 16, %s18
          %s175 = smul.u32 2, %s17
          %s176 = smul.addr %s174, 4
          %s177 = sadd.s32 %s175, %s176
          %s178 = smul.addr %s177, 4
          %s179 = scalar_lea.vmem %s1, %s178
          // Predicated region
          $region25: #{generator_forward.8} parent=23 // pred_check
            _
          $region26: #{generator_forward.8} parent=23 // pred_check_branch
            %181 = sbr.rel (0) target = $region28
          $region27: #{generator_forward.8} parent=23 // pred_region
            // Predicated region
            $region29: #{generator_forward.8} parent=27 // pred_check
              _
            $region30: #{generator_forward.8} parent=27 // pred_check_branch
              %183 = sbr.rel (0) target = $region32
            $region31: #{generator_forward.8} parent=27 // pred_region
              // Predicated region
              $region44: #{generator_forward.8} parent=31 // pred_check
                _
              $region45: #{generator_forward.8} parent=31 // pred_check_branch
                %228 = sbr.rel (0) target = $region47
              $region46: #{generator_forward.8} parent=31 // pred_region
                loop: start=0, step=1, limit=1
                $region48: #{generator_forward.8} parent=46 // loop_pre_header
                  _
                $region49: #{generator_forward.8} parent=46 // loop_header
                  %s230 = sphi 0, %s234
                  %p231 = scmp.ge.s32.totalorder %s230, 1
                  %s235 = sphi %s179, %s179
                  %s236 = sphi %s173, %s173
                $region50: #{generator_forward.8} parent=46 // loop_header_branch
                  %233 = sbr.rel (%p231) target = $region54
                $region51: #{generator_forward.8} parent=46 // loop_body
                  %v237 = vld [vmem:[%s235] sm:$0xff]
                  %238 = vst [vmem:[%s236] sm:$0xff] %v237
                  %v239 = vld [vmem:[%s235 + $0x10] sm:$0xff]
                  %240 = vst [vmem:[%s236 + $0x8] sm:$0xff] %v239
                  %v241 = vld [vmem:[%s235 + $0x20] sm:$0xff]
                  %242 = vst [vmem:[%s236 + $0x10] sm:$0xff] %v241
                  %v243 = vld [vmem:[%s235 + $0x30] sm:$0xff]
                  %244 = vst [vmem:[%s236 + $0x18] sm:$0xff] %v243
                  %v245 = vld [vmem:[%s235 + $0x40] sm:$0xff]
                  %246 = vst [vmem:[%s236 + $0x20] sm:$0xff] %v245
                  %v247 = vld [vmem:[%s235 + $0x50] sm:$0xff]
                  %248 = vst [vmem:[%s236 + $0x28] sm:$0xff] %v247
                  %v249 = vld [vmem:[%s235 + $0x60] sm:$0xff]
                  %250 = vst [vmem:[%s236 + $0x30] sm:$0xff] %v249
                  %v251 = vld [vmem:[%s235 + $0x70] sm:$0xff]
                  %252 = vst [vmem:[%s236 + $0x38] sm:$0xff] %v251
                  %v253 = vld [vmem:[%s235 + $0x80] sm:$0xff]
                  %254 = vst [vmem:[%s236 + $0x40] sm:$0xff] %v253
                  %v255 = vld [vmem:[%s235 + $0x90] sm:$0xff]
                  %256 = vst [vmem:[%s236 + $0x48] sm:$0xff] %v255
                  %v257 = vld [vmem:[%s235 + $0xa0] sm:$0xff]
                  %258 = vst [vmem:[%s236 + $0x50] sm:$0xff] %v257
                  %v259 = vld [vmem:[%s235 + $0xb0] sm:$0xff]
                  %260 = vst [vmem:[%s236 + $0x58] sm:$0xff] %v259
                  %v261 = vld [vmem:[%s235 + $0xc0] sm:$0xff]
                  %262 = vst [vmem:[%s236 + $0x60] sm:$0xff] %v261
                  %v263 = vld [vmem:[%s235 + $0xd0] sm:$0xff]
                  %264 = vst [vmem:[%s236 + $0x68] sm:$0xff] %v263
                  %v265 = vld [vmem:[%s235 + $0xe0] sm:$0xff]
                  %266 = vst [vmem:[%s236 + $0x70] sm:$0xff] %v265
                  %v267 = vld [vmem:[%s235 + $0xf0] sm:$0xff]
                  %268 = vst [vmem:[%s236 + $0x78] sm:$0xff] %v267
                $region52: #{generator_forward.8} parent=46 // loop_footer
                  %s234 = sadd.s32 1, %s230
                $region53: #{generator_forward.8} parent=46 // loop_footer_branch
                  %229 = sbr.rel target = $region49
                $region54: #{generator_forward.8} parent=46 // loop_exit
                  _
              $region47: #{generator_forward.8} parent=31 // pred_fallthru
                _
              // Predicated region
              $region55: #{generator_forward.8} parent=31 // pred_check
                _
              $region56: #{generator_forward.8} parent=31 // pred_check_branch
                %270 = sbr.rel target = $region58
              $region57: #{generator_forward.8} parent=31 // pred_region
                _
              $region58: #{generator_forward.8} parent=31 // pred_fallthru
                _
            $region32: #{generator_forward.8} parent=27 // pred_fallthru
              _
            // Predicated region
            $region33: #{generator_forward.8} parent=27 // pred_check
              _
            $region34: #{generator_forward.8} parent=27 // pred_check_branch
              %185 = sbr.rel target = $region36
            $region35: #{generator_forward.8} parent=27 // pred_region
              loop: start=0, step=1, limit=1
              $region37: #{generator_forward.8} parent=35 // loop_pre_header
                _
              $region38: #{generator_forward.8} parent=35 // loop_header
                %s188 = sphi 0, %s192
                %p189 = scmp.ge.s32.totalorder %s188, 1
                %s193 = sphi %s179, %s179
                %s194 = sphi %s173, %s173
              $region39: #{generator_forward.8} parent=35 // loop_header_branch
                %191 = sbr.rel (%p189) target = $region43
              $region40: #{generator_forward.8} parent=35 // loop_body
                %v195 = vld [vmem:[%s193] sm:$0xff]
                %196 = vst [vmem:[%s194] sm:$0xff] %v195
                %v197 = vld [vmem:[%s193 + $0x10] sm:$0xff]
                %198 = vst [vmem:[%s194 + $0x8] sm:$0xff] %v197
                %v199 = vld [vmem:[%s193 + $0x20] sm:$0xff]
                %200 = vst [vmem:[%s194 + $0x10] sm:$0xff] %v199
                %v201 = vld [vmem:[%s193 + $0x30] sm:$0xff]
                %202 = vst [vmem:[%s194 + $0x18] sm:$0xff] %v201
                %v203 = vld [vmem:[%s193 + $0x40] sm:$0xff]
                %204 = vst [vmem:[%s194 + $0x20] sm:$0xff] %v203
                %v205 = vld [vmem:[%s193 + $0x50] sm:$0xff]
                %206 = vst [vmem:[%s194 + $0x28] sm:$0xff] %v205
                %v207 = vld [vmem:[%s193 + $0x60] sm:$0xff]
                %208 = vst [vmem:[%s194 + $0x30] sm:$0xff] %v207
                %v209 = vld [vmem:[%s193 + $0x70] sm:$0xff]
                %210 = vst [vmem:[%s194 + $0x38] sm:$0xff] %v209
                %v211 = vld [vmem:[%s193 + $0x80] sm:$0xff]
                %212 = vst [vmem:[%s194 + $0x40] sm:$0xff] %v211
                %v213 = vld [vmem:[%s193 + $0x90] sm:$0xff]
                %214 = vst [vmem:[%s194 + $0x48] sm:$0xff] %v213
                %v215 = vld [vmem:[%s193 + $0xa0] sm:$0xff]
                %216 = vst [vmem:[%s194 + $0x50] sm:$0xff] %v215
                %v217 = vld [vmem:[%s193 + $0xb0] sm:$0xff]
                %218 = vst [vmem:[%s194 + $0x58] sm:$0xff] %v217
                %v219 = vld [vmem:[%s193 + $0xc0] sm:$0xff]
                %220 = vst [vmem:[%s194 + $0x60] sm:$0xff] %v219
                %v221 = vld [vmem:[%s193 + $0xd0] sm:$0xff]
                %222 = vst [vmem:[%s194 + $0x68] sm:$0xff] %v221
                %v223 = vld [vmem:[%s193 + $0xe0] sm:$0xff]
                %224 = vst [vmem:[%s194 + $0x70] sm:$0xff] %v223
                %v225 = vld [vmem:[%s193 + $0xf0] sm:$0xff]
                %226 = vst [vmem:[%s194 + $0x78] sm:$0xff] %v225
              $region41: #{generator_forward.8} parent=35 // loop_footer
                %s192 = sadd.s32 1, %s188
              $region42: #{generator_forward.8} parent=35 // loop_footer_branch
                %187 = sbr.rel target = $region38
              $region43: #{generator_forward.8} parent=35 // loop_exit
                _
            $region36: #{generator_forward.8} parent=27 // pred_fallthru
              _
          $region28: #{generator_forward.8} parent=23 // pred_fallthru
            _
          %271 = vnop
        $region24: #{generator_forward.8} parent=19 // pred_fallthru
          _
        // Predicated region
        $region59: #{generator_forward.8} parent=19 // pred_check
          %p272 = pneg %p104
        $region60: #{generator_forward.8} parent=19 // pred_check_branch
          %274 = sbr.rel (%p272) target = $region62
        $region61: #{generator_forward.8} parent=19 // pred_region
          %s275 = smul.u32 2, %s17
          %p276 = scmp.lt.s32.totalorder %s275, 3
          %s277 = scalar_select %p276, %s275, 3
          %s278 = scalar_lea.vmem %s2, %s277
          %s279 = smul.u32 2, %s17
        $region62: #{generator_forward.8} parent=19 // pred_fallthru
          _
      $region20: #{generator_forward.8} parent=5 // pred_fallthru
        _
      %p280 = scmp.le.s32.totalorder 1, %s9
      %p281 = scmp.lt.s32.totalorder %s9, 3
      %p282 = pnand %p280, %p281
      %p283 = pneg %p282
      // Predicated region
      $region63: #{generator_forward.8} parent=5 // pred_check
        _
      $region64: #{generator_forward.8} parent=5 // pred_check_branch
        %285 = sbr.rel (%p282) target = $region66
      $region65: #{generator_forward.8} parent=5 // pred_region
        %s286 = ssub.s32 %s9, 1
        %s287 = sand.u32 %s71, 1
        %s288 = sand.u32 %s71, 1
        %s289 = smul.addr %s288, 128
        %s290 = scalar_lea.vmem [#allocation3], %s289
        // Predicated region
        $region67: #{generator_forward.8} parent=65 // pred_check
          %p291 = pneg %p84
        $region68: #{generator_forward.8} parent=65 // pred_check_branch
          %293 = sbr.rel (%p291) target = $region70
        $region69: #{generator_forward.8} parent=65 // pred_region
          _
        $region70: #{generator_forward.8} parent=65 // pred_fallthru
          _
        %p294 = scmp.lt.s32.totalorder %s19, 0
        %s295 = scalar_select %p294, %s19, 0
        %p296 = scmp.lt.s32.totalorder %s21, 0
        %s297 = scalar_select %p296, %s21, 0
        %s298 = sadd.s32 %s297, %s295
        %s299 = smul.addr %s298, 4
        %s300 = scalar_lea.vmem %s0, %s299
        %p301 = pneg %p56
        %p302 = pneg %p53
        %s303 = sand.u32 %s71, 1
        %s304 = sand.u32 %s71, 1
        %s305 = smul.addr %s304, 128
        %s306 = scalar_lea.vmem [#allocation3], %s305
        %p307 = pneg %p84
        %p308 = pneg %p81
        %s309 = smul.u32 2, %s20
        %p310 = scmp.lt.s32.totalorder %s309, 3
        %s311 = scalar_select %p310, %s309, 3
        %s312 = scalar_lea.vmem %s2, %s311
        %p313 = pneg %p110
        %p314 = pneg %p107
        %p315 = pneg %p138
        %p316 = pneg %p135
        %s317 = smul.u32 2, %s20
        %p318 = scmp.lt.s32.totalorder %s19, 0
        %s319 = scalar_select %p318, %s19, 0
        %p320 = scmp.lt.s32.totalorder %s317, 3
        %s321 = scalar_select %p320, %s317, 3
        %s322 = smul.addr %s319, 4
        %s323 = sadd.s32 %s321, %s322
        %s324 = smul.addr %s323, 8
        %s325 = scalar_lea.vmem %s3, %s324
        %p326 = scmp.lt.s32.totalorder %s19, 0
        %s327 = scalar_select %p326, %s19, 0
        %p328 = scmp.lt.s32.totalorder %s21, 0
        %s329 = scalar_select %p328, %s21, 0
        %s330 = sadd.s32 %s329, %s327
        %s331 = smul.addr %s330, 4
        %s332 = scalar_lea.vmem %s0, %s331
        %s333 = smul.u32 16, %s21
        %s334 = smul.u32 2, %s20
        %s335 = smul.u32 2, %s20
        %p336 = scmp.lt.s32.totalorder %s335, 3
        %s337 = scalar_select %p336, %s335, 3
        %s338 = scalar_lea.vmem %s2, %s337
        %s339 = smul.u32 2, %s20
        %s340 = smul.u32 2, %s20
        %p341 = scmp.lt.s32.totalorder %s19, 0
        %s342 = scalar_select %p341, %s19, 0
        %p343 = scmp.lt.s32.totalorder %s340, 3
        %s344 = scalar_select %p343, %s340, 3
        %s345 = smul.addr %s342, 4
        %s346 = sadd.s32 %s344, %s345
        %s347 = smul.addr %s346, 8
        %s348 = scalar_lea.vmem %s3, %s347
        %s349 = smul.u32 2, %s20
        %p351 = scmp.eq.s32.totalorder %s21, 0
        // Predicated region
        $region71: #{generator_forward.8} parent=65 // pred_check
          %p352 = pneg %p351
        $region72: #{generator_forward.8} parent=65 // pred_check_branch
          %354 = sbr.rel (%p352) target = $region74
        $region73: #{generator_forward.8} parent=65 // pred_region
          %355 = vst [vmem:[#allocation2] sm:$0xff] 0.0
          %356 = vst [vmem:[#allocation2 + $0x8] sm:$0xff] 0.0
        $region74: #{generator_forward.8} parent=65 // pred_fallthru
          _
        %v357 = vld [vmem:[#allocation2] sm:$0xff]
        %v358 = vld [vmem:[#allocation2 + $0x8] sm:$0xff]
        %v359 = vld [vmem:[%s332] sm:$0xf]
        %v360 = vld [vmem:[%s290] sm:$0xff]
        %v361 = vld [vmem:[%s290 + $0x8] sm:$0xff]
        %v362 = vld [vmem:[%s290 + $0x10] sm:$0xff]
        %v363 = vld [vmem:[%s290 + $0x18] sm:$0xff]
        %v364 = vld [vmem:[%s290 + $0x20] sm:$0xff]
        %v365 = vld [vmem:[%s290 + $0x28] sm:$0xff]
        %v366 = vld [vmem:[%s290 + $0x30] sm:$0xff]
        %v367 = vld [vmem:[%s290 + $0x38] sm:$0xff]
        %v368 = vld [vmem:[%s290 + $0x40] sm:$0xff]
        %v369 = vld [vmem:[%s290 + $0x48] sm:$0xff]
        %v370 = vld [vmem:[%s290 + $0x50] sm:$0xff]
        %v371 = vld [vmem:[%s290 + $0x58] sm:$0xff]
        %v372 = vld [vmem:[%s290 + $0x60] sm:$0xff]
        %v373 = vld [vmem:[%s290 + $0x68] sm:$0xff]
        %v374 = vld [vmem:[%s290 + $0x70] sm:$0xff]
        %v375 = vld [vmem:[%s290 + $0x78] sm:$0xff]
        %v392 = vunpack.c.l.b16 %v360
        %v393 = vunpack.c.h.b16 %v360
        %v394 = vunpack.c.l.b16 %v361
        %v395 = vunpack.c.h.b16 %v361
        %v396 = vunpack.c.l.b16 %v362
        %v397 = vunpack.c.h.b16 %v362
        %v398 = vunpack.c.l.b16 %v363
        %v399 = vunpack.c.h.b16 %v363
        %v400 = vunpack.c.l.b16 %v364
        %v401 = vunpack.c.h.b16 %v364
        %v402 = vunpack.c.l.b16 %v365
        %v403 = vunpack.c.h.b16 %v365
        %v404 = vunpack.c.l.b16 %v366
        %v405 = vunpack.c.h.b16 %v366
        %v406 = vunpack.c.l.b16 %v367
        %v407 = vunpack.c.h.b16 %v367
        %v408 = vunpack.c.l.b16 %v368
        %v409 = vunpack.c.h.b16 %v368
        %v410 = vunpack.c.l.b16 %v369
        %v411 = vunpack.c.h.b16 %v369
        %v412 = vunpack.c.l.b16 %v370
        %v413 = vunpack.c.h.b16 %v370
        %v414 = vunpack.c.l.b16 %v371
        %v415 = vunpack.c.h.b16 %v371
        %v416 = vunpack.c.l.b16 %v372
        %v417 = vunpack.c.h.b16 %v372
        %v418 = vunpack.c.l.b16 %v373
        %v419 = vunpack.c.h.b16 %v373
        %v420 = vunpack.c.l.b16 %v374
        %v421 = vunpack.c.h.b16 %v374
        %v422 = vunpack.c.l.b16 %v375
        %v423 = vunpack.c.h.b16 %v375
        %v424 = vpack.c.b16 %v394, %v392
        %v425 = vpack.c.b16 %v395, %v393
        %v426 = vpack.c.b16 %v398, %v396
        %v427 = vpack.c.b16 %v399, %v397
        %v428 = vpack.c.b16 %v402, %v400
        %v429 = vpack.c.b16 %v403, %v401
        %v430 = vpack.c.b16 %v406, %v404
        %v431 = vpack.c.b16 %v407, %v405
        %v432 = vpack.c.b16 %v410, %v408
        %v433 = vpack.c.b16 %v411, %v409
        %v434 = vpack.c.b16 %v414, %v412
        %v435 = vpack.c.b16 %v415, %v413
        %v436 = vpack.c.b16 %v418, %v416
        %v437 = vpack.c.b16 %v419, %v417
        %v438 = vpack.c.b16 %v422, %v420
        %v439 = vpack.c.b16 %v423, %v421
        %456 = vmatprep.subr.bf16.mxu0 %v425
        %457 = vmatpush1.bf16.msra.mxu0 %v424
        %458 = vmatprep.subr.bf16.mxu0 %v427
        %459 = vmatpush1.bf16.msra.mxu0 %v426
        %460 = vmatprep.subr.bf16.mxu0 %v429
        %461 = vmatpush1.bf16.msra.mxu0 %v428
        %462 = vmatprep.subr.bf16.mxu0 %v431
        %463 = vmatpush1.bf16.msra.mxu0 %v430
        %464 = vmatprep.subr.bf16.mxu0 %v433
        %465 = vmatpush1.bf16.msra.mxu0 %v432
        %466 = vmatprep.subr.bf16.mxu0 %v435
        %467 = vmatpush1.bf16.msra.mxu0 %v434
        %468 = vmatprep.subr.bf16.mxu0 %v437
        %469 = vmatpush1.bf16.msra.mxu0 %v436
        %470 = vmatprep.subr.bf16.mxu0 %v439
        %471 = vmatpush1.bf16.msra.mxu0 %v438
        %472 = vmatprep.subr.bf16.mxu0 0
        %473 = vmatpush1.bf16.msra.mxu0 0
        %474 = vmatprep.subr.bf16.mxu0 0
        %475 = vmatpush1.bf16.msra.mxu0 0
        %476 = vmatprep.subr.bf16.mxu0 0
        %477 = vmatpush1.bf16.msra.mxu0 0
        %478 = vmatprep.subr.bf16.mxu0 0
        %479 = vmatpush1.bf16.msra.mxu0 0
        %480 = vmatprep.subr.bf16.mxu0 0
        %481 = vmatpush1.bf16.msra.mxu0 0
        %482 = vmatprep.subr.bf16.mxu0 0
        %483 = vmatpush1.bf16.msra.mxu0 0
        %484 = vmatprep.subr.bf16.mxu0 0
        %485 = vmatpush1.bf16.msra.mxu0 0
        %486 = vmatprep.subr.bf16.mxu0 0
        %487 = vmatpush1.bf16.msra.mxu0 0
        %488 = vmatprep.mubr.bf16.mxu0 0
        %489 = vmatmul.mubr.bf16.gmra.mrb[0].mxu0 %v359
        %v490 = vpop.f32.mrb[0].mxu0
        %v491 = vadd.f32 0.0, %v490
        %v492 = vpop.f32.mrb[0].mxu0
        %v493 = vadd.f32 0.0, %v492
        %v494 = vpop.f32.mrb[0].mxu0
        %v495 = vpop.f32.mrb[0].mxu0
        %496 = vdwg.mxu0
        %v497 = vadd.f32 %v357, %v491
        %v498 = vadd.f32 %v358, %v493
        %499 = vst [vmem:[#allocation2] sm:$0xff] %v497
        %500 = vst [vmem:[#allocation2 + $0x8] sm:$0xff] %v498
        // Predicated region
        $region75: #{generator_forward.8} parent=65 // pred_check
          %p501 = pneg %p351
        $region76: #{generator_forward.8} parent=65 // pred_check_branch
          %503 = sbr.rel (%p501) target = $region78
        $region77: #{generator_forward.8} parent=65 // pred_region
          %v504 = vld [vmem:[#allocation2] sm:$0xff]
          %v505 = vld [vmem:[#allocation2 + $0x8] sm:$0xff]
          %v506 = vld [vmem:[%s338] sm:$0x3]
          %v508 = vlaneseq
          %v509 = vshrl.u32 %v508, 7
          %v510 = vsub.s32 0, %v509
          %v511 = vrot.slane %v506, %v510
          %v512 = vlaneseq
          %v513 = vshrl.u32 %v512, 7
          %v514 = vsub.s32 1, %v513
          %v515 = vrot.slane %v506, %v514
          %v518 = vadd.f32 %v504, %v511
          %v519 = vadd.f32 %v505, %v515
          %520 = vst [vmem:[%s348] sm:$0xff] %v518
          %521 = vst [vmem:[%s348 + $0x8] sm:$0xff] %v519
        $region78: #{generator_forward.8} parent=65 // pred_fallthru
          _
        %s522 = smul.u32 2, %s20
        %p523 = scmp.lt.s32.totalorder %s19, 0
        %s524 = scalar_select %p523, %s19, 0
        %p525 = scmp.lt.s32.totalorder %s522, 3
        %s526 = scalar_select %p525, %s522, 3
        %s527 = smul.addr %s524, 4
        %s528 = sadd.s32 %s526, %s527
        %s529 = smul.addr %s528, 8
        %s530 = scalar_lea.vmem %s3, %s529
        // Predicated region
        $region79: #{generator_forward.8} parent=65 // pred_check
          %p531 = pneg %p135
        $region80: #{generator_forward.8} parent=65 // pred_check_branch
          %533 = sbr.rel (%p531) target = $region82
        $region81: #{generator_forward.8} parent=65 // pred_region
          %s534 = smul.u32 2, %s20
        $region82: #{generator_forward.8} parent=65 // pred_fallthru
          _
      $region66: #{generator_forward.8} parent=5 // pred_fallthru
        _
      %p535 = scmp.le.s32.totalorder 2, %s9
      // Predicated region
      $region83: #{generator_forward.8} parent=5 // pred_check
        %p536 = pneg %p535
      $region84: #{generator_forward.8} parent=5 // pred_check_branch
        %538 = sbr.rel (%p536) target = $region86
      $region85: #{generator_forward.8} parent=5 // pred_region
        %s539 = ssub.s32 %s9, 2
        // Predicated region
        $region87: #{generator_forward.8} parent=85 // pred_check
          %p540 = pneg %p141
        $region88: #{generator_forward.8} parent=85 // pred_check_branch
          %542 = sbr.rel (%p540) target = $region90
        $region89: #{generator_forward.8} parent=85 // pred_region
          %s543 = smul.u32 2, %s23
          %p544 = scmp.lt.s32.totalorder %s22, 0
          %s545 = scalar_select %p544, %s22, 0
          %p546 = scmp.lt.s32.totalorder %s543, 3
          %s547 = scalar_select %p546, %s543, 3
          %s548 = smul.addr %s545, 4
          %s549 = sadd.s32 %s547, %s548
          %s550 = smul.addr %s549, 8
          %s551 = scalar_lea.vmem %s3, %s550
        $region90: #{generator_forward.8} parent=85 // pred_fallthru
          _
      $region86: #{generator_forward.8} parent=5 // pred_fallthru
        _
    $region6: #{generator_forward.8} parent=1 // loop_footer
      %s13 = sadd.s32 1, %s9
    $region7: #{generator_forward.8} parent=1 // loop_footer_branch
      %8 = sbr.rel target = $region3
    $region8: #{generator_forward.8} parent=1 // loop_exit
      _

// kernel: tile.38
$region0: #{tile.38}
  #allocation0 [shape = 's32[1]{0}', space=sflag, size = 0x4, scoped, tag = 'scoped memory for tile.38']
  %s0 = inlined_call_operand.vmem [shape: f32[64], index: 0, kind: input, shape index: {}]
  %s1 = inlined_call_operand.vmem [shape: f32[4,64], index: 1, kind: output, shape index: {}]
  // Predicated region
  $region2: #{tile.38} parent=0 // pred_check
    _
  $region3: #{tile.38} parent=0 // pred_check_branch
    %3 = sbr.rel (0) target = $region5
  $region4: #{tile.38} parent=0 // pred_region
    _
  $region5: #{tile.38} parent=0 // pred_fallthru
    _
  %v4 = vld [vmem:[%s0] ss:$0 sm:$0xff]
  %5 = vst [vmem:[%s1] sm:$0xf] %v4

// kernel: generator_forward.9
$region0: #{generator_forward.9}
  #allocation0 [shape = 'u32[]', space=smem, size = 0x4, offset = 0x4, fixed_abs, tag = 'smem constant byte address 0x4 - core index']
  #allocation1 [shape = 'u32[144,128]{1,0:T(1,128)}', space=vmem, size = 0x12000, scoped, tag = 'internal scratch']
  #allocation2 [shape = 'f32[24,256]{1,0:T(8,128)}', space=vmem, size = 0x6000, scoped, tag = 'scratch operand']
  %s0 = inlined_call_operand.vmem [shape: bf16[24,512], index: 0, kind: input, shape index: {}]
  %s1 = inlined_call_operand.vmem [shape: bf16[512,256], index: 1, kind: input, shape index: {}]
  %s2 = inlined_call_operand.vmem [shape: f32[24,4], index: 2, kind: input, shape index: {}]
  %s3 = inlined_call_operand.vmem [shape: f32[4,256], index: 3, kind: input, shape index: {}]
  %s4 = inlined_call_operand.vmem [shape: f32[24,256], index: 4, kind: output, shape index: {0}]
  %s5 = inlined_call_operand.vmem [shape: f32[8,256], index: 5, kind: output, shape index: {1}]
  %s6 = inlined_call_operand.vmem [shape: f32[8,256], index: 6, kind: output, shape index: {2}]
  %7 = xla_tuple %s4, %s5, %s6
  %s8 = sld [smem:[#allocation0]]
  $region50: #{generator_forward.9} parent=0
    _
  %s10 = ssub.s32 1, %s8
  %s11 = scalar_select 0, %s10, %s8
  // Predicated region
  $region2: #{generator_forward.9} parent=0 // pred_check
    _
  $region3: #{generator_forward.9} parent=0 // pred_check_branch
    %13 = sbr.rel (0) target = $region5
  $region4: #{generator_forward.9} parent=0 // pred_region
    _
  $region5: #{generator_forward.9} parent=0 // pred_fallthru
    _
  // Predicated region
  $region6: #{generator_forward.9} parent=0 // pred_check
    _
  $region7: #{generator_forward.9} parent=0 // pred_check_branch
    %15 = sbr.rel (0) target = $region9
  $region8: #{generator_forward.9} parent=0 // pred_region
    _
  $region9: #{generator_forward.9} parent=0 // pred_fallthru
    _
  // Predicated region
  $region10: #{generator_forward.9} parent=0 // pred_check
    _
  $region11: #{generator_forward.9} parent=0 // pred_check_branch
    %17 = sbr.rel (0) target = $region13
  $region12: #{generator_forward.9} parent=0 // pred_region
    _
  $region13: #{generator_forward.9} parent=0 // pred_fallthru
    _
  // Predicated region
  $region14: #{generator_forward.9} parent=0 // pred_check
    _
  $region15: #{generator_forward.9} parent=0 // pred_check_branch
    %19 = sbr.rel (0) target = $region17
  $region16: #{generator_forward.9} parent=0 // pred_region
    _
  $region17: #{generator_forward.9} parent=0 // pred_fallthru
    _
  %p20 = scmp.eq.s32.totalorder 0, 0
  // Predicated region
  $region18: #{generator_forward.9} parent=0 // pred_check
    %p21 = pneg %p20
  $region19: #{generator_forward.9} parent=0 // pred_check_branch
    %23 = sbr.rel (%p21) target = $region21
  $region20: #{generator_forward.9} parent=0 // pred_region
    %24 = vst [vmem:[#allocation2] sm:$0xff] 0.0
    %25 = vst [vmem:[#allocation2 + $0x8] sm:$0xff] 0.0
    %26 = vst [vmem:[#allocation2 + $0x10] sm:$0xff] 0.0
    %27 = vst [vmem:[#allocation2 + $0x18] sm:$0xff] 0.0
    %28 = vst [vmem:[#allocation2 + $0x20] sm:$0xff] 0.0
    %29 = vst [vmem:[#allocation2 + $0x28] sm:$0xff] 0.0
  $region21: #{generator_forward.9} parent=0 // pred_fallthru
    _
  %v30 = vld [vmem:[#allocation2] sm:$0xff]
  %v31 = vld [vmem:[#allocation2 + $0x8] sm:$0xff]
  %v32 = vld [vmem:[#allocation2 + $0x10] sm:$0xff]
  %v33 = vld [vmem:[#allocation2 + $0x18] sm:$0xff]
  %v34 = vld [vmem:[#allocation2 + $0x20] sm:$0xff]
  %v35 = vld [vmem:[#allocation2 + $0x28] sm:$0xff]
  %v36 = vld [vmem:[%s0] sm:$0xff]
  %v37 = vld [vmem:[%s0 + $0x8] sm:$0xff]
  %v38 = vld [vmem:[%s0 + $0x10] sm:$0xff]
  %v39 = vld [vmem:[%s0 + $0x18] sm:$0xff]
  %v40 = vld [vmem:[%s0 + $0x20] sm:$0xff]
  %v41 = vld [vmem:[%s0 + $0x28] sm:$0xff]
  %v42 = vld [vmem:[%s1] sm:$0xff]
  %v43 = vld [vmem:[%s1 + $0x8] sm:$0xff]
  %v44 = vld [vmem:[%s1 + $0x10] sm:$0xff]
  %v45 = vld [vmem:[%s1 + $0x18] sm:$0xff]
  %v46 = vld [vmem:[%s1 + $0x20] sm:$0xff]
  %v47 = vld [vmem:[%s1 + $0x28] sm:$0xff]
  %v48 = vld [vmem:[%s1 + $0x30] sm:$0xff]
  %v49 = vld [vmem:[%s1 + $0x38] sm:$0xff]
  %v50 = vld [vmem:[%s1 + $0x40] sm:$0xff]
  %v51 = vld [vmem:[%s1 + $0x48] sm:$0xff]
  %v52 = vld [vmem:[%s1 + $0x50] sm:$0xff]
  %v53 = vld [vmem:[%s1 + $0x58] sm:$0xff]
  %v54 = vld [vmem:[%s1 + $0x60] sm:$0xff]
  %v55 = vld [vmem:[%s1 + $0x68] sm:$0xff]
  %v56 = vld [vmem:[%s1 + $0x70] sm:$0xff]
  %v57 = vld [vmem:[%s1 + $0x78] sm:$0xff]
  %v58 = vld [vmem:[%s1 + $0x80] sm:$0xff]
  %v59 = vld [vmem:[%s1 + $0x88] sm:$0xff]
  %v60 = vld [vmem:[%s1 + $0x90] sm:$0xff]
  %v61 = vld [vmem:[%s1 + $0x98] sm:$0xff]
  %v62 = vld [vmem:[%s1 + $0xa0] sm:$0xff]
  %v63 = vld [vmem:[%s1 + $0xa8] sm:$0xff]
  %v64 = vld [vmem:[%s1 + $0xb0] sm:$0xff]
  %v65 = vld [vmem:[%s1 + $0xb8] sm:$0xff]
  %v66 = vld [vmem:[%s1 + $0xc0] sm:$0xff]
  %v67 = vld [vmem:[%s1 + $0xc8] sm:$0xff]
  %v68 = vld [vmem:[%s1 + $0xd0] sm:$0xff]
  %v69 = vld [vmem:[%s1 + $0xd8] sm:$0xff]
  %v70 = vld [vmem:[%s1 + $0xe0] sm:$0xff]
  %v71 = vld [vmem:[%s1 + $0xe8] sm:$0xff]
  %v72 = vld [vmem:[%s1 + $0xf0] sm:$0xff]
  %v73 = vld [vmem:[%s1 + $0xf8] sm:$0xff]
  %v74 = vld [vmem:[%s1 + $0x100] sm:$0xff]
  %v75 = vld [vmem:[%s1 + $0x108] sm:$0xff]
  %v76 = vld [vmem:[%s1 + $0x110] sm:$0xff]
  %v77 = vld [vmem:[%s1 + $0x118] sm:$0xff]
  %v78 = vld [vmem:[%s1 + $0x120] sm:$0xff]
  %v79 = vld [vmem:[%s1 + $0x128] sm:$0xff]
  %v80 = vld [vmem:[%s1 + $0x130] sm:$0xff]
  %v81 = vld [vmem:[%s1 + $0x138] sm:$0xff]
  %v82 = vld [vmem:[%s1 + $0x140] sm:$0xff]
  %v83 = vld [vmem:[%s1 + $0x148] sm:$0xff]
  %v84 = vld [vmem:[%s1 + $0x150] sm:$0xff]
  %v85 = vld [vmem:[%s1 + $0x158] sm:$0xff]
  %v86 = vld [vmem:[%s1 + $0x160] sm:$0xff]
  %v87 = vld [vmem:[%s1 + $0x168] sm:$0xff]
  %v88 = vld [vmem:[%s1 + $0x170] sm:$0xff]
  %v89 = vld [vmem:[%s1 + $0x178] sm:$0xff]
  %v90 = vld [vmem:[%s1 + $0x180] sm:$0xff]
  %v91 = vld [vmem:[%s1 + $0x188] sm:$0xff]
  %v92 = vld [vmem:[%s1 + $0x190] sm:$0xff]
  %v93 = vld [vmem:[%s1 + $0x198] sm:$0xff]
  %v94 = vld [vmem:[%s1 + $0x1a0] sm:$0xff]
  %v95 = vld [vmem:[%s1 + $0x1a8] sm:$0xff]
  %v96 = vld [vmem:[%s1 + $0x1b0] sm:$0xff]
  %v97 = vld [vmem:[%s1 + $0x1b8] sm:$0xff]
  %v98 = vld [vmem:[%s1 + $0x1c0] sm:$0xff]
  %v99 = vld [vmem:[%s1 + $0x1c8] sm:$0xff]
  %v100 = vld [vmem:[%s1 + $0x1d0] sm:$0xff]
  %v101 = vld [vmem:[%s1 + $0x1d8] sm:$0xff]
  %v102 = vld [vmem:[%s1 + $0x1e0] sm:$0xff]
  %v103 = vld [vmem:[%s1 + $0x1e8] sm:$0xff]
  %v104 = vld [vmem:[%s1 + $0x1f0] sm:$0xff]
  %v105 = vld [vmem:[%s1 + $0x1f8] sm:$0xff]
  %v112 = vunpack.c.l.b16 %v36
  %v113 = vunpack.c.h.b16 %v36
  %v114 = vunpack.c.l.b16 %v37
  %v115 = vunpack.c.h.b16 %v37
  %v116 = vunpack.c.l.b16 %v38
  %v117 = vunpack.c.h.b16 %v38
  %v118 = vunpack.c.l.b16 %v39
  %v119 = vunpack.c.h.b16 %v39
  %v120 = vunpack.c.l.b16 %v40
  %v121 = vunpack.c.h.b16 %v40
  %v122 = vunpack.c.l.b16 %v41
  %v123 = vunpack.c.h.b16 %v41
  %v124 = vpack.c.b16 %v116, %v112
  %v125 = vpack.c.b16 %v117, %v113
  %v126 = vpack.c.b16 %v118, %v114
  %v127 = vpack.c.b16 %v119, %v115
  %v128 = vpack.c.b16 %v120, %v120
  %v129 = vpack.c.b16 %v121, %v121
  %v130 = vpack.c.b16 %v122, %v122
  %v131 = vpack.c.b16 %v123, %v123
  %v204 = vunpack.c.l.b16 %v42
  %v205 = vunpack.c.h.b16 %v42
  %v206 = vunpack.c.l.b16 %v43
  %v207 = vunpack.c.h.b16 %v43
  %v208 = vunpack.c.l.b16 %v44
  %v209 = vunpack.c.h.b16 %v44
  %v210 = vunpack.c.l.b16 %v45
  %v211 = vunpack.c.h.b16 %v45
  %v212 = vunpack.c.l.b16 %v46
  %v213 = vunpack.c.h.b16 %v46
  %v214 = vunpack.c.l.b16 %v47
  %v215 = vunpack.c.h.b16 %v47
  %v216 = vunpack.c.l.b16 %v48
  %v217 = vunpack.c.h.b16 %v48
  %v218 = vunpack.c.l.b16 %v49
  %v219 = vunpack.c.h.b16 %v49
  %v220 = vunpack.c.l.b16 %v50
  %v221 = vunpack.c.h.b16 %v50
  %v222 = vunpack.c.l.b16 %v51
  %v223 = vunpack.c.h.b16 %v51
  %v224 = vunpack.c.l.b16 %v52
  %v225 = vunpack.c.h.b16 %v52
  %v226 = vunpack.c.l.b16 %v53
  %v227 = vunpack.c.h.b16 %v53
  %v228 = vunpack.c.l.b16 %v54
  %v229 = vunpack.c.h.b16 %v54
  %v230 = vunpack.c.l.b16 %v55
  %v231 = vunpack.c.h.b16 %v55
  %v232 = vunpack.c.l.b16 %v56
  %v233 = vunpack.c.h.b16 %v56
  %v234 = vunpack.c.l.b16 %v57
  %v235 = vunpack.c.h.b16 %v57
  %v236 = vunpack.c.l.b16 %v58
  %v237 = vunpack.c.h.b16 %v58
  %v238 = vunpack.c.l.b16 %v59
  %v239 = vunpack.c.h.b16 %v59
  %v240 = vunpack.c.l.b16 %v60
  %v241 = vunpack.c.h.b16 %v60
  %v242 = vunpack.c.l.b16 %v61
  %v243 = vunpack.c.h.b16 %v61
  %v244 = vunpack.c.l.b16 %v62
  %v245 = vunpack.c.h.b16 %v62
  %v246 = vunpack.c.l.b16 %v63
  %v247 = vunpack.c.h.b16 %v63
  %v248 = vunpack.c.l.b16 %v64
  %v249 = vunpack.c.h.b16 %v64
  %v250 = vunpack.c.l.b16 %v65
  %v251 = vunpack.c.h.b16 %v65
  %v252 = vunpack.c.l.b16 %v66
  %v253 = vunpack.c.h.b16 %v66
  %v254 = vunpack.c.l.b16 %v67
  %v255 = vunpack.c.h.b16 %v67
  %v256 = vunpack.c.l.b16 %v68
  %v257 = vunpack.c.h.b16 %v68
  %v258 = vunpack.c.l.b16 %v69
  %v259 = vunpack.c.h.b16 %v69
  %v260 = vunpack.c.l.b16 %v70
  %v261 = vunpack.c.h.b16 %v70
  %v262 = vunpack.c.l.b16 %v71
  %v263 = vunpack.c.h.b16 %v71
  %v264 = vunpack.c.l.b16 %v72
  %v265 = vunpack.c.h.b16 %v72
  %v266 = vunpack.c.l.b16 %v73
  %v267 = vunpack.c.h.b16 %v73
  %v268 = vunpack.c.l.b16 %v74
  %v269 = vunpack.c.h.b16 %v74
  %v270 = vunpack.c.l.b16 %v75
  %v271 = vunpack.c.h.b16 %v75
  %v272 = vunpack.c.l.b16 %v76
  %v273 = vunpack.c.h.b16 %v76
  %v274 = vunpack.c.l.b16 %v77
  %v275 = vunpack.c.h.b16 %v77
  %v276 = vunpack.c.l.b16 %v78
  %v277 = vunpack.c.h.b16 %v78
  %v278 = vunpack.c.l.b16 %v79
  %v279 = vunpack.c.h.b16 %v79
  %v280 = vunpack.c.l.b16 %v80
  %v281 = vunpack.c.h.b16 %v80
  %v282 = vunpack.c.l.b16 %v81
  %v283 = vunpack.c.h.b16 %v81
  %v284 = vunpack.c.l.b16 %v82
  %v285 = vunpack.c.h.b16 %v82
  %v286 = vunpack.c.l.b16 %v83
  %v287 = vunpack.c.h.b16 %v83
  %v288 = vunpack.c.l.b16 %v84
  %v289 = vunpack.c.h.b16 %v84
  %v290 = vunpack.c.l.b16 %v85
  %v291 = vunpack.c.h.b16 %v85
  %v292 = vunpack.c.l.b16 %v86
  %v293 = vunpack.c.h.b16 %v86
  %v294 = vunpack.c.l.b16 %v87
  %v295 = vunpack.c.h.b16 %v87
  %v296 = vunpack.c.l.b16 %v88
  %v297 = vunpack.c.h.b16 %v88
  %v298 = vunpack.c.l.b16 %v89
  %v299 = vunpack.c.h.b16 %v89
  %v300 = vunpack.c.l.b16 %v90
  %v301 = vunpack.c.h.b16 %v90
  %v302 = vunpack.c.l.b16 %v91
  %v303 = vunpack.c.h.b16 %v91
  %v304 = vunpack.c.l.b16 %v92
  %v305 = vunpack.c.h.b16 %v92
  %v306 = vunpack.c.l.b16 %v93
  %v307 = vunpack.c.h.b16 %v93
  %v308 = vunpack.c.l.b16 %v94
  %v309 = vunpack.c.h.b16 %v94
  %v310 = vunpack.c.l.b16 %v95
  %v311 = vunpack.c.h.b16 %v95
  %v312 = vunpack.c.l.b16 %v96
  %v313 = vunpack.c.h.b16 %v96
  %v314 = vunpack.c.l.b16 %v97
  %v315 = vunpack.c.h.b16 %v97
  %v316 = vunpack.c.l.b16 %v98
  %v317 = vunpack.c.h.b16 %v98
  %v318 = vunpack.c.l.b16 %v99
  %v319 = vunpack.c.h.b16 %v99
  %v320 = vunpack.c.l.b16 %v100
  %v321 = vunpack.c.h.b16 %v100
  %v322 = vunpack.c.l.b16 %v101
  %v323 = vunpack.c.h.b16 %v101
  %v324 = vunpack.c.l.b16 %v102
  %v325 = vunpack.c.h.b16 %v102
  %v326 = vunpack.c.l.b16 %v103
  %v327 = vunpack.c.h.b16 %v103
  %v328 = vunpack.c.l.b16 %v104
  %v329 = vunpack.c.h.b16 %v104
  %v330 = vunpack.c.l.b16 %v105
  %v331 = vunpack.c.h.b16 %v105
  %v332 = vpack.c.b16 %v206, %v204
  %v333 = vpack.c.b16 %v207, %v205
  %v334 = vpack.c.b16 %v210, %v208
  %v335 = vpack.c.b16 %v211, %v209
  %v336 = vpack.c.b16 %v214, %v212
  %v337 = vpack.c.b16 %v215, %v213
  %v338 = vpack.c.b16 %v218, %v216
  %v339 = vpack.c.b16 %v219, %v217
  %v340 = vpack.c.b16 %v222, %v220
  %v341 = vpack.c.b16 %v223, %v221
  %v342 = vpack.c.b16 %v226, %v224
  %v343 = vpack.c.b16 %v227, %v225
  %v344 = vpack.c.b16 %v230, %v228
  %v345 = vpack.c.b16 %v231, %v229
  %v346 = vpack.c.b16 %v234, %v232
  %v347 = vpack.c.b16 %v235, %v233
  %v348 = vpack.c.b16 %v238, %v236
  %v349 = vpack.c.b16 %v239, %v237
  %v350 = vpack.c.b16 %v242, %v240
  %v351 = vpack.c.b16 %v243, %v241
  %v352 = vpack.c.b16 %v246, %v244
  %v353 = vpack.c.b16 %v247, %v245
  %v354 = vpack.c.b16 %v250, %v248
  %v355 = vpack.c.b16 %v251, %v249
  %v356 = vpack.c.b16 %v254, %v252
  %v357 = vpack.c.b16 %v255, %v253
  %v358 = vpack.c.b16 %v258, %v256
  %v359 = vpack.c.b16 %v259, %v257
  %v360 = vpack.c.b16 %v262, %v260
  %v361 = vpack.c.b16 %v263, %v261
  %v362 = vpack.c.b16 %v266, %v264
  %v363 = vpack.c.b16 %v267, %v265
  %v364 = vpack.c.b16 %v270, %v268
  %v365 = vpack.c.b16 %v271, %v269
  %v366 = vpack.c.b16 %v274, %v272
  %v367 = vpack.c.b16 %v275, %v273
  %v368 = vpack.c.b16 %v278, %v276
  %v369 = vpack.c.b16 %v279, %v277
  %v370 = vpack.c.b16 %v282, %v280
  %v371 = vpack.c.b16 %v283, %v281
  %v372 = vpack.c.b16 %v286, %v284
  %v373 = vpack.c.b16 %v287, %v285
  %v374 = vpack.c.b16 %v290, %v288
  %v375 = vpack.c.b16 %v291, %v289
  %v376 = vpack.c.b16 %v294, %v292
  %v377 = vpack.c.b16 %v295, %v293
  %v378 = vpack.c.b16 %v298, %v296
  %v379 = vpack.c.b16 %v299, %v297
  %v380 = vpack.c.b16 %v302, %v300
  %v381 = vpack.c.b16 %v303, %v301
  %v382 = vpack.c.b16 %v306, %v304
  %v383 = vpack.c.b16 %v307, %v305
  %v384 = vpack.c.b16 %v310, %v308
  %v385 = vpack.c.b16 %v311, %v309
  %v386 = vpack.c.b16 %v314, %v312
  %v387 = vpack.c.b16 %v315, %v313
  %v388 = vpack.c.b16 %v318, %v316
  %v389 = vpack.c.b16 %v319, %v317
  %v390 = vpack.c.b16 %v322, %v320
  %v391 = vpack.c.b16 %v323, %v321
  %v392 = vpack.c.b16 %v326, %v324
  %v393 = vpack.c.b16 %v327, %v325
  %v394 = vpack.c.b16 %v330, %v328
  %v395 = vpack.c.b16 %v331, %v329
  %460 = vmatprep.subr.bf16.mxu0 %v333
  %461 = vmatpush1.bf16.msra.mxu0 %v332
  %462 = vmatprep.subr.bf16.mxu0 %v335
  %463 = vmatpush1.bf16.msra.mxu0 %v334
  %464 = vmatprep.subr.bf16.mxu0 %v337
  %465 = vmatpush1.bf16.msra.mxu0 %v336
  %466 = vmatprep.subr.bf16.mxu0 %v339
  %467 = vmatpush1.bf16.msra.mxu0 %v338
  %468 = vmatprep.subr.bf16.mxu0 %v341
  %469 = vmatpush1.bf16.msra.mxu0 %v340
  %470 = vmatprep.subr.bf16.mxu0 %v343
  %471 = vmatpush1.bf16.msra.mxu0 %v342
  %472 = vmatprep.subr.bf16.mxu0 %v345
  %473 = vmatpush1.bf16.msra.mxu0 %v344
  %474 = vmatprep.subr.bf16.mxu0 %v347
  %475 = vmatpush1.bf16.msra.mxu0 %v346
  %476 = vmatprep.subr.bf16.mxu0 %v349
  %477 = vmatpush1.bf16.msra.mxu0 %v348
  %478 = vmatprep.subr.bf16.mxu0 %v351
  %479 = vmatpush1.bf16.msra.mxu0 %v350
  %480 = vmatprep.subr.bf16.mxu0 %v353
  %481 = vmatpush1.bf16.msra.mxu0 %v352
  %482 = vmatprep.subr.bf16.mxu0 %v355
  %483 = vmatpush1.bf16.msra.mxu0 %v354
  %484 = vmatprep.subr.bf16.mxu0 %v357
  %485 = vmatpush1.bf16.msra.mxu0 %v356
  %486 = vmatprep.subr.bf16.mxu0 %v359
  %487 = vmatpush1.bf16.msra.mxu0 %v358
  %488 = vmatprep.subr.bf16.mxu0 %v361
  %489 = vmatpush1.bf16.msra.mxu0 %v360
  %490 = vmatprep.subr.bf16.mxu0 %v363
  %491 = vmatpush1.bf16.msra.mxu0 %v362
  %492 = vmatprep.mubr.bf16.mxu0 %v125
  %493 = vmatmul.mubr.bf16.gmra.mrb[0].mxu0 %v124
  %v494 = vpop.f32.mrb[0].mxu0
  %v495 = vadd.f32 0.0, %v494
  %v496 = vpop.f32.mrb[0].mxu0
  %v497 = vadd.f32 0.0, %v496
  %v498 = vpop.f32.mrb[0].mxu0
  %v499 = vadd.f32 0.0, %v498
  %v500 = vpop.f32.mrb[0].mxu0
  %v501 = vadd.f32 0.0, %v500
  %502 = vmatprep.mubr.bf16.mxu0 %v129
  %503 = vmatmul.mubr.bf16.gmra.mrb[0].mxu0 %v128
  %v504 = vpop.f32.mrb[0].mxu0
  %v505 = vadd.f32 0.0, %v504
  %v506 = vpop.f32.mrb[0].mxu0
  %v507 = vadd.f32 0.0, %v506
  %v508 = vpop.f32.mrb[0].mxu0
  %v509 = vpop.f32.mrb[0].mxu0
  %510 = vdwg.mxu0
  %511 = vmatprep.subr.bf16.mxu0 %v365
  %512 = vmatpush1.bf16.msra.mxu0 %v364
  %513 = vmatprep.subr.bf16.mxu0 %v367
  %514 = vmatpush1.bf16.msra.mxu0 %v366
  %515 = vmatprep.subr.bf16.mxu0 %v369
  %516 = vmatpush1.bf16.msra.mxu0 %v368
  %517 = vmatprep.subr.bf16.mxu0 %v371
  %518 = vmatpush1.bf16.msra.mxu0 %v370
  %519 = vmatprep.subr.bf16.mxu0 %v373
  %520 = vmatpush1.bf16.msra.mxu0 %v372
  %521 = vmatprep.subr.bf16.mxu0 %v375
  %522 = vmatpush1.bf16.msra.mxu0 %v374
  %523 = vmatprep.subr.bf16.mxu0 %v377
  %524 = vmatpush1.bf16.msra.mxu0 %v376
  %525 = vmatprep.subr.bf16.mxu0 %v379
  %526 = vmatpush1.bf16.msra.mxu0 %v378
  %527 = vmatprep.subr.bf16.mxu0 %v381
  %528 = vmatpush1.bf16.msra.mxu0 %v380
  %529 = vmatprep.subr.bf16.mxu0 %v383
  %530 = vmatpush1.bf16.msra.mxu0 %v382
  %531 = vmatprep.subr.bf16.mxu0 %v385
  %532 = vmatpush1.bf16.msra.mxu0 %v384
  %533 = vmatprep.subr.bf16.mxu0 %v387
  %534 = vmatpush1.bf16.msra.mxu0 %v386
  %535 = vmatprep.subr.bf16.mxu0 %v389
  %536 = vmatpush1.bf16.msra.mxu0 %v388
  %537 = vmatprep.subr.bf16.mxu0 %v391
  %538 = vmatpush1.bf16.msra.mxu0 %v390
  %539 = vmatprep.subr.bf16.mxu0 %v393
  %540 = vmatpush1.bf16.msra.mxu0 %v392
  %541 = vmatprep.subr.bf16.mxu0 %v395
  %542 = vmatpush1.bf16.msra.mxu0 %v394
  %543 = vmatprep.mubr.bf16.mxu0 %v127
  %544 = vmatmul.mubr.bf16.gmra.mrb[0].mxu0 %v126
  %v545 = vpop.f32.mrb[0].mxu0
  %v546 = vadd.f32 %v495, %v545
  %v547 = vpop.f32.mrb[0].mxu0
  %v548 = vadd.f32 %v497, %v547
  %v549 = vpop.f32.mrb[0].mxu0
  %v550 = vadd.f32 %v499, %v549
  %v551 = vpop.f32.mrb[0].mxu0
  %v552 = vadd.f32 %v501, %v551
  %553 = vmatprep.mubr.bf16.mxu0 %v131
  %554 = vmatmul.mubr.bf16.gmra.mrb[0].mxu0 %v130
  %v555 = vpop.f32.mrb[0].mxu0
  %v556 = vadd.f32 %v505, %v555
  %v557 = vpop.f32.mrb[0].mxu0
  %v558 = vadd.f32 %v507, %v557
  %v559 = vpop.f32.mrb[0].mxu0
  %v560 = vpop.f32.mrb[0].mxu0
  %561 = vdwg.mxu0
  %v562 = vadd.f32 %v30, %v546
  %v563 = vadd.f32 %v31, %v548
  %v564 = vadd.f32 %v32, %v550
  %v565 = vadd.f32 %v33, %v552
  %v566 = vadd.f32 %v34, %v556
  %v567 = vadd.f32 %v35, %v558
  %568 = vst [vmem:[#allocation2] sm:$0xff] %v562
  %569 = vst [vmem:[#allocation2 + $0x8] sm:$0xff] %v563
  %570 = vst [vmem:[#allocation2 + $0x10] sm:$0xff] %v564
  %571 = vst [vmem:[#allocation2 + $0x18] sm:$0xff] %v565
  %572 = vst [vmem:[#allocation2 + $0x20] sm:$0xff] %v566
  %573 = vst [vmem:[#allocation2 + $0x28] sm:$0xff] %v567
  // Predicated region
  $region22: #{generator_forward.9} parent=0 // pred_check
    %p574 = pneg %p20
  $region23: #{generator_forward.9} parent=0 // pred_check_branch
    %576 = sbr.rel (%p574) target = $region25
  $region24: #{generator_forward.9} parent=0 // pred_region
    %v577 = vld [vmem:[#allocation2] sm:$0xff]
    %v578 = vld [vmem:[#allocation2 + $0x8] sm:$0xff]
    %v579 = vld [vmem:[#allocation2 + $0x10] sm:$0xff]
    %v580 = vld [vmem:[#allocation2 + $0x18] sm:$0xff]
    %v581 = vld [vmem:[#allocation2 + $0x20] sm:$0xff]
    %v582 = vld [vmem:[#allocation2 + $0x28] sm:$0xff]
    %583 = vst [vmem:[%s4] sm:$0xff] %v577
    %584 = vst [vmem:[%s4 + $0x8] sm:$0xff] %v578
    %585 = vst [vmem:[%s4 + $0x10] sm:$0xff] %v579
    %586 = vst [vmem:[%s4 + $0x18] sm:$0xff] %v580
    %587 = vst [vmem:[%s4 + $0x20] sm:$0xff] %v581
    %588 = vst [vmem:[%s4 + $0x28] sm:$0xff] %v582
    %v589 = vld [vmem:[%s2] sm:$0xff]
    %v590 = vld [vmem:[%s2 + $0x8] sm:$0xff]
    %v591 = vld [vmem:[%s2 + $0x10] sm:$0xff]
    %v592 = vld [vmem:[%s3] sm:$0xff]
    %594 = vset.pattern.permute.xlu0 0
    %595 = vperm.xlu0 %594, %v589
    %v596 = vpop.permute.xlu0 %595
    %599 = vset.pattern.permute.xlu0 0
    %600 = vperm.xlu0 %599, %v590
    %v601 = vpop.permute.xlu0 %600
    %604 = vset.pattern.permute.xlu0 0
    %605 = vperm.xlu0 %604, %v591
    %v606 = vpop.permute.xlu0 %605
    %v609 = vlaneseq
    %v610 = vshrl.u32 %v609, 7
    %v611 = vsub.s32 0, %v610
    %v612 = vrot.slane %v592, %v611
    %v613 = vlaneseq
    %v614 = vshrl.u32 %v613, 7
    %v615 = vsub.s32 4, %v614
    %v616 = vrot.slane %v592, %v615
    %v619 = vlaneseq
    %v620 = vshrl.u32 %v619, 7
    %v621 = vsub.s32 0, %v620
    %v622 = vrot.slane %v612, %v621
    %v623 = vlaneseq
    %v624 = vshrl.u32 %v623, 7
    %v625 = vsub.s32 0, %v624
    %v626 = vrot.slane %v616, %v625
    %v627 = vmul.f32 %v596, %v622
    %v628 = vmul.f32 %v596, %v626
    %v629 = vmul.f32 %v601, %v622
    %v630 = vmul.f32 %v601, %v626
    %v631 = vmul.f32 %v606, %v622
    %v632 = vmul.f32 %v606, %v626
    %633 = vset.pattern.permute.xlu0 1
    %634 = vperm.xlu0 %633, %v589
    %v635 = vpop.permute.xlu0 %634
    %637 = vset.pattern.permute.xlu0 1
    %638 = vperm.xlu0 %637, %v590
    %v639 = vpop.permute.xlu0 %638
    %641 = vset.pattern.permute.xlu0 1
    %642 = vperm.xlu0 %641, %v591
    %v643 = vpop.permute.xlu0 %642
    %v645 = vlaneseq
    %v646 = vshrl.u32 %v645, 7
    %v647 = vsub.s32 1, %v646
    %v648 = vrot.slane %v592, %v647
    %v649 = vlaneseq
    %v650 = vshrl.u32 %v649, 7
    %v651 = vsub.s32 5, %v650
    %v652 = vrot.slane %v592, %v651
    %v655 = vlaneseq
    %v656 = vshrl.u32 %v655, 7
    %v657 = vsub.s32 1, %v656
    %v658 = vrot.slane %v648, %v657
    %v659 = vlaneseq
    %v660 = vshrl.u32 %v659, 7
    %v661 = vsub.s32 1, %v660
    %v662 = vrot.slane %v652, %v661
    %v663 = vmul.f32 %v635, %v658
    %v664 = vmul.f32 %v635, %v662
    %v665 = vmul.f32 %v639, %v658
    %v666 = vmul.f32 %v639, %v662
    %v667 = vmul.f32 %v643, %v658
    %v668 = vmul.f32 %v643, %v662
    %v669 = vadd.f32 %v627, %v663
    %v670 = vadd.f32 %v628, %v664
    %v671 = vadd.f32 %v629, %v665
    %v672 = vadd.f32 %v630, %v666
    %v673 = vadd.f32 %v631, %v667
    %v674 = vadd.f32 %v632, %v668
    %675 = vset.pattern.permute.xlu0 2
    %676 = vperm.xlu0 %675, %v589
    %v677 = vpop.permute.xlu0 %676
    %679 = vset.pattern.permute.xlu0 2
    %680 = vperm.xlu0 %679, %v590
    %v681 = vpop.permute.xlu0 %680
    %683 = vset.pattern.permute.xlu0 2
    %684 = vperm.xlu0 %683, %v591
    %v685 = vpop.permute.xlu0 %684
    %v687 = vlaneseq
    %v688 = vshrl.u32 %v687, 7
    %v689 = vsub.s32 2, %v688
    %v690 = vrot.slane %v592, %v689
    %v691 = vlaneseq
    %v692 = vshrl.u32 %v691, 7
    %v693 = vsub.s32 6, %v692
    %v694 = vrot.slane %v592, %v693
    %v697 = vlaneseq
    %v698 = vshrl.u32 %v697, 7
    %v699 = vsub.s32 2, %v698
    %v700 = vrot.slane %v690, %v699
    %v701 = vlaneseq
    %v702 = vshrl.u32 %v701, 7
    %v703 = vsub.s32 2, %v702
    %v704 = vrot.slane %v694, %v703
    %v705 = vmul.f32 %v677, %v700
    %v706 = vmul.f32 %v677, %v704
    %v707 = vmul.f32 %v681, %v700
    %v708 = vmul.f32 %v681, %v704
    %v709 = vmul.f32 %v685, %v700
    %v710 = vmul.f32 %v685, %v704
    %v711 = vadd.f32 %v669, %v705
    %v712 = vadd.f32 %v670, %v706
    %v713 = vadd.f32 %v671, %v707
    %v714 = vadd.f32 %v672, %v708
    %v715 = vadd.f32 %v673, %v709
    %v716 = vadd.f32 %v674, %v710
    %717 = vset.pattern.permute.xlu0 3
    %718 = vperm.xlu0 %717, %v589
    %v719 = vpop.permute.xlu0 %718
    %721 = vset.pattern.permute.xlu0 3
    %722 = vperm.xlu0 %721, %v590
    %v723 = vpop.permute.xlu0 %722
    %725 = vset.pattern.permute.xlu0 3
    %726 = vperm.xlu0 %725, %v591
    %v727 = vpop.permute.xlu0 %726
    %v729 = vlaneseq
    %v730 = vshrl.u32 %v729, 7
    %v731 = vsub.s32 3, %v730
    %v732 = vrot.slane %v592, %v731
    %v733 = vlaneseq
    %v734 = vshrl.u32 %v733, 7
    %v735 = vsub.s32 7, %v734
    %v736 = vrot.slane %v592, %v735
    %v739 = vlaneseq
    %v740 = vshrl.u32 %v739, 7
    %v741 = vsub.s32 3, %v740
    %v742 = vrot.slane %v732, %v741
    %v743 = vlaneseq
    %v744 = vshrl.u32 %v743, 7
    %v745 = vsub.s32 3, %v744
    %v746 = vrot.slane %v736, %v745
    %v747 = vmul.f32 %v719, %v742
    %v748 = vmul.f32 %v719, %v746
    %v749 = vmul.f32 %v723, %v742
    %v750 = vmul.f32 %v723, %v746
    %v751 = vmul.f32 %v727, %v742
    %v752 = vmul.f32 %v727, %v746
    %v753 = vadd.f32 %v711, %v747
    %v754 = vadd.f32 %v712, %v748
    %v755 = vadd.f32 %v713, %v749
    %v756 = vadd.f32 %v714, %v750
    %v757 = vadd.f32 %v715, %v751
    %v758 = vadd.f32 %v716, %v752
    %v759 = vmul.f32 %v577, %v753
    %v760 = vmul.f32 %v578, %v754
    %v761 = vmul.f32 %v579, %v755
    %v762 = vmul.f32 %v580, %v756
    %v763 = vmul.f32 %v581, %v757
    %v764 = vmul.f32 %v582, %v758
    %765 = vst [vmem:[%s5] sm:$0xff] 0.0
    %766 = vst [vmem:[%s5 + $0x8] sm:$0xff] 0.0
    %767 = vst [vmem:[%s6] sm:$0xff] 0.0
    %768 = vst [vmem:[%s6 + $0x8] sm:$0xff] 0.0
    %v769 = vadd.f32 %v759, %v761
    %v770 = vadd.f32 %v769, %v763
    %v771 = vrot.slane %v770, 4
    %v772 = vadd.f32 %v770, %v771
    %v773 = vrot.slane %v772, 2
    %v774 = vadd.f32 %v772, %v773
    %v775 = vrot.slane %v774, 1
    %v776 = vadd.f32 %v774, %v775
    %v777 = vadd.f32 %v760, %v762
    %v778 = vadd.f32 %v777, %v764
    %v779 = vrot.slane %v778, 4
    %v780 = vadd.f32 %v778, %v779
    %v781 = vrot.slane %v780, 2
    %v782 = vadd.f32 %v780, %v781
    %v783 = vrot.slane %v782, 1
    %v784 = vadd.f32 %v782, %v783
    %v787 = vcombine.low %v776, %v784
    %v789 = vunpack.c.l.s4 1966171168
    %v790 = vunpack.c.0.s8 %v789
    %v791 = vlaneseq
    %v792 = vshrl.u32 %v791, 7
    %v793 = vsub.s32 %v790, %v792
    %v794 = vrot.slane %v787, %v793
    %v796 = vunpack.c.l.s4 1966171168
    %v797 = vunpack.c.0.s8 %v796
    %v798 = vlaneseq
    %v799 = vshrl.u32 %v798, 7
    %v800 = vsub.s32 %v797, %v799
    %v801 = vrot.slane %v794, %v800
    %v803 = vlaneseq
    %vm804 = vcmp.ge.s32.totalorder %v803, 0
    %vm805 = vcmp.lt.s32.totalorder %v803, 256
    %vm806 = vmand %vm804, %vm805
    %807 = vst.msk [vmem:[%s5] ss:$8 sm:$0x3] %vm806, %v801
    %808 = vst.msk [vmem:[%s5] ss:$8 sm:$0x0] %vm806, %v801
    %v809 = vmul.f32 %v759, %v577
    %v810 = vmul.f32 %v760, %v578
    %v811 = vmul.f32 %v761, %v579
    %v812 = vmul.f32 %v762, %v580
    %v813 = vmul.f32 %v763, %v581
    %v814 = vmul.f32 %v764, %v582
    %v815 = vadd.f32 %v809, %v811
    %v816 = vadd.f32 %v815, %v813
    %v817 = vrot.slane %v816, 4
    %v818 = vadd.f32 %v816, %v817
    %v819 = vrot.slane %v818, 2
    %v820 = vadd.f32 %v818, %v819
    %v821 = vrot.slane %v820, 1
    %v822 = vadd.f32 %v820, %v821
    %v823 = vadd.f32 %v810, %v812
    %v824 = vadd.f32 %v823, %v814
    %v825 = vrot.slane %v824, 4
    %v826 = vadd.f32 %v824, %v825
    %v827 = vrot.slane %v826, 2
    %v828 = vadd.f32 %v826, %v827
    %v829 = vrot.slane %v828, 1
    %v830 = vadd.f32 %v828, %v829
    %v833 = vcombine.low %v822, %v830
    %v835 = vunpack.c.l.s4 1966171168
    %v836 = vunpack.c.0.s8 %v835
    %v837 = vlaneseq
    %v838 = vshrl.u32 %v837, 7
    %v839 = vsub.s32 %v836, %v838
    %v840 = vrot.slane %v833, %v839
    %v842 = vunpack.c.l.s4 1966171168
    %v843 = vunpack.c.0.s8 %v842
    %v844 = vlaneseq
    %v845 = vshrl.u32 %v844, 7
    %v846 = vsub.s32 %v843, %v845
    %v847 = vrot.slane %v840, %v846
    %849 = vst.msk [vmem:[%s6] ss:$8 sm:$0x3] %vm806, %v847
    %850 = vst.msk [vmem:[%s6] ss:$8 sm:$0x0] %vm806, %v847
  $region25: #{generator_forward.9} parent=0 // pred_fallthru
    _
  // Predicated region
  $region26: #{generator_forward.9} parent=0 // pred_check
    _
  $region27: #{generator_forward.9} parent=0 // pred_check_branch
    %852 = sbr.rel (0) target = $region29
  $region28: #{generator_forward.9} parent=0 // pred_region
    _
  $region29: #{generator_forward.9} parent=0 // pred_fallthru
    _
  // Predicated region
  $region30: #{generator_forward.9} parent=0 // pred_check
    _
  $region31: #{generator_forward.9} parent=0 // pred_check_branch
    %854 = sbr.rel (0) target = $region33
  $region32: #{generator_forward.9} parent=0 // pred_region
    _
  $region33: #{generator_forward.9} parent=0 // pred_fallthru
    _
  // Predicated region
  $region34: #{generator_forward.9} parent=0 // pred_check
    _
  $region35: #{generator_forward.9} parent=0 // pred_check_branch
    %856 = sbr.rel (0) target = $region37
  $region36: #{generator_forward.9} parent=0 // pred_region
    _
  $region37: #{generator_forward.9} parent=0 // pred_fallthru
    _
  // Predicated region
  $region38: #{generator_forward.9} parent=0 // pred_check
    _
  $region39: #{generator_forward.9} parent=0 // pred_check_branch
    %858 = sbr.rel (0) target = $region41
  $region40: #{generator_forward.9} parent=0 // pred_region
    _
  $region41: #{generator_forward.9} parent=0 // pred_fallthru
    _
  // Predicated region
  $region42: #{generator_forward.9} parent=0 // pred_check
    _
  $region43: #{generator_forward.9} parent=0 // pred_check_branch
    %860 = sbr.rel (0) target = $region45
  $region44: #{generator_forward.9} parent=0 // pred_region
    _
  $region45: #{generator_forward.9} parent=0 // pred_fallthru
    _
  // Predicated region
  $region46: #{generator_forward.9} parent=0 // pred_check
    _
  $region47: #{generator_forward.9} parent=0 // pred_check_branch
    %862 = sbr.rel (0) target = $region49
  $region48: #{generator_forward.9} parent=0 // pred_region
    _
  $region49: #{generator_forward.9} parent=0 // pred_fallthru
    _

// kernel: generator_forward.10
$region0: #{generator_forward.10}
  #allocation0 [shape = 'u32[]', space=smem, size = 0x4, offset = 0x4, fixed_abs, tag = 'smem constant byte address 0x4 - core index']
  #allocation1 [shape = 'u32[144,128]{1,0:T(1,128)}', space=vmem, size = 0x12000, scoped, tag = 'internal scratch']
  %s0 = inlined_call_operand.vmem [shape: f32[24,256], index: 0, kind: input, shape index: {}]
  %s1 = inlined_call_operand.vmem [shape: f32[1,256], index: 1, kind: input, shape index: {}]
  %s2 = inlined_call_operand.vmem [shape: f32[1,256], index: 2, kind: input, shape index: {}]
  %s3 = inlined_call_operand.vmem [shape: f32[24,256], index: 3, kind: output, shape index: {}]
  %s4 = sld [smem:[#allocation0]]
  $region22: #{generator_forward.10} parent=0
    _
  %s6 = ssub.s32 1, %s4
  %s7 = scalar_select 0, %s6, %s4
  // Predicated region
  $region2: #{generator_forward.10} parent=0 // pred_check
    _
  $region3: #{generator_forward.10} parent=0 // pred_check_branch
    %9 = sbr.rel (0) target = $region5
  $region4: #{generator_forward.10} parent=0 // pred_region
    _
  $region5: #{generator_forward.10} parent=0 // pred_fallthru
    _
  // Predicated region
  $region6: #{generator_forward.10} parent=0 // pred_check
    _
  $region7: #{generator_forward.10} parent=0 // pred_check_branch
    %11 = sbr.rel (0) target = $region9
  $region8: #{generator_forward.10} parent=0 // pred_region
    _
  $region9: #{generator_forward.10} parent=0 // pred_fallthru
    _
  // Predicated region
  $region10: #{generator_forward.10} parent=0 // pred_check
    _
  $region11: #{generator_forward.10} parent=0 // pred_check_branch
    %13 = sbr.rel (0) target = $region13
  $region12: #{generator_forward.10} parent=0 // pred_region
    _
  $region13: #{generator_forward.10} parent=0 // pred_fallthru
    _
  %v14 = vld [vmem:[%s0] sm:$0xff]
  %v15 = vld [vmem:[%s0 + $0x8] sm:$0xff]
  %v16 = vld [vmem:[%s0 + $0x10] sm:$0xff]
  %v17 = vld [vmem:[%s0 + $0x18] sm:$0xff]
  %v18 = vld [vmem:[%s0 + $0x20] sm:$0xff]
  %v19 = vld [vmem:[%s0 + $0x28] sm:$0xff]
  %v20 = vld [vmem:[%s1] sm:$0x3]
  %v22 = vlaneseq
  %v23 = vshrl.u32 %v22, 7
  %v24 = vsub.s32 0, %v23
  %v25 = vrot.slane %v20, %v24
  %v26 = vlaneseq
  %v27 = vshrl.u32 %v26, 7
  %v28 = vsub.s32 1, %v27
  %v29 = vrot.slane %v20, %v28
  %v32 = vmul.f32 %v14, %v25
  %v33 = vmul.f32 %v15, %v29
  %v34 = vmul.f32 %v16, %v25
  %v35 = vmul.f32 %v17, %v29
  %v36 = vmul.f32 %v18, %v25
  %v37 = vmul.f32 %v19, %v29
  %v38 = vld [vmem:[%s2] sm:$0x3]
  %v40 = vlaneseq
  %v41 = vshrl.u32 %v40, 7
  %v42 = vsub.s32 0, %v41
  %v43 = vrot.slane %v38, %v42
  %v44 = vlaneseq
  %v45 = vshrl.u32 %v44, 7
  %v46 = vsub.s32 1, %v45
  %v47 = vrot.slane %v38, %v46
  %v50 = vadd.f32 %v32, %v43
  %v51 = vadd.f32 %v33, %v47
  %v52 = vadd.f32 %v34, %v43
  %v53 = vadd.f32 %v35, %v47
  %v54 = vadd.f32 %v36, %v43
  %v55 = vadd.f32 %v37, %v47
  %vm56 = vcmp.gt.f32.partialorder %v50, 0.0
  %vm57 = vcmp.gt.f32.partialorder %v51, 0.0
  %vm58 = vcmp.gt.f32.partialorder %v52, 0.0
  %vm59 = vcmp.gt.f32.partialorder %v53, 0.0
  %vm60 = vcmp.gt.f32.partialorder %v54, 0.0
  %vm61 = vcmp.gt.f32.partialorder %v55, 0.0
  %v62 = vmul.f32 %v50, 0.05
  %v63 = vmul.f32 %v51, 0.05
  %v64 = vmul.f32 %v52, 0.05
  %v65 = vmul.f32 %v53, 0.05
  %v66 = vmul.f32 %v54, 0.05
  %v67 = vmul.f32 %v55, 0.05
  %v68 = vsel %vm56, %v50, %v62
  %v69 = vsel %vm57, %v51, %v63
  %v70 = vsel %vm58, %v52, %v64
  %v71 = vsel %vm59, %v53, %v65
  %v72 = vsel %vm60, %v54, %v66
  %v73 = vsel %vm61, %v55, %v67
  %74 = vst [vmem:[%s3] sm:$0xff] %v68
  %75 = vst [vmem:[%s3 + $0x8] sm:$0xff] %v69
  %76 = vst [vmem:[%s3 + $0x10] sm:$0xff] %v70
  %77 = vst [vmem:[%s3 + $0x18] sm:$0xff] %v71
  %78 = vst [vmem:[%s3 + $0x20] sm:$0xff] %v72
  %79 = vst [vmem:[%s3 + $0x28] sm:$0xff] %v73
  // Predicated region
  $region14: #{generator_forward.10} parent=0 // pred_check
    _
  $region15: #{generator_forward.10} parent=0 // pred_check_branch
    %81 = sbr.rel (0) target = $region17
  $region16: #{generator_forward.10} parent=0 // pred_region
    _
  $region17: #{generator_forward.10} parent=0 // pred_fallthru
    _
  // Predicated region
  $region18: #{generator_forward.10} parent=0 // pred_check
    _
  $region19: #{generator_forward.10} parent=0 // pred_check_branch
    %83 = sbr.rel (0) target = $region21
  $region20: #{generator_forward.10} parent=0 // pred_region
    _
  $region21: #{generator_forward.10} parent=0 // pred_fallthru
    _

// kernel: tile.48
$region0: #{tile.48}
  #allocation0 [shape = 's32[1]{0}', space=sflag, size = 0x4, scoped, tag = 'scoped memory for tile.48']
  %s0 = inlined_call_operand.vmem [shape: f32[32], index: 0, kind: input, shape index: {}]
  %s1 = inlined_call_operand.vmem [shape: f32[4,32], index: 1, kind: output, shape index: {}]
  // Predicated region
  $region2: #{tile.48} parent=0 // pred_check
    _
  $region3: #{tile.48} parent=0 // pred_check_branch
    %3 = sbr.rel (0) target = $region5
  $region4: #{tile.48} parent=0 // pred_region
    _
  $region5: #{tile.48} parent=0 // pred_fallthru
    _
  %v4 = vld [vmem:[%s0] ss:$0 sm:$0xff]
  %5 = vst [vmem:[%s1] sm:$0xf] %v4

// kernel: generator_forward.12
$region0: #{generator_forward.12}
  #allocation0 [shape = 'u32[]', space=smem, size = 0x4, offset = 0x4, fixed_abs, tag = 'smem constant byte address 0x4 - core index']
  #allocation1 [shape = 'u32[144,128]{1,0:T(1,128)}', space=vmem, size = 0x12000, scoped, tag = 'internal scratch']
  %s0 = inlined_call_operand.vmem [shape: f32[56,128], index: 0, kind: input, shape index: {}]
  %s1 = inlined_call_operand.vmem [shape: f32[1,128], index: 1, kind: input, shape index: {}]
  %s2 = inlined_call_operand.vmem [shape: f32[1,128], index: 2, kind: input, shape index: {}]
  %s3 = inlined_call_operand.vmem [shape: f32[56,128], index: 3, kind: output, shape index: {}]
  %s4 = sld [smem:[#allocation0]]
  $region22: #{generator_forward.12} parent=0
    _
  %s6 = ssub.s32 1, %s4
  %s7 = scalar_select 0, %s6, %s4
  // Predicated region
  $region2: #{generator_forward.12} parent=0 // pred_check
    _
  $region3: #{generator_forward.12} parent=0 // pred_check_branch
    %9 = sbr.rel (0) target = $region5
  $region4: #{generator_forward.12} parent=0 // pred_region
    _
  $region5: #{generator_forward.12} parent=0 // pred_fallthru
    _
  // Predicated region
  $region6: #{generator_forward.12} parent=0 // pred_check
    _
  $region7: #{generator_forward.12} parent=0 // pred_check_branch
    %11 = sbr.rel (0) target = $region9
  $region8: #{generator_forward.12} parent=0 // pred_region
    _
  $region9: #{generator_forward.12} parent=0 // pred_fallthru
    _
  // Predicated region
  $region10: #{generator_forward.12} parent=0 // pred_check
    _
  $region11: #{generator_forward.12} parent=0 // pred_check_branch
    %13 = sbr.rel (0) target = $region13
  $region12: #{generator_forward.12} parent=0 // pred_region
    _
  $region13: #{generator_forward.12} parent=0 // pred_fallthru
    _
  %v14 = vld [vmem:[%s0] sm:$0xff]
  %v15 = vld [vmem:[%s0 + $0x8] sm:$0xff]
  %v16 = vld [vmem:[%s0 + $0x10] sm:$0xff]
  %v17 = vld [vmem:[%s0 + $0x18] sm:$0xff]
  %v18 = vld [vmem:[%s0 + $0x20] sm:$0xff]
  %v19 = vld [vmem:[%s0 + $0x28] sm:$0xff]
  %v20 = vld [vmem:[%s0 + $0x30] sm:$0xff]
  %v21 = vld [vmem:[%s1] sm:$0x1]
  %v23 = vlaneseq
  %v24 = vshrl.u32 %v23, 7
  %v25 = vsub.s32 0, %v24
  %v26 = vrot.slane %v21, %v25
  %v28 = vmul.f32 %v14, %v26
  %v29 = vmul.f32 %v15, %v26
  %v30 = vmul.f32 %v16, %v26
  %v31 = vmul.f32 %v17, %v26
  %v32 = vmul.f32 %v18, %v26
  %v33 = vmul.f32 %v19, %v26
  %v34 = vmul.f32 %v20, %v26
  %v35 = vld [vmem:[%s2] sm:$0x1]
  %v37 = vlaneseq
  %v38 = vshrl.u32 %v37, 7
  %v39 = vsub.s32 0, %v38
  %v40 = vrot.slane %v35, %v39
  %v42 = vadd.f32 %v28, %v40
  %v43 = vadd.f32 %v29, %v40
  %v44 = vadd.f32 %v30, %v40
  %v45 = vadd.f32 %v31, %v40
  %v46 = vadd.f32 %v32, %v40
  %v47 = vadd.f32 %v33, %v40
  %v48 = vadd.f32 %v34, %v40
  %vm49 = vcmp.gt.f32.partialorder %v42, 0.0
  %vm50 = vcmp.gt.f32.partialorder %v43, 0.0
  %vm51 = vcmp.gt.f32.partialorder %v44, 0.0
  %vm52 = vcmp.gt.f32.partialorder %v45, 0.0
  %vm53 = vcmp.gt.f32.partialorder %v46, 0.0
  %vm54 = vcmp.gt.f32.partialorder %v47, 0.0
  %vm55 = vcmp.gt.f32.partialorder %v48, 0.0
  %v56 = vmul.f32 %v42, 0.05
  %v57 = vmul.f32 %v43, 0.05
  %v58 = vmul.f32 %v44, 0.05
  %v59 = vmul.f32 %v45, 0.05
  %v60 = vmul.f32 %v46, 0.05
  %v61 = vmul.f32 %v47, 0.05
  %v62 = vmul.f32 %v48, 0.05
  %v63 = vsel %vm49, %v42, %v56
  %v64 = vsel %vm50, %v43, %v57
  %v65 = vsel %vm51, %v44, %v58
  %v66 = vsel %vm52, %v45, %v59
  %v67 = vsel %vm53, %v46, %v60
  %v68 = vsel %vm54, %v47, %v61
  %v69 = vsel %vm55, %v48, %v62
  %70 = vst [vmem:[%s3] sm:$0xff] %v63
  %71 = vst [vmem:[%s3 + $0x8] sm:$0xff] %v64
  %72 = vst [vmem:[%s3 + $0x10] sm:$0xff] %v65
  %73 = vst [vmem:[%s3 + $0x18] sm:$0xff] %v66
  %74 = vst [vmem:[%s3 + $0x20] sm:$0xff] %v67
  %75 = vst [vmem:[%s3 + $0x28] sm:$0xff] %v68
  %76 = vst [vmem:[%s3 + $0x30] sm:$0xff] %v69
  // Predicated region
  $region14: #{generator_forward.12} parent=0 // pred_check
    _
  $region15: #{generator_forward.12} parent=0 // pred_check_branch
    %78 = sbr.rel (0) target = $region17
  $region16: #{generator_forward.12} parent=0 // pred_region
    _
  $region17: #{generator_forward.12} parent=0 // pred_fallthru
    _
  // Predicated region
  $region18: #{generator_forward.12} parent=0 // pred_check
    _
  $region19: #{generator_forward.12} parent=0 // pred_check_branch
    %80 = sbr.rel (0) target = $region21
  $region20: #{generator_forward.12} parent=0 // pred_region
    _
  $region21: #{generator_forward.12} parent=0 // pred_fallthru
    _

// kernel: generator_forward.11
$region0: #{generator_forward.11}
  #allocation0 [shape = 'u32[]', space=smem, size = 0x4, offset = 0x4, fixed_abs, tag = 'smem constant byte address 0x4 - core index']
  #allocation1 [shape = 'u32[144,128]{1,0:T(1,128)}', space=vmem, size = 0x12000, scoped, tag = 'internal scratch']
  #allocation2 [shape = 'f32[56,128]{1,0:T(8,128)}', space=vmem, size = 0x7000, scoped, tag = 'scratch operand']
  %s0 = inlined_call_operand.vmem [shape: bf16[56,256], index: 0, kind: input, shape index: {}]
  %s1 = inlined_call_operand.vmem [shape: bf16[256,128], index: 1, kind: input, shape index: {}]
  %s2 = inlined_call_operand.vmem [shape: f32[56,4], index: 2, kind: input, shape index: {}]
  %s3 = inlined_call_operand.vmem [shape: f32[4,128], index: 3, kind: input, shape index: {}]
  %s4 = inlined_call_operand.vmem [shape: f32[56,128], index: 4, kind: output, shape index: {0}]
  %s5 = inlined_call_operand.vmem [shape: f32[8,128], index: 5, kind: output, shape index: {1}]
  %s6 = inlined_call_operand.vmem [shape: f32[8,128], index: 6, kind: output, shape index: {2}]
  %7 = xla_tuple %s4, %s5, %s6
  %s8 = sld [smem:[#allocation0]]
  $region50: #{generator_forward.11} parent=0
    _
  %s10 = ssub.s32 1, %s8
  %s11 = scalar_select 0, %s10, %s8
  // Predicated region
  $region2: #{generator_forward.11} parent=0 // pred_check
    _
  $region3: #{generator_forward.11} parent=0 // pred_check_branch
    %13 = sbr.rel (0) target = $region5
  $region4: #{generator_forward.11} parent=0 // pred_region
    _
  $region5: #{generator_forward.11} parent=0 // pred_fallthru
    _
  // Predicated region
  $region6: #{generator_forward.11} parent=0 // pred_check
    _
  $region7: #{generator_forward.11} parent=0 // pred_check_branch
    %15 = sbr.rel (0) target = $region9
  $region8: #{generator_forward.11} parent=0 // pred_region
    _
  $region9: #{generator_forward.11} parent=0 // pred_fallthru
    _
  // Predicated region
  $region10: #{generator_forward.11} parent=0 // pred_check
    _
  $region11: #{generator_forward.11} parent=0 // pred_check_branch
    %17 = sbr.rel (0) target = $region13
  $region12: #{generator_forward.11} parent=0 // pred_region
    _
  $region13: #{generator_forward.11} parent=0 // pred_fallthru
    _
  // Predicated region
  $region14: #{generator_forward.11} parent=0 // pred_check
    _
  $region15: #{generator_forward.11} parent=0 // pred_check_branch
    %19 = sbr.rel (0) target = $region17
  $region16: #{generator_forward.11} parent=0 // pred_region
    _
  $region17: #{generator_forward.11} parent=0 // pred_fallthru
    _
  %p21 = scmp.eq.s32.totalorder 0, 0
  // Predicated region
  $region18: #{generator_forward.11} parent=0 // pred_check
    %p22 = pneg %p21
  $region19: #{generator_forward.11} parent=0 // pred_check_branch
    %24 = sbr.rel (%p22) target = $region21
  $region20: #{generator_forward.11} parent=0 // pred_region
    %25 = vst [vmem:[#allocation2] sm:$0xff] 0.0
    %26 = vst [vmem:[#allocation2 + $0x8] sm:$0xff] 0.0
    %27 = vst [vmem:[#allocation2 + $0x10] sm:$0xff] 0.0
    %28 = vst [vmem:[#allocation2 + $0x18] sm:$0xff] 0.0
    %29 = vst [vmem:[#allocation2 + $0x20] sm:$0xff] 0.0
    %30 = vst [vmem:[#allocation2 + $0x28] sm:$0xff] 0.0
    %31 = vst [vmem:[#allocation2 + $0x30] sm:$0xff] 0.0
  $region21: #{generator_forward.11} parent=0 // pred_fallthru
    _
  %v32 = vld [vmem:[#allocation2] sm:$0xff]
  %v33 = vld [vmem:[#allocation2 + $0x8] sm:$0xff]
  %v34 = vld [vmem:[#allocation2 + $0x10] sm:$0xff]
  %v35 = vld [vmem:[#allocation2 + $0x18] sm:$0xff]
  %v36 = vld [vmem:[#allocation2 + $0x20] sm:$0xff]
  %v37 = vld [vmem:[#allocation2 + $0x28] sm:$0xff]
  %v38 = vld [vmem:[#allocation2 + $0x30] sm:$0xff]
  %v39 = vld [vmem:[%s0] sm:$0xff]
  %v40 = vld [vmem:[%s0 + $0x8] sm:$0xff]
  %v41 = vld [vmem:[%s0 + $0x10] sm:$0xff]
  %v42 = vld [vmem:[%s0 + $0x18] sm:$0xff]
  %v43 = vld [vmem:[%s0 + $0x20] sm:$0xff]
  %v44 = vld [vmem:[%s0 + $0x28] sm:$0xff]
  %v45 = vld [vmem:[%s0 + $0x30] sm:$0xff]
  %v46 = vld [vmem:[%s1] sm:$0xf]
  %v47 = vld [vmem:[%s1 + $0x4] sm:$0xf]
  %v48 = vld [vmem:[%s1 + $0x8] sm:$0xf]
  %v49 = vld [vmem:[%s1 + $0xc] sm:$0xf]
  %v50 = vld [vmem:[%s1 + $0x10] sm:$0xf]
  %v51 = vld [vmem:[%s1 + $0x14] sm:$0xf]
  %v52 = vld [vmem:[%s1 + $0x18] sm:$0xf]
  %v53 = vld [vmem:[%s1 + $0x1c] sm:$0xf]
  %v54 = vld [vmem:[%s1 + $0x20] sm:$0xf]
  %v55 = vld [vmem:[%s1 + $0x24] sm:$0xf]
  %v56 = vld [vmem:[%s1 + $0x28] sm:$0xf]
  %v57 = vld [vmem:[%s1 + $0x2c] sm:$0xf]
  %v58 = vld [vmem:[%s1 + $0x30] sm:$0xf]
  %v59 = vld [vmem:[%s1 + $0x34] sm:$0xf]
  %v60 = vld [vmem:[%s1 + $0x38] sm:$0xf]
  %v61 = vld [vmem:[%s1 + $0x3c] sm:$0xf]
  %v62 = vld [vmem:[%s1 + $0x40] sm:$0xf]
  %v63 = vld [vmem:[%s1 + $0x44] sm:$0xf]
  %v64 = vld [vmem:[%s1 + $0x48] sm:$0xf]
  %v65 = vld [vmem:[%s1 + $0x4c] sm:$0xf]
  %v66 = vld [vmem:[%s1 + $0x50] sm:$0xf]
  %v67 = vld [vmem:[%s1 + $0x54] sm:$0xf]
  %v68 = vld [vmem:[%s1 + $0x58] sm:$0xf]
  %v69 = vld [vmem:[%s1 + $0x5c] sm:$0xf]
  %v70 = vld [vmem:[%s1 + $0x60] sm:$0xf]
  %v71 = vld [vmem:[%s1 + $0x64] sm:$0xf]
  %v72 = vld [vmem:[%s1 + $0x68] sm:$0xf]
  %v73 = vld [vmem:[%s1 + $0x6c] sm:$0xf]
  %v74 = vld [vmem:[%s1 + $0x70] sm:$0xf]
  %v75 = vld [vmem:[%s1 + $0x74] sm:$0xf]
  %v76 = vld [vmem:[%s1 + $0x78] sm:$0xf]
  %v77 = vld [vmem:[%s1 + $0x7c] sm:$0xf]
  %v85 = vunpack.c.l.b16 %v39
  %v86 = vunpack.c.h.b16 %v39
  %v87 = vunpack.c.l.b16 %v40
  %v88 = vunpack.c.h.b16 %v40
  %v89 = vunpack.c.l.b16 %v41
  %v90 = vunpack.c.h.b16 %v41
  %v91 = vunpack.c.l.b16 %v42
  %v92 = vunpack.c.h.b16 %v42
  %v93 = vunpack.c.l.b16 %v43
  %v94 = vunpack.c.h.b16 %v43
  %v95 = vunpack.c.l.b16 %v44
  %v96 = vunpack.c.h.b16 %v44
  %v97 = vunpack.c.l.b16 %v45
  %v98 = vunpack.c.h.b16 %v45
  %v99 = vpack.c.b16 %v87, %v85
  %v100 = vpack.c.b16 %v88, %v86
  %v101 = vpack.c.b16 %v91, %v89
  %v102 = vpack.c.b16 %v92, %v90
  %v103 = vpack.c.b16 %v95, %v93
  %v104 = vpack.c.b16 %v96, %v94
  %v105 = vpack.c.b16 %v97, %v97
  %v106 = vpack.c.b16 %v98, %v98
  %v147 = vunpack.c.l.b16 %v46
  %v148 = vunpack.c.l.b16 %v47
  %v149 = vunpack.c.l.b16 %v48
  %v150 = vunpack.c.l.b16 %v49
  %v151 = vunpack.c.l.b16 %v50
  %v152 = vunpack.c.l.b16 %v51
  %v153 = vunpack.c.l.b16 %v52
  %v154 = vunpack.c.l.b16 %v53
  %v155 = vunpack.c.l.b16 %v54
  %v156 = vunpack.c.l.b16 %v55
  %v157 = vunpack.c.l.b16 %v56
  %v158 = vunpack.c.l.b16 %v57
  %v159 = vunpack.c.l.b16 %v58
  %v160 = vunpack.c.l.b16 %v59
  %v161 = vunpack.c.l.b16 %v60
  %v162 = vunpack.c.l.b16 %v61
  %v163 = vunpack.c.l.b16 %v62
  %v164 = vunpack.c.l.b16 %v63
  %v165 = vunpack.c.l.b16 %v64
  %v166 = vunpack.c.l.b16 %v65
  %v167 = vunpack.c.l.b16 %v66
  %v168 = vunpack.c.l.b16 %v67
  %v169 = vunpack.c.l.b16 %v68
  %v170 = vunpack.c.l.b16 %v69
  %v171 = vunpack.c.l.b16 %v70
  %v172 = vunpack.c.l.b16 %v71
  %v173 = vunpack.c.l.b16 %v72
  %v174 = vunpack.c.l.b16 %v73
  %v175 = vunpack.c.l.b16 %v74
  %v176 = vunpack.c.l.b16 %v75
  %v177 = vunpack.c.l.b16 %v76
  %v178 = vunpack.c.l.b16 %v77
  %v179 = vpack.c.b16 %v148, %v147
  %v180 = vpack.c.b16 %v150, %v149
  %v181 = vpack.c.b16 %v152, %v151
  %v182 = vpack.c.b16 %v154, %v153
  %v183 = vpack.c.b16 %v156, %v155
  %v184 = vpack.c.b16 %v158, %v157
  %v185 = vpack.c.b16 %v160, %v159
  %v186 = vpack.c.b16 %v162, %v161
  %v187 = vpack.c.b16 %v164, %v163
  %v188 = vpack.c.b16 %v166, %v165
  %v189 = vpack.c.b16 %v168, %v167
  %v190 = vpack.c.b16 %v170, %v169
  %v191 = vpack.c.b16 %v172, %v171
  %v192 = vpack.c.b16 %v174, %v173
  %v193 = vpack.c.b16 %v176, %v175
  %v194 = vpack.c.b16 %v178, %v177
  %211 = vmatprep.subr.bf16.mxu0 0
  %212 = vmatpush1.bf16.msra.mxu0 %v179
  %213 = vmatprep.subr.bf16.mxu0 0
  %214 = vmatpush1.bf16.msra.mxu0 %v180
  %215 = vmatprep.subr.bf16.mxu0 0
  %216 = vmatpush1.bf16.msra.mxu0 %v181
  %217 = vmatprep.subr.bf16.mxu0 0
  %218 = vmatpush1.bf16.msra.mxu0 %v182
  %219 = vmatprep.subr.bf16.mxu0 0
  %220 = vmatpush1.bf16.msra.mxu0 %v183
  %221 = vmatprep.subr.bf16.mxu0 0
  %222 = vmatpush1.bf16.msra.mxu0 %v184
  %223 = vmatprep.subr.bf16.mxu0 0
  %224 = vmatpush1.bf16.msra.mxu0 %v185
  %225 = vmatprep.subr.bf16.mxu0 0
  %226 = vmatpush1.bf16.msra.mxu0 %v186
  %227 = vmatprep.subr.bf16.mxu0 0
  %228 = vmatpush1.bf16.msra.mxu0 %v187
  %229 = vmatprep.subr.bf16.mxu0 0
  %230 = vmatpush1.bf16.msra.mxu0 %v188
  %231 = vmatprep.subr.bf16.mxu0 0
  %232 = vmatpush1.bf16.msra.mxu0 %v189
  %233 = vmatprep.subr.bf16.mxu0 0
  %234 = vmatpush1.bf16.msra.mxu0 %v190
  %235 = vmatprep.subr.bf16.mxu0 0
  %236 = vmatpush1.bf16.msra.mxu0 %v191
  %237 = vmatprep.subr.bf16.mxu0 0
  %238 = vmatpush1.bf16.msra.mxu0 %v192
  %239 = vmatprep.subr.bf16.mxu0 0
  %240 = vmatpush1.bf16.msra.mxu0 %v193
  %241 = vmatprep.subr.bf16.mxu0 0
  %242 = vmatpush1.bf16.msra.mxu0 %v194
  %243 = vmatprep.mubr.bf16.mxu0 %v100
  %244 = vmatmul.mubr.bf16.gmra.mrb[0].mxu0 %v99
  %v245 = vpop.f32.mrb[0].mxu0
  %v246 = vadd.f32 0.0, %v245
  %v247 = vpop.f32.mrb[0].mxu0
  %v248 = vpop.f32.mrb[0].mxu0
  %v249 = vadd.f32 0.0, %v248
  %v250 = vpop.f32.mrb[0].mxu0
  %251 = vmatprep.mubr.bf16.mxu0 %v102
  %252 = vmatmul.mubr.bf16.gmra.mrb[0].mxu0 %v101
  %v253 = vpop.f32.mrb[0].mxu0
  %v254 = vadd.f32 0.0, %v253
  %v255 = vpop.f32.mrb[0].mxu0
  %v256 = vpop.f32.mrb[0].mxu0
  %v257 = vadd.f32 0.0, %v256
  %v258 = vpop.f32.mrb[0].mxu0
  %259 = vmatprep.mubr.bf16.mxu0 %v104
  %260 = vmatmul.mubr.bf16.gmra.mrb[0].mxu0 %v103
  %v261 = vpop.f32.mrb[0].mxu0
  %v262 = vadd.f32 0.0, %v261
  %v263 = vpop.f32.mrb[0].mxu0
  %v264 = vpop.f32.mrb[0].mxu0
  %v265 = vadd.f32 0.0, %v264
  %v266 = vpop.f32.mrb[0].mxu0
  %267 = vmatprep.mubr.bf16.mxu0 %v106
  %268 = vmatmul.mubr.bf16.gmra.mrb[0].mxu0 %v105
  %v269 = vpop.f32.mrb[0].mxu0
  %v270 = vadd.f32 0.0, %v269
  %v271 = vpop.f32.mrb[0].mxu0
  %v272 = vpop.f32.mrb[0].mxu0
  %v273 = vpop.f32.mrb[0].mxu0
  %274 = vdwg.mxu0
  %v275 = vadd.f32 %v32, %v246
  %v276 = vadd.f32 %v33, %v249
  %v277 = vadd.f32 %v34, %v254
  %v278 = vadd.f32 %v35, %v257
  %v279 = vadd.f32 %v36, %v262
  %v280 = vadd.f32 %v37, %v265
  %v281 = vadd.f32 %v38, %v270
  %282 = vst [vmem:[#allocation2] sm:$0xff] %v275
  %283 = vst [vmem:[#allocation2 + $0x8] sm:$0xff] %v276
  %284 = vst [vmem:[#allocation2 + $0x10] sm:$0xff] %v277
  %285 = vst [vmem:[#allocation2 + $0x18] sm:$0xff] %v278
  %286 = vst [vmem:[#allocation2 + $0x20] sm:$0xff] %v279
  %287 = vst [vmem:[#allocation2 + $0x28] sm:$0xff] %v280
  %288 = vst [vmem:[#allocation2 + $0x30] sm:$0xff] %v281
  // Predicated region
  $region22: #{generator_forward.11} parent=0 // pred_check
    %p289 = pneg %p21
  $region23: #{generator_forward.11} parent=0 // pred_check_branch
    %291 = sbr.rel (%p289) target = $region25
  $region24: #{generator_forward.11} parent=0 // pred_region
    %v292 = vld [vmem:[#allocation2] sm:$0xff]
    %v293 = vld [vmem:[#allocation2 + $0x8] sm:$0xff]
    %v294 = vld [vmem:[#allocation2 + $0x10] sm:$0xff]
    %v295 = vld [vmem:[#allocation2 + $0x18] sm:$0xff]
    %v296 = vld [vmem:[#allocation2 + $0x20] sm:$0xff]
    %v297 = vld [vmem:[#allocation2 + $0x28] sm:$0xff]
    %v298 = vld [vmem:[#allocation2 + $0x30] sm:$0xff]
    %299 = vst [vmem:[%s4] sm:$0xff] %v292
    %300 = vst [vmem:[%s4 + $0x8] sm:$0xff] %v293
    %301 = vst [vmem:[%s4 + $0x10] sm:$0xff] %v294
    %302 = vst [vmem:[%s4 + $0x18] sm:$0xff] %v295
    %303 = vst [vmem:[%s4 + $0x20] sm:$0xff] %v296
    %304 = vst [vmem:[%s4 + $0x28] sm:$0xff] %v297
    %305 = vst [vmem:[%s4 + $0x30] sm:$0xff] %v298
    %v306 = vld [vmem:[%s2] sm:$0xff]
    %v307 = vld [vmem:[%s2 + $0x8] sm:$0xff]
    %v308 = vld [vmem:[%s2 + $0x10] sm:$0xff]
    %v309 = vld [vmem:[%s2 + $0x18] sm:$0xff]
    %v310 = vld [vmem:[%s2 + $0x20] sm:$0xff]
    %v311 = vld [vmem:[%s2 + $0x28] sm:$0xff]
    %v312 = vld [vmem:[%s2 + $0x30] sm:$0xff]
    %v313 = vld [vmem:[%s3] sm:$0xf]
    %315 = vset.pattern.permute.xlu0 0
    %316 = vperm.xlu0 %315, %v306
    %v317 = vpop.permute.xlu0 %316
    %320 = vset.pattern.permute.xlu0 0
    %321 = vperm.xlu0 %320, %v307
    %v322 = vpop.permute.xlu0 %321
    %325 = vset.pattern.permute.xlu0 0
    %326 = vperm.xlu0 %325, %v308
    %v327 = vpop.permute.xlu0 %326
    %330 = vset.pattern.permute.xlu0 0
    %331 = vperm.xlu0 %330, %v309
    %v332 = vpop.permute.xlu0 %331
    %335 = vset.pattern.permute.xlu0 0
    %336 = vperm.xlu0 %335, %v310
    %v337 = vpop.permute.xlu0 %336
    %340 = vset.pattern.permute.xlu0 0
    %341 = vperm.xlu0 %340, %v311
    %v342 = vpop.permute.xlu0 %341
    %345 = vset.pattern.permute.xlu0 0
    %346 = vperm.xlu0 %345, %v312
    %v347 = vpop.permute.xlu0 %346
    %v349 = vlaneseq
    %v350 = vshrl.u32 %v349, 7
    %v351 = vsub.s32 0, %v350
    %v352 = vrot.slane %v313, %v351
    %v353 = vmul.f32 %v317, %v352
    %v354 = vmul.f32 %v322, %v352
    %v355 = vmul.f32 %v327, %v352
    %v356 = vmul.f32 %v332, %v352
    %v357 = vmul.f32 %v337, %v352
    %v358 = vmul.f32 %v342, %v352
    %v359 = vmul.f32 %v347, %v352
    %360 = vset.pattern.permute.xlu0 1
    %361 = vperm.xlu0 %360, %v306
    %v362 = vpop.permute.xlu0 %361
    %364 = vset.pattern.permute.xlu0 1
    %365 = vperm.xlu0 %364, %v307
    %v366 = vpop.permute.xlu0 %365
    %368 = vset.pattern.permute.xlu0 1
    %369 = vperm.xlu0 %368, %v308
    %v370 = vpop.permute.xlu0 %369
    %372 = vset.pattern.permute.xlu0 1
    %373 = vperm.xlu0 %372, %v309
    %v374 = vpop.permute.xlu0 %373
    %376 = vset.pattern.permute.xlu0 1
    %377 = vperm.xlu0 %376, %v310
    %v378 = vpop.permute.xlu0 %377
    %380 = vset.pattern.permute.xlu0 1
    %381 = vperm.xlu0 %380, %v311
    %v382 = vpop.permute.xlu0 %381
    %384 = vset.pattern.permute.xlu0 1
    %385 = vperm.xlu0 %384, %v312
    %v386 = vpop.permute.xlu0 %385
    %v388 = vlaneseq
    %v389 = vshrl.u32 %v388, 7
    %v390 = vsub.s32 1, %v389
    %v391 = vrot.slane %v313, %v390
    %v392 = vmul.f32 %v362, %v391
    %v393 = vmul.f32 %v366, %v391
    %v394 = vmul.f32 %v370, %v391
    %v395 = vmul.f32 %v374, %v391
    %v396 = vmul.f32 %v378, %v391
    %v397 = vmul.f32 %v382, %v391
    %v398 = vmul.f32 %v386, %v391
    %v399 = vadd.f32 %v353, %v392
    %v400 = vadd.f32 %v354, %v393
    %v401 = vadd.f32 %v355, %v394
    %v402 = vadd.f32 %v356, %v395
    %v403 = vadd.f32 %v357, %v396
    %v404 = vadd.f32 %v358, %v397
    %v405 = vadd.f32 %v359, %v398
    %406 = vset.pattern.permute.xlu0 2
    %407 = vperm.xlu0 %406, %v306
    %v408 = vpop.permute.xlu0 %407
    %410 = vset.pattern.permute.xlu0 2
    %411 = vperm.xlu0 %410, %v307
    %v412 = vpop.permute.xlu0 %411
    %414 = vset.pattern.permute.xlu0 2
    %415 = vperm.xlu0 %414, %v308
    %v416 = vpop.permute.xlu0 %415
    %418 = vset.pattern.permute.xlu0 2
    %419 = vperm.xlu0 %418, %v309
    %v420 = vpop.permute.xlu0 %419
    %422 = vset.pattern.permute.xlu0 2
    %423 = vperm.xlu0 %422, %v310
    %v424 = vpop.permute.xlu0 %423
    %426 = vset.pattern.permute.xlu0 2
    %427 = vperm.xlu0 %426, %v311
    %v428 = vpop.permute.xlu0 %427
    %430 = vset.pattern.permute.xlu0 2
    %431 = vperm.xlu0 %430, %v312
    %v432 = vpop.permute.xlu0 %431
    %v434 = vlaneseq
    %v435 = vshrl.u32 %v434, 7
    %v436 = vsub.s32 2, %v435
    %v437 = vrot.slane %v313, %v436
    %v438 = vmul.f32 %v408, %v437
    %v439 = vmul.f32 %v412, %v437
    %v440 = vmul.f32 %v416, %v437
    %v441 = vmul.f32 %v420, %v437
    %v442 = vmul.f32 %v424, %v437
    %v443 = vmul.f32 %v428, %v437
    %v444 = vmul.f32 %v432, %v437
    %v445 = vadd.f32 %v399, %v438
    %v446 = vadd.f32 %v400, %v439
    %v447 = vadd.f32 %v401, %v440
    %v448 = vadd.f32 %v402, %v441
    %v449 = vadd.f32 %v403, %v442
    %v450 = vadd.f32 %v404, %v443
    %v451 = vadd.f32 %v405, %v444
    %452 = vset.pattern.permute.xlu0 3
    %453 = vperm.xlu0 %452, %v306
    %v454 = vpop.permute.xlu0 %453
    %456 = vset.pattern.permute.xlu0 3
    %457 = vperm.xlu0 %456, %v307
    %v458 = vpop.permute.xlu0 %457
    %460 = vset.pattern.permute.xlu0 3
    %461 = vperm.xlu0 %460, %v308
    %v462 = vpop.permute.xlu0 %461
    %464 = vset.pattern.permute.xlu0 3
    %465 = vperm.xlu0 %464, %v309
    %v466 = vpop.permute.xlu0 %465
    %468 = vset.pattern.permute.xlu0 3
    %469 = vperm.xlu0 %468, %v310
    %v470 = vpop.permute.xlu0 %469
    %472 = vset.pattern.permute.xlu0 3
    %473 = vperm.xlu0 %472, %v311
    %v474 = vpop.permute.xlu0 %473
    %476 = vset.pattern.permute.xlu0 3
    %477 = vperm.xlu0 %476, %v312
    %v478 = vpop.permute.xlu0 %477
    %v480 = vlaneseq
    %v481 = vshrl.u32 %v480, 7
    %v482 = vsub.s32 3, %v481
    %v483 = vrot.slane %v313, %v482
    %v484 = vmul.f32 %v454, %v483
    %v485 = vmul.f32 %v458, %v483
    %v486 = vmul.f32 %v462, %v483
    %v487 = vmul.f32 %v466, %v483
    %v488 = vmul.f32 %v470, %v483
    %v489 = vmul.f32 %v474, %v483
    %v490 = vmul.f32 %v478, %v483
    %v491 = vadd.f32 %v445, %v484
    %v492 = vadd.f32 %v446, %v485
    %v493 = vadd.f32 %v447, %v486
    %v494 = vadd.f32 %v448, %v487
    %v495 = vadd.f32 %v449, %v488
    %v496 = vadd.f32 %v450, %v489
    %v497 = vadd.f32 %v451, %v490
    %v498 = vmul.f32 %v292, %v491
    %v499 = vmul.f32 %v293, %v492
    %v500 = vmul.f32 %v294, %v493
    %v501 = vmul.f32 %v295, %v494
    %v502 = vmul.f32 %v296, %v495
    %v503 = vmul.f32 %v297, %v496
    %v504 = vmul.f32 %v298, %v497
    %505 = vst [vmem:[%s5] sm:$0xff] 0.0
    %506 = vst [vmem:[%s6] sm:$0xff] 0.0
    %v507 = vadd.f32 %v498, %v499
    %v508 = vadd.f32 %v507, %v500
    %v509 = vadd.f32 %v508, %v501
    %v510 = vadd.f32 %v509, %v502
    %v511 = vadd.f32 %v510, %v503
    %v512 = vadd.f32 %v511, %v504
    %v513 = vrot.slane %v512, 4
    %v514 = vadd.f32 %v512, %v513
    %v515 = vrot.slane %v514, 2
    %v516 = vadd.f32 %v514, %v515
    %v517 = vrot.slane %v516, 1
    %v518 = vadd.f32 %v516, %v517
    %519 = vst [vmem:[%s5] sm:$0x1] %v518
    %v520 = vmul.f32 %v498, %v292
    %v521 = vmul.f32 %v499, %v293
    %v522 = vmul.f32 %v500, %v294
    %v523 = vmul.f32 %v501, %v295
    %v524 = vmul.f32 %v502, %v296
    %v525 = vmul.f32 %v503, %v297
    %v526 = vmul.f32 %v504, %v298
    %v527 = vadd.f32 %v520, %v521
    %v528 = vadd.f32 %v527, %v522
    %v529 = vadd.f32 %v528, %v523
    %v530 = vadd.f32 %v529, %v524
    %v531 = vadd.f32 %v530, %v525
    %v532 = vadd.f32 %v531, %v526
    %v533 = vrot.slane %v532, 4
    %v534 = vadd.f32 %v532, %v533
    %v535 = vrot.slane %v534, 2
    %v536 = vadd.f32 %v534, %v535
    %v537 = vrot.slane %v536, 1
    %v538 = vadd.f32 %v536, %v537
    %539 = vst [vmem:[%s6] sm:$0x1] %v538
  $region25: #{generator_forward.11} parent=0 // pred_fallthru
    _
  // Predicated region
  $region26: #{generator_forward.11} parent=0 // pred_check
    _
  $region27: #{generator_forward.11} parent=0 // pred_check_branch
    %541 = sbr.rel (0) target = $region29
  $region28: #{generator_forward.11} parent=0 // pred_region
    _
  $region29: #{generator_forward.11} parent=0 // pred_fallthru
    _
  // Predicated region
  $region30: #{generator_forward.11} parent=0 // pred_check
    _
  $region31: #{generator_forward.11} parent=0 // pred_check_branch
    %543 = sbr.rel (0) target = $region33
  $region32: #{generator_forward.11} parent=0 // pred_region
    _
  $region33: #{generator_forward.11} parent=0 // pred_fallthru
    _
  // Predicated region
  $region34: #{generator_forward.11} parent=0 // pred_check
    _
  $region35: #{generator_forward.11} parent=0 // pred_check_branch
    %545 = sbr.rel (0) target = $region37
  $region36: #{generator_forward.11} parent=0 // pred_region
    _
  $region37: #{generator_forward.11} parent=0 // pred_fallthru
    _
  // Predicated region
  $region38: #{generator_forward.11} parent=0 // pred_check
    _
  $region39: #{generator_forward.11} parent=0 // pred_check_branch
    %547 = sbr.rel (0) target = $region41
  $region40: #{generator_forward.11} parent=0 // pred_region
    _
  $region41: #{generator_forward.11} parent=0 // pred_fallthru
    _
  // Predicated region
  $region42: #{generator_forward.11} parent=0 // pred_check
    _
  $region43: #{generator_forward.11} parent=0 // pred_check_branch
    %549 = sbr.rel (0) target = $region45
  $region44: #{generator_forward.11} parent=0 // pred_region
    _
  $region45: #{generator_forward.11} parent=0 // pred_fallthru
    _
  // Predicated region
  $region46: #{generator_forward.11} parent=0 // pred_check
    _
  $region47: #{generator_forward.11} parent=0 // pred_check_branch
    %551 = sbr.rel (0) target = $region49
  $region48: #{generator_forward.11} parent=0 // pred_region
    _
  $region49: #{generator_forward.11} parent=0 // pred_fallthru
    _

// kernel: tile.63
$region0: #{tile.63}
  #allocation0 [shape = 's32[1]{0}', space=sflag, size = 0x4, scoped, tag = 'scoped memory for tile.63']
  %s0 = inlined_call_operand.vmem [shape: f32[16], index: 0, kind: input, shape index: {}]
  %s1 = inlined_call_operand.vmem [shape: f32[4,16], index: 1, kind: output, shape index: {}]
  // Predicated region
  $region2: #{tile.63} parent=0 // pred_check
    _
  $region3: #{tile.63} parent=0 // pred_check_branch
    %3 = sbr.rel (0) target = $region5
  $region4: #{tile.63} parent=0 // pred_region
    _
  $region5: #{tile.63} parent=0 // pred_fallthru
    _
  %v4 = vld [vmem:[%s0] ss:$0 sm:$0xff]
  %5 = vst [vmem:[%s1] sm:$0xf] %v4

// kernel: tile.64
$region0: #{tile.64}
  %s0 = inlined_call_operand.vmem [shape: f32[4,16], index: 0, kind: input, shape index: {}]
  %s1 = inlined_call_operand.vmem [shape: f32[64], index: 1, kind: output, shape index: {}]
  $region1: #{tile.64} parent=0
    #allocation0 [shape = 'u8[4096]{0}', space=vmem, size = 0x1000, scoped, tag = 'scoped mem for output reshape']
    #allocation1 [shape = 'u8[4096]{0}', space=vmem, size = 0x1000, scoped, tag = 'scoped mem for input reshape']
    %s3 = sshllo.u32 0, 4
    %v4 = vld [vmem:[%s0] sm:%s3]
    %5 = vst [vmem:[#allocation1] sm:%s3] %v4
    %v6 = vld [vmem:[#allocation1] sm:$0x1]
    %vm7 = vcmask 130048
    %8 = vst.msk [vmem:[#allocation0] sm:$0x1] %vm7, %v6
    %s9 = scalar_lea.vmem [#allocation1], 3
    %v10 = vld [vmem:[%s9] sm:$0x1]
    %11 = vrot.lane.b32.xlu0 %v10, 48
    %v12 = vpop.permute.xlu0 %11
    %vm13 = vcmask 523648
    %14 = vst.msk [vmem:[#allocation0] sm:$0x1] %vm13, %v12
    %s15 = scalar_lea.vmem [#allocation1], 2
    %v16 = vld [vmem:[%s15] sm:$0x1]
    %17 = vrot.lane.b32.xlu0 %v16, 32
    %v18 = vpop.permute.xlu0 %17
    %vm19 = vcmask 392448
    %20 = vst.msk [vmem:[#allocation0] sm:$0x1] %vm19, %v18
    %s21 = scalar_lea.vmem [#allocation1], 1
    %v22 = vld [vmem:[%s21] sm:$0x1]
    %23 = vrot.lane.b32.xlu0 %v22, 16
    %v24 = vpop.permute.xlu0 %23
    %vm25 = vcmask 261248
    %26 = vst.msk [vmem:[#allocation0] sm:$0x1] %vm25, %v24
    %s28 = sshllo.u32 0, 1
    %v30 = vld [vmem:[#allocation0] sm:%s28]
    %s31 = sshllo.u32 0, 1
    %32 = vst [vmem:[%s1] sm:%s31] %v30

// kernel: generator_forward.14
$region0: #{generator_forward.14}
  #allocation0 [shape = 'u32[]', space=smem, size = 0x4, offset = 0x4, fixed_abs, tag = 'smem constant byte address 0x4 - core index']
  #allocation1 [shape = 'u32[144,128]{1,0:T(1,128)}', space=vmem, size = 0x12000, scoped, tag = 'internal scratch']
  %s0 = inlined_call_operand.vmem [shape: f32[168,128], index: 0, kind: input, shape index: {}]
  %s1 = inlined_call_operand.vmem [shape: f32[1,128], index: 1, kind: input, shape index: {}]
  %s2 = inlined_call_operand.vmem [shape: f32[1,128], index: 2, kind: input, shape index: {}]
  %s3 = inlined_call_operand.vmem [shape: f32[168,128], index: 3, kind: output, shape index: {}]
  %s4 = sld [smem:[#allocation0]]
  $region22: #{generator_forward.14} parent=0
    _
  %s6 = ssub.s32 1, %s4
  %s7 = scalar_select 0, %s6, %s4
  // Predicated region
  $region2: #{generator_forward.14} parent=0 // pred_check
    _
  $region3: #{generator_forward.14} parent=0 // pred_check_branch
    %9 = sbr.rel (0) target = $region5
  $region4: #{generator_forward.14} parent=0 // pred_region
    _
  $region5: #{generator_forward.14} parent=0 // pred_fallthru
    _
  // Predicated region
  $region6: #{generator_forward.14} parent=0 // pred_check
    _
  $region7: #{generator_forward.14} parent=0 // pred_check_branch
    %11 = sbr.rel (0) target = $region9
  $region8: #{generator_forward.14} parent=0 // pred_region
    _
  $region9: #{generator_forward.14} parent=0 // pred_fallthru
    _
  // Predicated region
  $region10: #{generator_forward.14} parent=0 // pred_check
    _
  $region11: #{generator_forward.14} parent=0 // pred_check_branch
    %13 = sbr.rel (0) target = $region13
  $region12: #{generator_forward.14} parent=0 // pred_region
    _
  $region13: #{generator_forward.14} parent=0 // pred_fallthru
    _
  %v14 = vld [vmem:[%s0] sm:$0xff]
  %v15 = vld [vmem:[%s0 + $0x8] sm:$0xff]
  %v16 = vld [vmem:[%s0 + $0x10] sm:$0xff]
  %v17 = vld [vmem:[%s0 + $0x18] sm:$0xff]
  %v18 = vld [vmem:[%s0 + $0x20] sm:$0xff]
  %v19 = vld [vmem:[%s0 + $0x28] sm:$0xff]
  %v20 = vld [vmem:[%s0 + $0x30] sm:$0xff]
  %v21 = vld [vmem:[%s0 + $0x38] sm:$0xff]
  %v22 = vld [vmem:[%s0 + $0x40] sm:$0xff]
  %v23 = vld [vmem:[%s0 + $0x48] sm:$0xff]
  %v24 = vld [vmem:[%s0 + $0x50] sm:$0xff]
  %v25 = vld [vmem:[%s0 + $0x58] sm:$0xff]
  %v26 = vld [vmem:[%s0 + $0x60] sm:$0xff]
  %v27 = vld [vmem:[%s0 + $0x68] sm:$0xff]
  %v28 = vld [vmem:[%s0 + $0x70] sm:$0xff]
  %v29 = vld [vmem:[%s0 + $0x78] sm:$0xff]
  %v30 = vld [vmem:[%s0 + $0x80] sm:$0xff]
  %v31 = vld [vmem:[%s0 + $0x88] sm:$0xff]
  %v32 = vld [vmem:[%s0 + $0x90] sm:$0xff]
  %v33 = vld [vmem:[%s0 + $0x98] sm:$0xff]
  %v34 = vld [vmem:[%s0 + $0xa0] sm:$0xff]
  %v35 = vld [vmem:[%s1] sm:$0x1]
  %v37 = vlaneseq
  %v38 = vshrl.u32 %v37, 7
  %v39 = vsub.s32 0, %v38
  %v40 = vrot.slane %v35, %v39
  %v42 = vmul.f32 %v14, %v40
  %v43 = vmul.f32 %v15, %v40
  %v44 = vmul.f32 %v16, %v40
  %v45 = vmul.f32 %v17, %v40
  %v46 = vmul.f32 %v18, %v40
  %v47 = vmul.f32 %v19, %v40
  %v48 = vmul.f32 %v20, %v40
  %v49 = vmul.f32 %v21, %v40
  %v50 = vmul.f32 %v22, %v40
  %v51 = vmul.f32 %v23, %v40
  %v52 = vmul.f32 %v24, %v40
  %v53 = vmul.f32 %v25, %v40
  %v54 = vmul.f32 %v26, %v40
  %v55 = vmul.f32 %v27, %v40
  %v56 = vmul.f32 %v28, %v40
  %v57 = vmul.f32 %v29, %v40
  %v58 = vmul.f32 %v30, %v40
  %v59 = vmul.f32 %v31, %v40
  %v60 = vmul.f32 %v32, %v40
  %v61 = vmul.f32 %v33, %v40
  %v62 = vmul.f32 %v34, %v40
  %v63 = vld [vmem:[%s2] sm:$0x1]
  %v65 = vlaneseq
  %v66 = vshrl.u32 %v65, 7
  %v67 = vsub.s32 0, %v66
  %v68 = vrot.slane %v63, %v67
  %v70 = vadd.f32 %v42, %v68
  %v71 = vadd.f32 %v43, %v68
  %v72 = vadd.f32 %v44, %v68
  %v73 = vadd.f32 %v45, %v68
  %v74 = vadd.f32 %v46, %v68
  %v75 = vadd.f32 %v47, %v68
  %v76 = vadd.f32 %v48, %v68
  %v77 = vadd.f32 %v49, %v68
  %v78 = vadd.f32 %v50, %v68
  %v79 = vadd.f32 %v51, %v68
  %v80 = vadd.f32 %v52, %v68
  %v81 = vadd.f32 %v53, %v68
  %v82 = vadd.f32 %v54, %v68
  %v83 = vadd.f32 %v55, %v68
  %v84 = vadd.f32 %v56, %v68
  %v85 = vadd.f32 %v57, %v68
  %v86 = vadd.f32 %v58, %v68
  %v87 = vadd.f32 %v59, %v68
  %v88 = vadd.f32 %v60, %v68
  %v89 = vadd.f32 %v61, %v68
  %v90 = vadd.f32 %v62, %v68
  %vm91 = vcmp.gt.f32.partialorder %v70, 0.0
  %vm92 = vcmp.gt.f32.partialorder %v71, 0.0
  %vm93 = vcmp.gt.f32.partialorder %v72, 0.0
  %vm94 = vcmp.gt.f32.partialorder %v73, 0.0
  %vm95 = vcmp.gt.f32.partialorder %v74, 0.0
  %vm96 = vcmp.gt.f32.partialorder %v75, 0.0
  %vm97 = vcmp.gt.f32.partialorder %v76, 0.0
  %vm98 = vcmp.gt.f32.partialorder %v77, 0.0
  %vm99 = vcmp.gt.f32.partialorder %v78, 0.0
  %vm100 = vcmp.gt.f32.partialorder %v79, 0.0
  %vm101 = vcmp.gt.f32.partialorder %v80, 0.0
  %vm102 = vcmp.gt.f32.partialorder %v81, 0.0
  %vm103 = vcmp.gt.f32.partialorder %v82, 0.0
  %vm104 = vcmp.gt.f32.partialorder %v83, 0.0
  %vm105 = vcmp.gt.f32.partialorder %v84, 0.0
  %vm106 = vcmp.gt.f32.partialorder %v85, 0.0
  %vm107 = vcmp.gt.f32.partialorder %v86, 0.0
  %vm108 = vcmp.gt.f32.partialorder %v87, 0.0
  %vm109 = vcmp.gt.f32.partialorder %v88, 0.0
  %vm110 = vcmp.gt.f32.partialorder %v89, 0.0
  %vm111 = vcmp.gt.f32.partialorder %v90, 0.0
  %v112 = vmul.f32 %v70, 0.05
  %v113 = vmul.f32 %v71, 0.05
  %v114 = vmul.f32 %v72, 0.05
  %v115 = vmul.f32 %v73, 0.05
  %v116 = vmul.f32 %v74, 0.05
  %v117 = vmul.f32 %v75, 0.05
  %v118 = vmul.f32 %v76, 0.05
  %v119 = vmul.f32 %v77, 0.05
  %v120 = vmul.f32 %v78, 0.05
  %v121 = vmul.f32 %v79, 0.05
  %v122 = vmul.f32 %v80, 0.05
  %v123 = vmul.f32 %v81, 0.05
  %v124 = vmul.f32 %v82, 0.05
  %v125 = vmul.f32 %v83, 0.05
  %v126 = vmul.f32 %v84, 0.05
  %v127 = vmul.f32 %v85, 0.05
  %v128 = vmul.f32 %v86, 0.05
  %v129 = vmul.f32 %v87, 0.05
  %v130 = vmul.f32 %v88, 0.05
  %v131 = vmul.f32 %v89, 0.05
  %v132 = vmul.f32 %v90, 0.05
  %v133 = vsel %vm91, %v70, %v112
  %v134 = vsel %vm92, %v71, %v113
  %v135 = vsel %vm93, %v72, %v114
  %v136 = vsel %vm94, %v73, %v115
  %v137 = vsel %vm95, %v74, %v116
  %v138 = vsel %vm96, %v75, %v117
  %v139 = vsel %vm97, %v76, %v118
  %v140 = vsel %vm98, %v77, %v119
  %v141 = vsel %vm99, %v78, %v120
  %v142 = vsel %vm100, %v79, %v121
  %v143 = vsel %vm101, %v80, %v122
  %v144 = vsel %vm102, %v81, %v123
  %v145 = vsel %vm103, %v82, %v124
  %v146 = vsel %vm104, %v83, %v125
  %v147 = vsel %vm105, %v84, %v126
  %v148 = vsel %vm106, %v85, %v127
  %v149 = vsel %vm107, %v86, %v128
  %v150 = vsel %vm108, %v87, %v129
  %v151 = vsel %vm109, %v88, %v130
  %v152 = vsel %vm110, %v89, %v131
  %v153 = vsel %vm111, %v90, %v132
  %154 = vst [vmem:[%s3] sm:$0xff] %v133
  %155 = vst [vmem:[%s3 + $0x8] sm:$0xff] %v134
  %156 = vst [vmem:[%s3 + $0x10] sm:$0xff] %v135
  %157 = vst [vmem:[%s3 + $0x18] sm:$0xff] %v136
  %158 = vst [vmem:[%s3 + $0x20] sm:$0xff] %v137
  %159 = vst [vmem:[%s3 + $0x28] sm:$0xff] %v138
  %160 = vst [vmem:[%s3 + $0x30] sm:$0xff] %v139
  %161 = vst [vmem:[%s3 + $0x38] sm:$0xff] %v140
  %162 = vst [vmem:[%s3 + $0x40] sm:$0xff] %v141
  %163 = vst [vmem:[%s3 + $0x48] sm:$0xff] %v142
  %164 = vst [vmem:[%s3 + $0x50] sm:$0xff] %v143
  %165 = vst [vmem:[%s3 + $0x58] sm:$0xff] %v144
  %166 = vst [vmem:[%s3 + $0x60] sm:$0xff] %v145
  %167 = vst [vmem:[%s3 + $0x68] sm:$0xff] %v146
  %168 = vst [vmem:[%s3 + $0x70] sm:$0xff] %v147
  %169 = vst [vmem:[%s3 + $0x78] sm:$0xff] %v148
  %170 = vst [vmem:[%s3 + $0x80] sm:$0xff] %v149
  %171 = vst [vmem:[%s3 + $0x88] sm:$0xff] %v150
  %172 = vst [vmem:[%s3 + $0x90] sm:$0xff] %v151
  %173 = vst [vmem:[%s3 + $0x98] sm:$0xff] %v152
  %174 = vst [vmem:[%s3 + $0xa0] sm:$0xff] %v153
  // Predicated region
  $region14: #{generator_forward.14} parent=0 // pred_check
    _
  $region15: #{generator_forward.14} parent=0 // pred_check_branch
    %176 = sbr.rel (0) target = $region17
  $region16: #{generator_forward.14} parent=0 // pred_region
    _
  $region17: #{generator_forward.14} parent=0 // pred_fallthru
    _
  // Predicated region
  $region18: #{generator_forward.14} parent=0 // pred_check
    _
  $region19: #{generator_forward.14} parent=0 // pred_check_branch
    %178 = sbr.rel (0) target = $region21
  $region20: #{generator_forward.14} parent=0 // pred_region
    _
  $region21: #{generator_forward.14} parent=0 // pred_fallthru
    _

// kernel: generator_forward.13
$region0: #{generator_forward.13}
  #allocation0 [shape = 'u32[]', space=smem, size = 0x4, offset = 0x4, fixed_abs, tag = 'smem constant byte address 0x4 - core index']
  #allocation1 [shape = 'u32[144,128]{1,0:T(1,128)}', space=vmem, size = 0x12000, scoped, tag = 'internal scratch']
  #allocation2 [shape = 'f32[168,128]{1,0:T(8,128)}', space=vmem, size = 0x15000, scoped, tag = 'scratch operand']
  %s0 = inlined_call_operand.vmem [shape: bf16[168,128], index: 0, kind: input, shape index: {}]
  %s1 = inlined_call_operand.vmem [shape: bf16[128,128], index: 1, kind: input, shape index: {}]
  %s2 = inlined_call_operand.vmem [shape: f32[168,4], index: 2, kind: input, shape index: {}]
  %s3 = inlined_call_operand.vmem [shape: f32[4,128], index: 3, kind: input, shape index: {}]
  %s4 = inlined_call_operand.vmem [shape: f32[168,128], index: 4, kind: output, shape index: {0}]
  %s5 = inlined_call_operand.vmem [shape: f32[8,128], index: 5, kind: output, shape index: {1}]
  %s6 = inlined_call_operand.vmem [shape: f32[8,128], index: 6, kind: output, shape index: {2}]
  %7 = xla_tuple %s4, %s5, %s6
  %s8 = sld [smem:[#allocation0]]
  $region50: #{generator_forward.13} parent=0
    _
  %s10 = ssub.s32 1, %s8
  %s11 = scalar_select 0, %s10, %s8
  // Predicated region
  $region2: #{generator_forward.13} parent=0 // pred_check
    _
  $region3: #{generator_forward.13} parent=0 // pred_check_branch
    %13 = sbr.rel (0) target = $region5
  $region4: #{generator_forward.13} parent=0 // pred_region
    _
  $region5: #{generator_forward.13} parent=0 // pred_fallthru
    _
  // Predicated region
  $region6: #{generator_forward.13} parent=0 // pred_check
    _
  $region7: #{generator_forward.13} parent=0 // pred_check_branch
    %15 = sbr.rel (0) target = $region9
  $region8: #{generator_forward.13} parent=0 // pred_region
    _
  $region9: #{generator_forward.13} parent=0 // pred_fallthru
    _
  // Predicated region
  $region10: #{generator_forward.13} parent=0 // pred_check
    _
  $region11: #{generator_forward.13} parent=0 // pred_check_branch
    %17 = sbr.rel (0) target = $region13
  $region12: #{generator_forward.13} parent=0 // pred_region
    _
  $region13: #{generator_forward.13} parent=0 // pred_fallthru
    _
  // Predicated region
  $region14: #{generator_forward.13} parent=0 // pred_check
    _
  $region15: #{generator_forward.13} parent=0 // pred_check_branch
    %19 = sbr.rel (0) target = $region17
  $region16: #{generator_forward.13} parent=0 // pred_region
    _
  $region17: #{generator_forward.13} parent=0 // pred_fallthru
    _
  %p21 = scmp.eq.s32.totalorder 0, 0
  // Predicated region
  $region18: #{generator_forward.13} parent=0 // pred_check
    %p22 = pneg %p21
  $region19: #{generator_forward.13} parent=0 // pred_check_branch
    %24 = sbr.rel (%p22) target = $region21
  $region20: #{generator_forward.13} parent=0 // pred_region
    %25 = vst [vmem:[#allocation2] sm:$0xff] 0.0
    %26 = vst [vmem:[#allocation2 + $0x8] sm:$0xff] 0.0
    %27 = vst [vmem:[#allocation2 + $0x10] sm:$0xff] 0.0
    %28 = vst [vmem:[#allocation2 + $0x18] sm:$0xff] 0.0
    %29 = vst [vmem:[#allocation2 + $0x20] sm:$0xff] 0.0
    %30 = vst [vmem:[#allocation2 + $0x28] sm:$0xff] 0.0
    %31 = vst [vmem:[#allocation2 + $0x30] sm:$0xff] 0.0
    %32 = vst [vmem:[#allocation2 + $0x38] sm:$0xff] 0.0
    %33 = vst [vmem:[#allocation2 + $0x40] sm:$0xff] 0.0
    %34 = vst [vmem:[#allocation2 + $0x48] sm:$0xff] 0.0
    %35 = vst [vmem:[#allocation2 + $0x50] sm:$0xff] 0.0
    %36 = vst [vmem:[#allocation2 + $0x58] sm:$0xff] 0.0
    %37 = vst [vmem:[#allocation2 + $0x60] sm:$0xff] 0.0
    %38 = vst [vmem:[#allocation2 + $0x68] sm:$0xff] 0.0
    %39 = vst [vmem:[#allocation2 + $0x70] sm:$0xff] 0.0
    %40 = vst [vmem:[#allocation2 + $0x78] sm:$0xff] 0.0
    %41 = vst [vmem:[#allocation2 + $0x80] sm:$0xff] 0.0
    %42 = vst [vmem:[#allocation2 + $0x88] sm:$0xff] 0.0
    %43 = vst [vmem:[#allocation2 + $0x90] sm:$0xff] 0.0
    %44 = vst [vmem:[#allocation2 + $0x98] sm:$0xff] 0.0
    %45 = vst [vmem:[#allocation2 + $0xa0] sm:$0xff] 0.0
  $region21: #{generator_forward.13} parent=0 // pred_fallthru
    _
  %v46 = vld [vmem:[#allocation2] sm:$0xff]
  %v47 = vld [vmem:[#allocation2 + $0x8] sm:$0xff]
  %v48 = vld [vmem:[#allocation2 + $0x10] sm:$0xff]
  %v49 = vld [vmem:[#allocation2 + $0x18] sm:$0xff]
  %v50 = vld [vmem:[#allocation2 + $0x20] sm:$0xff]
  %v51 = vld [vmem:[#allocation2 + $0x28] sm:$0xff]
  %v52 = vld [vmem:[#allocation2 + $0x30] sm:$0xff]
  %v53 = vld [vmem:[#allocation2 + $0x38] sm:$0xff]
  %v54 = vld [vmem:[#allocation2 + $0x40] sm:$0xff]
  %v55 = vld [vmem:[#allocation2 + $0x48] sm:$0xff]
  %v56 = vld [vmem:[#allocation2 + $0x50] sm:$0xff]
  %v57 = vld [vmem:[#allocation2 + $0x58] sm:$0xff]
  %v58 = vld [vmem:[#allocation2 + $0x60] sm:$0xff]
  %v59 = vld [vmem:[#allocation2 + $0x68] sm:$0xff]
  %v60 = vld [vmem:[#allocation2 + $0x70] sm:$0xff]
  %v61 = vld [vmem:[#allocation2 + $0x78] sm:$0xff]
  %v62 = vld [vmem:[#allocation2 + $0x80] sm:$0xff]
  %v63 = vld [vmem:[#allocation2 + $0x88] sm:$0xff]
  %v64 = vld [vmem:[#allocation2 + $0x90] sm:$0xff]
  %v65 = vld [vmem:[#allocation2 + $0x98] sm:$0xff]
  %v66 = vld [vmem:[#allocation2 + $0xa0] sm:$0xff]
  %v67 = vld [vmem:[%s0] sm:$0xf]
  %v68 = vld [vmem:[%s0 + $0x4] sm:$0xf]
  %v69 = vld [vmem:[%s0 + $0x8] sm:$0xf]
  %v70 = vld [vmem:[%s0 + $0xc] sm:$0xf]
  %v71 = vld [vmem:[%s0 + $0x10] sm:$0xf]
  %v72 = vld [vmem:[%s0 + $0x14] sm:$0xf]
  %v73 = vld [vmem:[%s0 + $0x18] sm:$0xf]
  %v74 = vld [vmem:[%s0 + $0x1c] sm:$0xf]
  %v75 = vld [vmem:[%s0 + $0x20] sm:$0xf]
  %v76 = vld [vmem:[%s0 + $0x24] sm:$0xf]
  %v77 = vld [vmem:[%s0 + $0x28] sm:$0xf]
  %v78 = vld [vmem:[%s0 + $0x2c] sm:$0xf]
  %v79 = vld [vmem:[%s0 + $0x30] sm:$0xf]
  %v80 = vld [vmem:[%s0 + $0x34] sm:$0xf]
  %v81 = vld [vmem:[%s0 + $0x38] sm:$0xf]
  %v82 = vld [vmem:[%s0 + $0x3c] sm:$0xf]
  %v83 = vld [vmem:[%s0 + $0x40] sm:$0xf]
  %v84 = vld [vmem:[%s0 + $0x44] sm:$0xf]
  %v85 = vld [vmem:[%s0 + $0x48] sm:$0xf]
  %v86 = vld [vmem:[%s0 + $0x4c] sm:$0xf]
  %v87 = vld [vmem:[%s0 + $0x50] sm:$0xf]
  %v88 = vld [vmem:[%s1] sm:$0xf]
  %v89 = vld [vmem:[%s1 + $0x4] sm:$0xf]
  %v90 = vld [vmem:[%s1 + $0x8] sm:$0xf]
  %v91 = vld [vmem:[%s1 + $0xc] sm:$0xf]
  %v92 = vld [vmem:[%s1 + $0x10] sm:$0xf]
  %v93 = vld [vmem:[%s1 + $0x14] sm:$0xf]
  %v94 = vld [vmem:[%s1 + $0x18] sm:$0xf]
  %v95 = vld [vmem:[%s1 + $0x1c] sm:$0xf]
  %v96 = vld [vmem:[%s1 + $0x20] sm:$0xf]
  %v97 = vld [vmem:[%s1 + $0x24] sm:$0xf]
  %v98 = vld [vmem:[%s1 + $0x28] sm:$0xf]
  %v99 = vld [vmem:[%s1 + $0x2c] sm:$0xf]
  %v100 = vld [vmem:[%s1 + $0x30] sm:$0xf]
  %v101 = vld [vmem:[%s1 + $0x34] sm:$0xf]
  %v102 = vld [vmem:[%s1 + $0x38] sm:$0xf]
  %v103 = vld [vmem:[%s1 + $0x3c] sm:$0xf]
  %v125 = vunpack.c.l.b16 %v67
  %v126 = vunpack.c.l.b16 %v68
  %v127 = vunpack.c.l.b16 %v69
  %v128 = vunpack.c.l.b16 %v70
  %v129 = vunpack.c.l.b16 %v71
  %v130 = vunpack.c.l.b16 %v72
  %v131 = vunpack.c.l.b16 %v73
  %v132 = vunpack.c.l.b16 %v74
  %v133 = vunpack.c.l.b16 %v75
  %v134 = vunpack.c.l.b16 %v76
  %v135 = vunpack.c.l.b16 %v77
  %v136 = vunpack.c.l.b16 %v78
  %v137 = vunpack.c.l.b16 %v79
  %v138 = vunpack.c.l.b16 %v80
  %v139 = vunpack.c.l.b16 %v81
  %v140 = vunpack.c.l.b16 %v82
  %v141 = vunpack.c.l.b16 %v83
  %v142 = vunpack.c.l.b16 %v84
  %v143 = vunpack.c.l.b16 %v85
  %v144 = vunpack.c.l.b16 %v86
  %v145 = vunpack.c.l.b16 %v87
  %v146 = vpack.c.b16 %v126, %v125
  %v147 = vpack.c.b16 %v128, %v127
  %v148 = vpack.c.b16 %v130, %v129
  %v149 = vpack.c.b16 %v132, %v131
  %v150 = vpack.c.b16 %v134, %v133
  %v151 = vpack.c.b16 %v136, %v135
  %v152 = vpack.c.b16 %v138, %v137
  %v153 = vpack.c.b16 %v140, %v139
  %v154 = vpack.c.b16 %v142, %v141
  %v155 = vpack.c.b16 %v144, %v143
  %v156 = vpack.c.b16 %v145, %v145
  %v184 = vunpack.c.l.b16 %v88
  %v185 = vunpack.c.l.b16 %v89
  %v186 = vunpack.c.l.b16 %v90
  %v187 = vunpack.c.l.b16 %v91
  %v188 = vunpack.c.l.b16 %v92
  %v189 = vunpack.c.l.b16 %v93
  %v190 = vunpack.c.l.b16 %v94
  %v191 = vunpack.c.l.b16 %v95
  %v192 = vunpack.c.l.b16 %v96
  %v193 = vunpack.c.l.b16 %v97
  %v194 = vunpack.c.l.b16 %v98
  %v195 = vunpack.c.l.b16 %v99
  %v196 = vunpack.c.l.b16 %v100
  %v197 = vunpack.c.l.b16 %v101
  %v198 = vunpack.c.l.b16 %v102
  %v199 = vunpack.c.l.b16 %v103
  %v200 = vpack.c.b16 %v185, %v184
  %v201 = vpack.c.b16 %v187, %v186
  %v202 = vpack.c.b16 %v189, %v188
  %v203 = vpack.c.b16 %v191, %v190
  %v204 = vpack.c.b16 %v193, %v192
  %v205 = vpack.c.b16 %v195, %v194
  %v206 = vpack.c.b16 %v197, %v196
  %v207 = vpack.c.b16 %v199, %v198
  %216 = vmatprep.subr.bf16.mxu0 0
  %217 = vmatpush1.bf16.msra.mxu0 %v200
  %218 = vmatprep.subr.bf16.mxu0 0
  %219 = vmatpush1.bf16.msra.mxu0 %v201
  %220 = vmatprep.subr.bf16.mxu0 0
  %221 = vmatpush1.bf16.msra.mxu0 %v202
  %222 = vmatprep.subr.bf16.mxu0 0
  %223 = vmatpush1.bf16.msra.mxu0 %v203
  %224 = vmatprep.subr.bf16.mxu0 0
  %225 = vmatpush1.bf16.msra.mxu0 %v204
  %226 = vmatprep.subr.bf16.mxu0 0
  %227 = vmatpush1.bf16.msra.mxu0 %v205
  %228 = vmatprep.subr.bf16.mxu0 0
  %229 = vmatpush1.bf16.msra.mxu0 %v206
  %230 = vmatprep.subr.bf16.mxu0 0
  %231 = vmatpush1.bf16.msra.mxu0 %v207
  %232 = vmatprep.subr.bf16.mxu0 0
  %233 = vmatpush1.bf16.msra.mxu0 0
  %234 = vmatprep.subr.bf16.mxu0 0
  %235 = vmatpush1.bf16.msra.mxu0 0
  %236 = vmatprep.subr.bf16.mxu0 0
  %237 = vmatpush1.bf16.msra.mxu0 0
  %238 = vmatprep.subr.bf16.mxu0 0
  %239 = vmatpush1.bf16.msra.mxu0 0
  %240 = vmatprep.subr.bf16.mxu0 0
  %241 = vmatpush1.bf16.msra.mxu0 0
  %242 = vmatprep.subr.bf16.mxu0 0
  %243 = vmatpush1.bf16.msra.mxu0 0
  %244 = vmatprep.subr.bf16.mxu0 0
  %245 = vmatpush1.bf16.msra.mxu0 0
  %246 = vmatprep.subr.bf16.mxu0 0
  %247 = vmatpush1.bf16.msra.mxu0 0
  %248 = vmatprep.mubr.bf16.mxu0 0
  %249 = vmatmul.mubr.bf16.gmra.mrb[0].mxu0 %v146
  %v250 = vpop.f32.mrb[0].mxu0
  %v251 = vadd.f32 0.0, %v250
  %v252 = vpop.f32.mrb[0].mxu0
  %v253 = vpop.f32.mrb[0].mxu0
  %v254 = vadd.f32 0.0, %v253
  %v255 = vpop.f32.mrb[0].mxu0
  %256 = vmatprep.mubr.bf16.mxu0 0
  %257 = vmatmul.mubr.bf16.gmra.mrb[0].mxu0 %v147
  %v258 = vpop.f32.mrb[0].mxu0
  %v259 = vadd.f32 0.0, %v258
  %v260 = vpop.f32.mrb[0].mxu0
  %v261 = vpop.f32.mrb[0].mxu0
  %v262 = vadd.f32 0.0, %v261
  %v263 = vpop.f32.mrb[0].mxu0
  %264 = vmatprep.mubr.bf16.mxu0 0
  %265 = vmatmul.mubr.bf16.gmra.mrb[0].mxu0 %v148
  %v266 = vpop.f32.mrb[0].mxu0
  %v267 = vadd.f32 0.0, %v266
  %v268 = vpop.f32.mrb[0].mxu0
  %v269 = vpop.f32.mrb[0].mxu0
  %v270 = vadd.f32 0.0, %v269
  %v271 = vpop.f32.mrb[0].mxu0
  %272 = vmatprep.mubr.bf16.mxu0 0
  %273 = vmatmul.mubr.bf16.gmra.mrb[0].mxu0 %v149
  %v274 = vpop.f32.mrb[0].mxu0
  %v275 = vadd.f32 0.0, %v274
  %v276 = vpop.f32.mrb[0].mxu0
  %v277 = vpop.f32.mrb[0].mxu0
  %v278 = vadd.f32 0.0, %v277
  %v279 = vpop.f32.mrb[0].mxu0
  %280 = vmatprep.mubr.bf16.mxu0 0
  %281 = vmatmul.mubr.bf16.gmra.mrb[0].mxu0 %v150
  %v282 = vpop.f32.mrb[0].mxu0
  %v283 = vadd.f32 0.0, %v282
  %v284 = vpop.f32.mrb[0].mxu0
  %v285 = vpop.f32.mrb[0].mxu0
  %v286 = vadd.f32 0.0, %v285
  %v287 = vpop.f32.mrb[0].mxu0
  %288 = vmatprep.mubr.bf16.mxu0 0
  %289 = vmatmul.mubr.bf16.gmra.mrb[0].mxu0 %v151
  %v290 = vpop.f32.mrb[0].mxu0
  %v291 = vadd.f32 0.0, %v290
  %v292 = vpop.f32.mrb[0].mxu0
  %v293 = vpop.f32.mrb[0].mxu0
  %v294 = vadd.f32 0.0, %v293
  %v295 = vpop.f32.mrb[0].mxu0
  %296 = vmatprep.mubr.bf16.mxu0 0
  %297 = vmatmul.mubr.bf16.gmra.mrb[0].mxu0 %v152
  %v298 = vpop.f32.mrb[0].mxu0
  %v299 = vadd.f32 0.0, %v298
  %v300 = vpop.f32.mrb[0].mxu0
  %v301 = vpop.f32.mrb[0].mxu0
  %v302 = vadd.f32 0.0, %v301
  %v303 = vpop.f32.mrb[0].mxu0
  %304 = vmatprep.mubr.bf16.mxu0 0
  %305 = vmatmul.mubr.bf16.gmra.mrb[0].mxu0 %v153
  %v306 = vpop.f32.mrb[0].mxu0
  %v307 = vadd.f32 0.0, %v306
  %v308 = vpop.f32.mrb[0].mxu0
  %v309 = vpop.f32.mrb[0].mxu0
  %v310 = vadd.f32 0.0, %v309
  %v311 = vpop.f32.mrb[0].mxu0
  %312 = vmatprep.mubr.bf16.mxu0 0
  %313 = vmatmul.mubr.bf16.gmra.mrb[0].mxu0 %v154
  %v314 = vpop.f32.mrb[0].mxu0
  %v315 = vadd.f32 0.0, %v314
  %v316 = vpop.f32.mrb[0].mxu0
  %v317 = vpop.f32.mrb[0].mxu0
  %v318 = vadd.f32 0.0, %v317
  %v319 = vpop.f32.mrb[0].mxu0
  %320 = vmatprep.mubr.bf16.mxu0 0
  %321 = vmatmul.mubr.bf16.gmra.mrb[0].mxu0 %v155
  %v322 = vpop.f32.mrb[0].mxu0
  %v323 = vadd.f32 0.0, %v322
  %v324 = vpop.f32.mrb[0].mxu0
  %v325 = vpop.f32.mrb[0].mxu0
  %v326 = vadd.f32 0.0, %v325
  %v327 = vpop.f32.mrb[0].mxu0
  %328 = vmatprep.mubr.bf16.mxu0 0
  %329 = vmatmul.mubr.bf16.gmra.mrb[0].mxu0 %v156
  %v330 = vpop.f32.mrb[0].mxu0
  %v331 = vadd.f32 0.0, %v330
  %v332 = vpop.f32.mrb[0].mxu0
  %v333 = vpop.f32.mrb[0].mxu0
  %v334 = vpop.f32.mrb[0].mxu0
  %335 = vdwg.mxu0
  %v336 = vadd.f32 %v46, %v251
  %v337 = vadd.f32 %v47, %v254
  %v338 = vadd.f32 %v48, %v259
  %v339 = vadd.f32 %v49, %v262
  %v340 = vadd.f32 %v50, %v267
  %v341 = vadd.f32 %v51, %v270
  %v342 = vadd.f32 %v52, %v275
  %v343 = vadd.f32 %v53, %v278
  %v344 = vadd.f32 %v54, %v283
  %v345 = vadd.f32 %v55, %v286
  %v346 = vadd.f32 %v56, %v291
  %v347 = vadd.f32 %v57, %v294
  %v348 = vadd.f32 %v58, %v299
  %v349 = vadd.f32 %v59, %v302
  %v350 = vadd.f32 %v60, %v307
  %v351 = vadd.f32 %v61, %v310
  %v352 = vadd.f32 %v62, %v315
  %v353 = vadd.f32 %v63, %v318
  %v354 = vadd.f32 %v64, %v323
  %v355 = vadd.f32 %v65, %v326
  %v356 = vadd.f32 %v66, %v331
  %357 = vst [vmem:[#allocation2] sm:$0xff] %v336
  %358 = vst [vmem:[#allocation2 + $0x8] sm:$0xff] %v337
  %359 = vst [vmem:[#allocation2 + $0x10] sm:$0xff] %v338
  %360 = vst [vmem:[#allocation2 + $0x18] sm:$0xff] %v339
  %361 = vst [vmem:[#allocation2 + $0x20] sm:$0xff] %v340
  %362 = vst [vmem:[#allocation2 + $0x28] sm:$0xff] %v341
  %363 = vst [vmem:[#allocation2 + $0x30] sm:$0xff] %v342
  %364 = vst [vmem:[#allocation2 + $0x38] sm:$0xff] %v343
  %365 = vst [vmem:[#allocation2 + $0x40] sm:$0xff] %v344
  %366 = vst [vmem:[#allocation2 + $0x48] sm:$0xff] %v345
  %367 = vst [vmem:[#allocation2 + $0x50] sm:$0xff] %v346
  %368 = vst [vmem:[#allocation2 + $0x58] sm:$0xff] %v347
  %369 = vst [vmem:[#allocation2 + $0x60] sm:$0xff] %v348
  %370 = vst [vmem:[#allocation2 + $0x68] sm:$0xff] %v349
  %371 = vst [vmem:[#allocation2 + $0x70] sm:$0xff] %v350
  %372 = vst [vmem:[#allocation2 + $0x78] sm:$0xff] %v351
  %373 = vst [vmem:[#allocation2 + $0x80] sm:$0xff] %v352
  %374 = vst [vmem:[#allocation2 + $0x88] sm:$0xff] %v353
  %375 = vst [vmem:[#allocation2 + $0x90] sm:$0xff] %v354
  %376 = vst [vmem:[#allocation2 + $0x98] sm:$0xff] %v355
  %377 = vst [vmem:[#allocation2 + $0xa0] sm:$0xff] %v356
  // Predicated region
  $region22: #{generator_forward.13} parent=0 // pred_check
    %p378 = pneg %p21
  $region23: #{generator_forward.13} parent=0 // pred_check_branch
    %380 = sbr.rel (%p378) target = $region25
  $region24: #{generator_forward.13} parent=0 // pred_region
    %v381 = vld [vmem:[#allocation2] sm:$0xff]
    %v382 = vld [vmem:[#allocation2 + $0x8] sm:$0xff]
    %v383 = vld [vmem:[#allocation2 + $0x10] sm:$0xff]
    %v384 = vld [vmem:[#allocation2 + $0x18] sm:$0xff]
    %v385 = vld [vmem:[#allocation2 + $0x20] sm:$0xff]
    %v386 = vld [vmem:[#allocation2 + $0x28] sm:$0xff]
    %v387 = vld [vmem:[#allocation2 + $0x30] sm:$0xff]
    %v388 = vld [vmem:[#allocation2 + $0x38] sm:$0xff]
    %v389 = vld [vmem:[#allocation2 + $0x40] sm:$0xff]
    %v390 = vld [vmem:[#allocation2 + $0x48] sm:$0xff]
    %v391 = vld [vmem:[#allocation2 + $0x50] sm:$0xff]
    %v392 = vld [vmem:[#allocation2 + $0x58] sm:$0xff]
    %v393 = vld [vmem:[#allocation2 + $0x60] sm:$0xff]
    %v394 = vld [vmem:[#allocation2 + $0x68] sm:$0xff]
    %v395 = vld [vmem:[#allocation2 + $0x70] sm:$0xff]
    %v396 = vld [vmem:[#allocation2 + $0x78] sm:$0xff]
    %v397 = vld [vmem:[#allocation2 + $0x80] sm:$0xff]
    %v398 = vld [vmem:[#allocation2 + $0x88] sm:$0xff]
    %v399 = vld [vmem:[#allocation2 + $0x90] sm:$0xff]
    %v400 = vld [vmem:[#allocation2 + $0x98] sm:$0xff]
    %v401 = vld [vmem:[#allocation2 + $0xa0] sm:$0xff]
    %402 = vst [vmem:[%s4] sm:$0xff] %v381
    %403 = vst [vmem:[%s4 + $0x8] sm:$0xff] %v382
    %404 = vst [vmem:[%s4 + $0x10] sm:$0xff] %v383
    %405 = vst [vmem:[%s4 + $0x18] sm:$0xff] %v384
    %406 = vst [vmem:[%s4 + $0x20] sm:$0xff] %v385
    %407 = vst [vmem:[%s4 + $0x28] sm:$0xff] %v386
    %408 = vst [vmem:[%s4 + $0x30] sm:$0xff] %v387
    %409 = vst [vmem:[%s4 + $0x38] sm:$0xff] %v388
    %410 = vst [vmem:[%s4 + $0x40] sm:$0xff] %v389
    %411 = vst [vmem:[%s4 + $0x48] sm:$0xff] %v390
    %412 = vst [vmem:[%s4 + $0x50] sm:$0xff] %v391
    %413 = vst [vmem:[%s4 + $0x58] sm:$0xff] %v392
    %414 = vst [vmem:[%s4 + $0x60] sm:$0xff] %v393
    %415 = vst [vmem:[%s4 + $0x68] sm:$0xff] %v394
    %416 = vst [vmem:[%s4 + $0x70] sm:$0xff] %v395
    %417 = vst [vmem:[%s4 + $0x78] sm:$0xff] %v396
    %418 = vst [vmem:[%s4 + $0x80] sm:$0xff] %v397
    %419 = vst [vmem:[%s4 + $0x88] sm:$0xff] %v398
    %420 = vst [vmem:[%s4 + $0x90] sm:$0xff] %v399
    %421 = vst [vmem:[%s4 + $0x98] sm:$0xff] %v400
    %422 = vst [vmem:[%s4 + $0xa0] sm:$0xff] %v401
    %v423 = vld [vmem:[%s2] sm:$0xff]
    %v424 = vld [vmem:[%s2 + $0x8] sm:$0xff]
    %v425 = vld [vmem:[%s2 + $0x10] sm:$0xff]
    %v426 = vld [vmem:[%s2 + $0x18] sm:$0xff]
    %v427 = vld [vmem:[%s2 + $0x20] sm:$0xff]
    %v428 = vld [vmem:[%s2 + $0x28] sm:$0xff]
    %v429 = vld [vmem:[%s2 + $0x30] sm:$0xff]
    %v430 = vld [vmem:[%s2 + $0x38] sm:$0xff]
    %v431 = vld [vmem:[%s2 + $0x40] sm:$0xff]
    %v432 = vld [vmem:[%s2 + $0x48] sm:$0xff]
    %v433 = vld [vmem:[%s2 + $0x50] sm:$0xff]
    %v434 = vld [vmem:[%s2 + $0x58] sm:$0xff]
    %v435 = vld [vmem:[%s2 + $0x60] sm:$0xff]
    %v436 = vld [vmem:[%s2 + $0x68] sm:$0xff]
    %v437 = vld [vmem:[%s2 + $0x70] sm:$0xff]
    %v438 = vld [vmem:[%s2 + $0x78] sm:$0xff]
    %v439 = vld [vmem:[%s2 + $0x80] sm:$0xff]
    %v440 = vld [vmem:[%s2 + $0x88] sm:$0xff]
    %v441 = vld [vmem:[%s2 + $0x90] sm:$0xff]
    %v442 = vld [vmem:[%s2 + $0x98] sm:$0xff]
    %v443 = vld [vmem:[%s2 + $0xa0] sm:$0xff]
    %v444 = vld [vmem:[%s3] sm:$0xf]
    %446 = vset.pattern.permute.xlu0 0
    %447 = vperm.xlu0 %446, %v423
    %v448 = vpop.permute.xlu0 %447
    %451 = vset.pattern.permute.xlu0 0
    %452 = vperm.xlu0 %451, %v424
    %v453 = vpop.permute.xlu0 %452
    %456 = vset.pattern.permute.xlu0 0
    %457 = vperm.xlu0 %456, %v425
    %v458 = vpop.permute.xlu0 %457
    %461 = vset.pattern.permute.xlu0 0
    %462 = vperm.xlu0 %461, %v426
    %v463 = vpop.permute.xlu0 %462
    %466 = vset.pattern.permute.xlu0 0
    %467 = vperm.xlu0 %466, %v427
    %v468 = vpop.permute.xlu0 %467
    %471 = vset.pattern.permute.xlu0 0
    %472 = vperm.xlu0 %471, %v428
    %v473 = vpop.permute.xlu0 %472
    %476 = vset.pattern.permute.xlu0 0
    %477 = vperm.xlu0 %476, %v429
    %v478 = vpop.permute.xlu0 %477
    %481 = vset.pattern.permute.xlu0 0
    %482 = vperm.xlu0 %481, %v430
    %v483 = vpop.permute.xlu0 %482
    %486 = vset.pattern.permute.xlu0 0
    %487 = vperm.xlu0 %486, %v431
    %v488 = vpop.permute.xlu0 %487
    %491 = vset.pattern.permute.xlu0 0
    %492 = vperm.xlu0 %491, %v432
    %v493 = vpop.permute.xlu0 %492
    %496 = vset.pattern.permute.xlu0 0
    %497 = vperm.xlu0 %496, %v433
    %v498 = vpop.permute.xlu0 %497
    %501 = vset.pattern.permute.xlu0 0
    %502 = vperm.xlu0 %501, %v434
    %v503 = vpop.permute.xlu0 %502
    %506 = vset.pattern.permute.xlu0 0
    %507 = vperm.xlu0 %506, %v435
    %v508 = vpop.permute.xlu0 %507
    %511 = vset.pattern.permute.xlu0 0
    %512 = vperm.xlu0 %511, %v436
    %v513 = vpop.permute.xlu0 %512
    %516 = vset.pattern.permute.xlu0 0
    %517 = vperm.xlu0 %516, %v437
    %v518 = vpop.permute.xlu0 %517
    %521 = vset.pattern.permute.xlu0 0
    %522 = vperm.xlu0 %521, %v438
    %v523 = vpop.permute.xlu0 %522
    %526 = vset.pattern.permute.xlu0 0
    %527 = vperm.xlu0 %526, %v439
    %v528 = vpop.permute.xlu0 %527
    %531 = vset.pattern.permute.xlu0 0
    %532 = vperm.xlu0 %531, %v440
    %v533 = vpop.permute.xlu0 %532
    %536 = vset.pattern.permute.xlu0 0
    %537 = vperm.xlu0 %536, %v441
    %v538 = vpop.permute.xlu0 %537
    %541 = vset.pattern.permute.xlu0 0
    %542 = vperm.xlu0 %541, %v442
    %v543 = vpop.permute.xlu0 %542
    %546 = vset.pattern.permute.xlu0 0
    %547 = vperm.xlu0 %546, %v443
    %v548 = vpop.permute.xlu0 %547
    %v550 = vlaneseq
    %v551 = vshrl.u32 %v550, 7
    %v552 = vsub.s32 0, %v551
    %v553 = vrot.slane %v444, %v552
    %v554 = vmul.f32 %v448, %v553
    %v555 = vmul.f32 %v453, %v553
    %v556 = vmul.f32 %v458, %v553
    %v557 = vmul.f32 %v463, %v553
    %v558 = vmul.f32 %v468, %v553
    %v559 = vmul.f32 %v473, %v553
    %v560 = vmul.f32 %v478, %v553
    %v561 = vmul.f32 %v483, %v553
    %v562 = vmul.f32 %v488, %v553
    %v563 = vmul.f32 %v493, %v553
    %v564 = vmul.f32 %v498, %v553
    %v565 = vmul.f32 %v503, %v553
    %v566 = vmul.f32 %v508, %v553
    %v567 = vmul.f32 %v513, %v553
    %v568 = vmul.f32 %v518, %v553
    %v569 = vmul.f32 %v523, %v553
    %v570 = vmul.f32 %v528, %v553
    %v571 = vmul.f32 %v533, %v553
    %v572 = vmul.f32 %v538, %v553
    %v573 = vmul.f32 %v543, %v553
    %v574 = vmul.f32 %v548, %v553
    %575 = vset.pattern.permute.xlu0 1
    %576 = vperm.xlu0 %575, %v423
    %v577 = vpop.permute.xlu0 %576
    %579 = vset.pattern.permute.xlu0 1
    %580 = vperm.xlu0 %579, %v424
    %v581 = vpop.permute.xlu0 %580
    %583 = vset.pattern.permute.xlu0 1
    %584 = vperm.xlu0 %583, %v425
    %v585 = vpop.permute.xlu0 %584
    %587 = vset.pattern.permute.xlu0 1
    %588 = vperm.xlu0 %587, %v426
    %v589 = vpop.permute.xlu0 %588
    %591 = vset.pattern.permute.xlu0 1
    %592 = vperm.xlu0 %591, %v427
    %v593 = vpop.permute.xlu0 %592
    %595 = vset.pattern.permute.xlu0 1
    %596 = vperm.xlu0 %595, %v428
    %v597 = vpop.permute.xlu0 %596
    %599 = vset.pattern.permute.xlu0 1
    %600 = vperm.xlu0 %599, %v429
    %v601 = vpop.permute.xlu0 %600
    %603 = vset.pattern.permute.xlu0 1
    %604 = vperm.xlu0 %603, %v430
    %v605 = vpop.permute.xlu0 %604
    %607 = vset.pattern.permute.xlu0 1
    %608 = vperm.xlu0 %607, %v431
    %v609 = vpop.permute.xlu0 %608
    %611 = vset.pattern.permute.xlu0 1
    %612 = vperm.xlu0 %611, %v432
    %v613 = vpop.permute.xlu0 %612
    %615 = vset.pattern.permute.xlu0 1
    %616 = vperm.xlu0 %615, %v433
    %v617 = vpop.permute.xlu0 %616
    %619 = vset.pattern.permute.xlu0 1
    %620 = vperm.xlu0 %619, %v434
    %v621 = vpop.permute.xlu0 %620
    %623 = vset.pattern.permute.xlu0 1
    %624 = vperm.xlu0 %623, %v435
    %v625 = vpop.permute.xlu0 %624
    %627 = vset.pattern.permute.xlu0 1
    %628 = vperm.xlu0 %627, %v436
    %v629 = vpop.permute.xlu0 %628
    %631 = vset.pattern.permute.xlu0 1
    %632 = vperm.xlu0 %631, %v437
    %v633 = vpop.permute.xlu0 %632
    %635 = vset.pattern.permute.xlu0 1
    %636 = vperm.xlu0 %635, %v438
    %v637 = vpop.permute.xlu0 %636
    %639 = vset.pattern.permute.xlu0 1
    %640 = vperm.xlu0 %639, %v439
    %v641 = vpop.permute.xlu0 %640
    %643 = vset.pattern.permute.xlu0 1
    %644 = vperm.xlu0 %643, %v440
    %v645 = vpop.permute.xlu0 %644
    %647 = vset.pattern.permute.xlu0 1
    %648 = vperm.xlu0 %647, %v441
    %v649 = vpop.permute.xlu0 %648
    %651 = vset.pattern.permute.xlu0 1
    %652 = vperm.xlu0 %651, %v442
    %v653 = vpop.permute.xlu0 %652
    %655 = vset.pattern.permute.xlu0 1
    %656 = vperm.xlu0 %655, %v443
    %v657 = vpop.permute.xlu0 %656
    %v659 = vlaneseq
    %v660 = vshrl.u32 %v659, 7
    %v661 = vsub.s32 1, %v660
    %v662 = vrot.slane %v444, %v661
    %v663 = vmul.f32 %v577, %v662
    %v664 = vmul.f32 %v581, %v662
    %v665 = vmul.f32 %v585, %v662
    %v666 = vmul.f32 %v589, %v662
    %v667 = vmul.f32 %v593, %v662
    %v668 = vmul.f32 %v597, %v662
    %v669 = vmul.f32 %v601, %v662
    %v670 = vmul.f32 %v605, %v662
    %v671 = vmul.f32 %v609, %v662
    %v672 = vmul.f32 %v613, %v662
    %v673 = vmul.f32 %v617, %v662
    %v674 = vmul.f32 %v621, %v662
    %v675 = vmul.f32 %v625, %v662
    %v676 = vmul.f32 %v629, %v662
    %v677 = vmul.f32 %v633, %v662
    %v678 = vmul.f32 %v637, %v662
    %v679 = vmul.f32 %v641, %v662
    %v680 = vmul.f32 %v645, %v662
    %v681 = vmul.f32 %v649, %v662
    %v682 = vmul.f32 %v653, %v662
    %v683 = vmul.f32 %v657, %v662
    %v684 = vadd.f32 %v554, %v663
    %v685 = vadd.f32 %v555, %v664
    %v686 = vadd.f32 %v556, %v665
    %v687 = vadd.f32 %v557, %v666
    %v688 = vadd.f32 %v558, %v667
    %v689 = vadd.f32 %v559, %v668
    %v690 = vadd.f32 %v560, %v669
    %v691 = vadd.f32 %v561, %v670
    %v692 = vadd.f32 %v562, %v671
    %v693 = vadd.f32 %v563, %v672
    %v694 = vadd.f32 %v564, %v673
    %v695 = vadd.f32 %v565, %v674
    %v696 = vadd.f32 %v566, %v675
    %v697 = vadd.f32 %v567, %v676
    %v698 = vadd.f32 %v568, %v677
    %v699 = vadd.f32 %v569, %v678
    %v700 = vadd.f32 %v570, %v679
    %v701 = vadd.f32 %v571, %v680
    %v702 = vadd.f32 %v572, %v681
    %v703 = vadd.f32 %v573, %v682
    %v704 = vadd.f32 %v574, %v683
    %705 = vset.pattern.permute.xlu0 2
    %706 = vperm.xlu0 %705, %v423
    %v707 = vpop.permute.xlu0 %706
    %709 = vset.pattern.permute.xlu0 2
    %710 = vperm.xlu0 %709, %v424
    %v711 = vpop.permute.xlu0 %710
    %713 = vset.pattern.permute.xlu0 2
    %714 = vperm.xlu0 %713, %v425
    %v715 = vpop.permute.xlu0 %714
    %717 = vset.pattern.permute.xlu0 2
    %718 = vperm.xlu0 %717, %v426
    %v719 = vpop.permute.xlu0 %718
    %721 = vset.pattern.permute.xlu0 2
    %722 = vperm.xlu0 %721, %v427
    %v723 = vpop.permute.xlu0 %722
    %725 = vset.pattern.permute.xlu0 2
    %726 = vperm.xlu0 %725, %v428
    %v727 = vpop.permute.xlu0 %726
    %729 = vset.pattern.permute.xlu0 2
    %730 = vperm.xlu0 %729, %v429
    %v731 = vpop.permute.xlu0 %730
    %733 = vset.pattern.permute.xlu0 2
    %734 = vperm.xlu0 %733, %v430
    %v735 = vpop.permute.xlu0 %734
    %737 = vset.pattern.permute.xlu0 2
    %738 = vperm.xlu0 %737, %v431
    %v739 = vpop.permute.xlu0 %738
    %741 = vset.pattern.permute.xlu0 2
    %742 = vperm.xlu0 %741, %v432
    %v743 = vpop.permute.xlu0 %742
    %745 = vset.pattern.permute.xlu0 2
    %746 = vperm.xlu0 %745, %v433
    %v747 = vpop.permute.xlu0 %746
    %749 = vset.pattern.permute.xlu0 2
    %750 = vperm.xlu0 %749, %v434
    %v751 = vpop.permute.xlu0 %750
    %753 = vset.pattern.permute.xlu0 2
    %754 = vperm.xlu0 %753, %v435
    %v755 = vpop.permute.xlu0 %754
    %757 = vset.pattern.permute.xlu0 2
    %758 = vperm.xlu0 %757, %v436
    %v759 = vpop.permute.xlu0 %758
    %761 = vset.pattern.permute.xlu0 2
    %762 = vperm.xlu0 %761, %v437
    %v763 = vpop.permute.xlu0 %762
    %765 = vset.pattern.permute.xlu0 2
    %766 = vperm.xlu0 %765, %v438
    %v767 = vpop.permute.xlu0 %766
    %769 = vset.pattern.permute.xlu0 2
    %770 = vperm.xlu0 %769, %v439
    %v771 = vpop.permute.xlu0 %770
    %773 = vset.pattern.permute.xlu0 2
    %774 = vperm.xlu0 %773, %v440
    %v775 = vpop.permute.xlu0 %774
    %777 = vset.pattern.permute.xlu0 2
    %778 = vperm.xlu0 %777, %v441
    %v779 = vpop.permute.xlu0 %778
    %781 = vset.pattern.permute.xlu0 2
    %782 = vperm.xlu0 %781, %v442
    %v783 = vpop.permute.xlu0 %782
    %785 = vset.pattern.permute.xlu0 2
    %786 = vperm.xlu0 %785, %v443
    %v787 = vpop.permute.xlu0 %786
    %v789 = vlaneseq
    %v790 = vshrl.u32 %v789, 7
    %v791 = vsub.s32 2, %v790
    %v792 = vrot.slane %v444, %v791
    %v793 = vmul.f32 %v707, %v792
    %v794 = vmul.f32 %v711, %v792
    %v795 = vmul.f32 %v715, %v792
    %v796 = vmul.f32 %v719, %v792
    %v797 = vmul.f32 %v723, %v792
    %v798 = vmul.f32 %v727, %v792
    %v799 = vmul.f32 %v731, %v792
    %v800 = vmul.f32 %v735, %v792
    %v801 = vmul.f32 %v739, %v792
    %v802 = vmul.f32 %v743, %v792
    %v803 = vmul.f32 %v747, %v792
    %v804 = vmul.f32 %v751, %v792
    %v805 = vmul.f32 %v755, %v792
    %v806 = vmul.f32 %v759, %v792
    %v807 = vmul.f32 %v763, %v792
    %v808 = vmul.f32 %v767, %v792
    %v809 = vmul.f32 %v771, %v792
    %v810 = vmul.f32 %v775, %v792
    %v811 = vmul.f32 %v779, %v792
    %v812 = vmul.f32 %v783, %v792
    %v813 = vmul.f32 %v787, %v792
    %v814 = vadd.f32 %v684, %v793
    %v815 = vadd.f32 %v685, %v794
    %v816 = vadd.f32 %v686, %v795
    %v817 = vadd.f32 %v687, %v796
    %v818 = vadd.f32 %v688, %v797
    %v819 = vadd.f32 %v689, %v798
    %v820 = vadd.f32 %v690, %v799
    %v821 = vadd.f32 %v691, %v800
    %v822 = vadd.f32 %v692, %v801
    %v823 = vadd.f32 %v693, %v802
    %v824 = vadd.f32 %v694, %v803
    %v825 = vadd.f32 %v695, %v804
    %v826 = vadd.f32 %v696, %v805
    %v827 = vadd.f32 %v697, %v806
    %v828 = vadd.f32 %v698, %v807
    %v829 = vadd.f32 %v699, %v808
    %v830 = vadd.f32 %v700, %v809
    %v831 = vadd.f32 %v701, %v810
    %v832 = vadd.f32 %v702, %v811
    %v833 = vadd.f32 %v703, %v812
    %v834 = vadd.f32 %v704, %v813
    %835 = vset.pattern.permute.xlu0 3
    %836 = vperm.xlu0 %835, %v423
    %v837 = vpop.permute.xlu0 %836
    %839 = vset.pattern.permute.xlu0 3
    %840 = vperm.xlu0 %839, %v424
    %v841 = vpop.permute.xlu0 %840
    %843 = vset.pattern.permute.xlu0 3
    %844 = vperm.xlu0 %843, %v425
    %v845 = vpop.permute.xlu0 %844
    %847 = vset.pattern.permute.xlu0 3
    %848 = vperm.xlu0 %847, %v426
    %v849 = vpop.permute.xlu0 %848
    %851 = vset.pattern.permute.xlu0 3
    %852 = vperm.xlu0 %851, %v427
    %v853 = vpop.permute.xlu0 %852
    %855 = vset.pattern.permute.xlu0 3
    %856 = vperm.xlu0 %855, %v428
    %v857 = vpop.permute.xlu0 %856
    %859 = vset.pattern.permute.xlu0 3
    %860 = vperm.xlu0 %859, %v429
    %v861 = vpop.permute.xlu0 %860
    %863 = vset.pattern.permute.xlu0 3
    %864 = vperm.xlu0 %863, %v430
    %v865 = vpop.permute.xlu0 %864
    %867 = vset.pattern.permute.xlu0 3
    %868 = vperm.xlu0 %867, %v431
    %v869 = vpop.permute.xlu0 %868
    %871 = vset.pattern.permute.xlu0 3
    %872 = vperm.xlu0 %871, %v432
    %v873 = vpop.permute.xlu0 %872
    %875 = vset.pattern.permute.xlu0 3
    %876 = vperm.xlu0 %875, %v433
    %v877 = vpop.permute.xlu0 %876
    %879 = vset.pattern.permute.xlu0 3
    %880 = vperm.xlu0 %879, %v434
    %v881 = vpop.permute.xlu0 %880
    %883 = vset.pattern.permute.xlu0 3
    %884 = vperm.xlu0 %883, %v435
    %v885 = vpop.permute.xlu0 %884
    %887 = vset.pattern.permute.xlu0 3
    %888 = vperm.xlu0 %887, %v436
    %v889 = vpop.permute.xlu0 %888
    %891 = vset.pattern.permute.xlu0 3
    %892 = vperm.xlu0 %891, %v437
    %v893 = vpop.permute.xlu0 %892
    %895 = vset.pattern.permute.xlu0 3
    %896 = vperm.xlu0 %895, %v438
    %v897 = vpop.permute.xlu0 %896
    %899 = vset.pattern.permute.xlu0 3
    %900 = vperm.xlu0 %899, %v439
    %v901 = vpop.permute.xlu0 %900
    %903 = vset.pattern.permute.xlu0 3
    %904 = vperm.xlu0 %903, %v440
    %v905 = vpop.permute.xlu0 %904
    %907 = vset.pattern.permute.xlu0 3
    %908 = vperm.xlu0 %907, %v441
    %v909 = vpop.permute.xlu0 %908
    %911 = vset.pattern.permute.xlu0 3
    %912 = vperm.xlu0 %911, %v442
    %v913 = vpop.permute.xlu0 %912
    %915 = vset.pattern.permute.xlu0 3
    %916 = vperm.xlu0 %915, %v443
    %v917 = vpop.permute.xlu0 %916
    %v919 = vlaneseq
    %v920 = vshrl.u32 %v919, 7
    %v921 = vsub.s32 3, %v920
    %v922 = vrot.slane %v444, %v921
    %v923 = vmul.f32 %v837, %v922
    %v924 = vmul.f32 %v841, %v922
    %v925 = vmul.f32 %v845, %v922
    %v926 = vmul.f32 %v849, %v922
    %v927 = vmul.f32 %v853, %v922
    %v928 = vmul.f32 %v857, %v922
    %v929 = vmul.f32 %v861, %v922
    %v930 = vmul.f32 %v865, %v922
    %v931 = vmul.f32 %v869, %v922
    %v932 = vmul.f32 %v873, %v922
    %v933 = vmul.f32 %v877, %v922
    %v934 = vmul.f32 %v881, %v922
    %v935 = vmul.f32 %v885, %v922
    %v936 = vmul.f32 %v889, %v922
    %v937 = vmul.f32 %v893, %v922
    %v938 = vmul.f32 %v897, %v922
    %v939 = vmul.f32 %v901, %v922
    %v940 = vmul.f32 %v905, %v922
    %v941 = vmul.f32 %v909, %v922
    %v942 = vmul.f32 %v913, %v922
    %v943 = vmul.f32 %v917, %v922
    %v944 = vadd.f32 %v814, %v923
    %v945 = vadd.f32 %v815, %v924
    %v946 = vadd.f32 %v816, %v925
    %v947 = vadd.f32 %v817, %v926
    %v948 = vadd.f32 %v818, %v927
    %v949 = vadd.f32 %v819, %v928
    %v950 = vadd.f32 %v820, %v929
    %v951 = vadd.f32 %v821, %v930
    %v952 = vadd.f32 %v822, %v931
    %v953 = vadd.f32 %v823, %v932
    %v954 = vadd.f32 %v824, %v933
    %v955 = vadd.f32 %v825, %v934
    %v956 = vadd.f32 %v826, %v935
    %v957 = vadd.f32 %v827, %v936
    %v958 = vadd.f32 %v828, %v937
    %v959 = vadd.f32 %v829, %v938
    %v960 = vadd.f32 %v830, %v939
    %v961 = vadd.f32 %v831, %v940
    %v962 = vadd.f32 %v832, %v941
    %v963 = vadd.f32 %v833, %v942
    %v964 = vadd.f32 %v834, %v943
    %v965 = vmul.f32 %v381, %v944
    %v966 = vmul.f32 %v382, %v945
    %v967 = vmul.f32 %v383, %v946
    %v968 = vmul.f32 %v384, %v947
    %v969 = vmul.f32 %v385, %v948
    %v970 = vmul.f32 %v386, %v949
    %v971 = vmul.f32 %v387, %v950
    %v972 = vmul.f32 %v388, %v951
    %v973 = vmul.f32 %v389, %v952
    %v974 = vmul.f32 %v390, %v953
    %v975 = vmul.f32 %v391, %v954
    %v976 = vmul.f32 %v392, %v955
    %v977 = vmul.f32 %v393, %v956
    %v978 = vmul.f32 %v394, %v957
    %v979 = vmul.f32 %v395, %v958
    %v980 = vmul.f32 %v396, %v959
    %v981 = vmul.f32 %v397, %v960
    %v982 = vmul.f32 %v398, %v961
    %v983 = vmul.f32 %v399, %v962
    %v984 = vmul.f32 %v400, %v963
    %v985 = vmul.f32 %v401, %v964
    %986 = vst [vmem:[%s5] sm:$0xff] 0.0
    %987 = vst [vmem:[%s6] sm:$0xff] 0.0
    %v988 = vadd.f32 %v965, %v966
    %v989 = vadd.f32 %v988, %v967
    %v990 = vadd.f32 %v989, %v968
    %v991 = vadd.f32 %v990, %v969
    %v992 = vadd.f32 %v991, %v970
    %v993 = vadd.f32 %v992, %v971
    %v994 = vadd.f32 %v993, %v972
    %v995 = vadd.f32 %v994, %v973
    %v996 = vadd.f32 %v995, %v974
    %v997 = vadd.f32 %v996, %v975
    %v998 = vadd.f32 %v997, %v976
    %v999 = vadd.f32 %v998, %v977
    %v1000 = vadd.f32 %v999, %v978
    %v1001 = vadd.f32 %v1000, %v979
    %v1002 = vadd.f32 %v1001, %v980
    %v1003 = vadd.f32 %v1002, %v981
    %v1004 = vadd.f32 %v1003, %v982
    %v1005 = vadd.f32 %v1004, %v983
    %v1006 = vadd.f32 %v1005, %v984
    %v1007 = vadd.f32 %v1006, %v985
    %v1008 = vrot.slane %v1007, 4
    %v1009 = vadd.f32 %v1007, %v1008
    %v1010 = vrot.slane %v1009, 2
    %v1011 = vadd.f32 %v1009, %v1010
    %v1012 = vrot.slane %v1011, 1
    %v1013 = vadd.f32 %v1011, %v1012
    %1014 = vst [vmem:[%s5] sm:$0x1] %v1013
    %v1015 = vmul.f32 %v965, %v381
    %v1016 = vmul.f32 %v966, %v382
    %v1017 = vmul.f32 %v967, %v383
    %v1018 = vmul.f32 %v968, %v384
    %v1019 = vmul.f32 %v969, %v385
    %v1020 = vmul.f32 %v970, %v386
    %v1021 = vmul.f32 %v971, %v387
    %v1022 = vmul.f32 %v972, %v388
    %v1023 = vmul.f32 %v973, %v389
    %v1024 = vmul.f32 %v974, %v390
    %v1025 = vmul.f32 %v975, %v391
    %v1026 = vmul.f32 %v976, %v392
    %v1027 = vmul.f32 %v977, %v393
    %v1028 = vmul.f32 %v978, %v394
    %v1029 = vmul.f32 %v979, %v395
    %v1030 = vmul.f32 %v980, %v396
    %v1031 = vmul.f32 %v981, %v397
    %v1032 = vmul.f32 %v982, %v398
    %v1033 = vmul.f32 %v983, %v399
    %v1034 = vmul.f32 %v984, %v400
    %v1035 = vmul.f32 %v985, %v401
    %v1036 = vadd.f32 %v1015, %v1016
    %v1037 = vadd.f32 %v1036, %v1017
    %v1038 = vadd.f32 %v1037, %v1018
    %v1039 = vadd.f32 %v1038, %v1019
    %v1040 = vadd.f32 %v1039, %v1020
    %v1041 = vadd.f32 %v1040, %v1021
    %v1042 = vadd.f32 %v1041, %v1022
    %v1043 = vadd.f32 %v1042, %v1023
    %v1044 = vadd.f32 %v1043, %v1024
    %v1045 = vadd.f32 %v1044, %v1025
    %v1046 = vadd.f32 %v1045, %v1026
    %v1047 = vadd.f32 %v1046, %v1027
    %v1048 = vadd.f32 %v1047, %v1028
    %v1049 = vadd.f32 %v1048, %v1029
    %v1050 = vadd.f32 %v1049, %v1030
    %v1051 = vadd.f32 %v1050, %v1031
    %v1052 = vadd.f32 %v1051, %v1032
    %v1053 = vadd.f32 %v1052, %v1033
    %v1054 = vadd.f32 %v1053, %v1034
    %v1055 = vadd.f32 %v1054, %v1035
    %v1056 = vrot.slane %v1055, 4
    %v1057 = vadd.f32 %v1055, %v1056
    %v1058 = vrot.slane %v1057, 2
    %v1059 = vadd.f32 %v1057, %v1058
    %v1060 = vrot.slane %v1059, 1
    %v1061 = vadd.f32 %v1059, %v1060
    %1062 = vst [vmem:[%s6] sm:$0x1] %v1061
  $region25: #{generator_forward.13} parent=0 // pred_fallthru
    _
  // Predicated region
  $region26: #{generator_forward.13} parent=0 // pred_check
    _
  $region27: #{generator_forward.13} parent=0 // pred_check_branch
    %1064 = sbr.rel (0) target = $region29
  $region28: #{generator_forward.13} parent=0 // pred_region
    _
  $region29: #{generator_forward.13} parent=0 // pred_fallthru
    _
  // Predicated region
  $region30: #{generator_forward.13} parent=0 // pred_check
    _
  $region31: #{generator_forward.13} parent=0 // pred_check_branch
    %1066 = sbr.rel (0) target = $region33
  $region32: #{generator_forward.13} parent=0 // pred_region
    _
  $region33: #{generator_forward.13} parent=0 // pred_fallthru
    _
  // Predicated region
  $region34: #{generator_forward.13} parent=0 // pred_check
    _
  $region35: #{generator_forward.13} parent=0 // pred_check_branch
    %1068 = sbr.rel (0) target = $region37
  $region36: #{generator_forward.13} parent=0 // pred_region
    _
  $region37: #{generator_forward.13} parent=0 // pred_fallthru
    _
  // Predicated region
  $region38: #{generator_forward.13} parent=0 // pred_check
    _
  $region39: #{generator_forward.13} parent=0 // pred_check_branch
    %1070 = sbr.rel (0) target = $region41
  $region40: #{generator_forward.13} parent=0 // pred_region
    _
  $region41: #{generator_forward.13} parent=0 // pred_fallthru
    _
  // Predicated region
  $region42: #{generator_forward.13} parent=0 // pred_check
    _
  $region43: #{generator_forward.13} parent=0 // pred_check_branch
    %1072 = sbr.rel (0) target = $region45
  $region44: #{generator_forward.13} parent=0 // pred_region
    _
  $region45: #{generator_forward.13} parent=0 // pred_fallthru
    _
  // Predicated region
  $region46: #{generator_forward.13} parent=0 // pred_check
    _
  $region47: #{generator_forward.13} parent=0 // pred_check_branch
    %1074 = sbr.rel (0) target = $region49
  $region48: #{generator_forward.13} parent=0 // pred_region
    _
  $region49: #{generator_forward.13} parent=0 // pred_fallthru
    _

// kernel: tile.68
$region0: #{tile.68}
  #allocation0 [shape = 's32[1]{0}', space=sflag, size = 0x4, scoped, tag = 'scoped memory for tile.68']
  %s0 = inlined_call_operand.vmem [shape: f32[3], index: 0, kind: input, shape index: {}]
  %s1 = inlined_call_operand.vmem [shape: f32[4,3], index: 1, kind: output, shape index: {}]
  // Predicated region
  $region2: #{tile.68} parent=0 // pred_check
    _
  $region3: #{tile.68} parent=0 // pred_check_branch
    %3 = sbr.rel (0) target = $region5
  $region4: #{tile.68} parent=0 // pred_region
    _
  $region5: #{tile.68} parent=0 // pred_fallthru
    _
  %v4 = vld [vmem:[%s0] ss:$0 sm:$0xff]
  %5 = vst [vmem:[%s1] sm:$0xf] %v4

// kernel: tile.69
$region0: #{tile.69}
  %s0 = inlined_call_operand.vmem [shape: f32[4,3], index: 0, kind: input, shape index: {}]
  %s1 = inlined_call_operand.vmem [shape: f32[12], index: 1, kind: output, shape index: {}]
  $region1: #{tile.69} parent=0
    #allocation0 [shape = 'u8[4096]{0}', space=vmem, size = 0x1000, scoped, tag = 'scoped mem for output reshape']
    #allocation1 [shape = 'u8[4096]{0}', space=vmem, size = 0x1000, scoped, tag = 'scoped mem for input reshape']
    %s3 = sshllo.u32 0, 4
    %v4 = vld [vmem:[%s0] sm:%s3]
    %5 = vst [vmem:[#allocation1] sm:%s3] %v4
    %v6 = vld [vmem:[#allocation1] sm:$0x1]
    %vm7 = vcmask 23552
    %8 = vst.msk [vmem:[#allocation0] sm:$0x1] %vm7, %v6
    %s9 = scalar_lea.vmem [#allocation1], 3
    %v10 = vld [vmem:[%s9] sm:$0x1]
    %11 = vrot.lane.b32.xlu0 %v10, 9
    %v12 = vpop.permute.xlu0 %11
    %vm13 = vcmask 97352
    %14 = vst.msk [vmem:[#allocation0] sm:$0x1] %vm13, %v12
    %s15 = scalar_lea.vmem [#allocation1], 2
    %v16 = vld [vmem:[%s15] sm:$0x1]
    %17 = vrot.lane.b32.xlu0 %v16, 6
    %v18 = vpop.permute.xlu0 %17
    %vm19 = vcmask 72752
    %20 = vst.msk [vmem:[#allocation0] sm:$0x1] %vm19, %v18
    %s21 = scalar_lea.vmem [#allocation1], 1
    %v22 = vld [vmem:[%s21] sm:$0x1]
    %23 = vrot.lane.b32.xlu0 %v22, 3
    %v24 = vpop.permute.xlu0 %23
    %vm25 = vcmask 48152
    %26 = vst.msk [vmem:[#allocation0] sm:$0x1] %vm25, %v24
    %s28 = sshllo.u32 0, 1
    %v30 = vld [vmem:[#allocation0] sm:%s28]
    %s31 = sshllo.u32 0, 1
    %32 = vst [vmem:[%s1] sm:%s31] %v30

// kernel: generator_forward.15
$region0: #{generator_forward.15}
  #allocation0 [shape = 'u32[]', space=smem, size = 0x4, offset = 0x4, fixed_abs, tag = 'smem constant byte address 0x4 - core index']
  #allocation1 [shape = 'u32[144,128]{1,0:T(1,128)}', space=vmem, size = 0x12000, scoped, tag = 'internal scratch']
  #allocation2 [shape = 'f32[584,128]{1,0:T(8,128)}', space=vmem, size = 0x49000, scoped, tag = 'scratch operand']
  %s0 = inlined_call_operand.vmem [shape: bf16[584,128], index: 0, kind: input, shape index: {}]
  %s1 = inlined_call_operand.vmem [shape: bf16[128,128], index: 1, kind: input, shape index: {}]
  %s2 = inlined_call_operand.vmem [shape: f32[1,128], index: 2, kind: input, shape index: {}]
  %s3 = inlined_call_operand.vmem [shape: f32[584,128], index: 3, kind: output, shape index: {}]
  %s4 = sld [smem:[#allocation0]]
  $region30: #{generator_forward.15} parent=0
    _
  %s6 = ssub.s32 1, %s4
  %s7 = scalar_select 0, %s6, %s4
  // Predicated region
  $region2: #{generator_forward.15} parent=0 // pred_check
    _
  $region3: #{generator_forward.15} parent=0 // pred_check_branch
    %9 = sbr.rel (0) target = $region5
  $region4: #{generator_forward.15} parent=0 // pred_region
    _
  $region5: #{generator_forward.15} parent=0 // pred_fallthru
    _
  // Predicated region
  $region6: #{generator_forward.15} parent=0 // pred_check
    _
  $region7: #{generator_forward.15} parent=0 // pred_check_branch
    %11 = sbr.rel (0) target = $region9
  $region8: #{generator_forward.15} parent=0 // pred_region
    _
  $region9: #{generator_forward.15} parent=0 // pred_fallthru
    _
  // Predicated region
  $region10: #{generator_forward.15} parent=0 // pred_check
    _
  $region11: #{generator_forward.15} parent=0 // pred_check_branch
    %13 = sbr.rel (0) target = $region13
  $region12: #{generator_forward.15} parent=0 // pred_region
    _
  $region13: #{generator_forward.15} parent=0 // pred_fallthru
    _
  %p15 = scmp.eq.s32.totalorder 0, 0
  // Predicated region
  $region14: #{generator_forward.15} parent=0 // pred_check
    %p16 = pneg %p15
  $region15: #{generator_forward.15} parent=0 // pred_check_branch
    %18 = sbr.rel (%p16) target = $region17
  $region16: #{generator_forward.15} parent=0 // pred_region
    %19 = vst [vmem:[#allocation2] sm:$0xff] 0.0
    %20 = vst [vmem:[#allocation2 + $0x8] sm:$0xff] 0.0
    %21 = vst [vmem:[#allocation2 + $0x10] sm:$0xff] 0.0
    %22 = vst [vmem:[#allocation2 + $0x18] sm:$0xff] 0.0
    %23 = vst [vmem:[#allocation2 + $0x20] sm:$0xff] 0.0
    %24 = vst [vmem:[#allocation2 + $0x28] sm:$0xff] 0.0
    %25 = vst [vmem:[#allocation2 + $0x30] sm:$0xff] 0.0
    %26 = vst [vmem:[#allocation2 + $0x38] sm:$0xff] 0.0
    %27 = vst [vmem:[#allocation2 + $0x40] sm:$0xff] 0.0
    %28 = vst [vmem:[#allocation2 + $0x48] sm:$0xff] 0.0
    %29 = vst [vmem:[#allocation2 + $0x50] sm:$0xff] 0.0
    %30 = vst [vmem:[#allocation2 + $0x58] sm:$0xff] 0.0
    %31 = vst [vmem:[#allocation2 + $0x60] sm:$0xff] 0.0
    %32 = vst [vmem:[#allocation2 + $0x68] sm:$0xff] 0.0
    %33 = vst [vmem:[#allocation2 + $0x70] sm:$0xff] 0.0
    %34 = vst [vmem:[#allocation2 + $0x78] sm:$0xff] 0.0
    %35 = vst [vmem:[#allocation2 + $0x80] sm:$0xff] 0.0
    %36 = vst [vmem:[#allocation2 + $0x88] sm:$0xff] 0.0
    %37 = vst [vmem:[#allocation2 + $0x90] sm:$0xff] 0.0
    %38 = vst [vmem:[#allocation2 + $0x98] sm:$0xff] 0.0
    %39 = vst [vmem:[#allocation2 + $0xa0] sm:$0xff] 0.0
    %40 = vst [vmem:[#allocation2 + $0xa8] sm:$0xff] 0.0
    %41 = vst [vmem:[#allocation2 + $0xb0] sm:$0xff] 0.0
    %42 = vst [vmem:[#allocation2 + $0xb8] sm:$0xff] 0.0
    %43 = vst [vmem:[#allocation2 + $0xc0] sm:$0xff] 0.0
    %44 = vst [vmem:[#allocation2 + $0xc8] sm:$0xff] 0.0
    %45 = vst [vmem:[#allocation2 + $0xd0] sm:$0xff] 0.0
    %46 = vst [vmem:[#allocation2 + $0xd8] sm:$0xff] 0.0
    %47 = vst [vmem:[#allocation2 + $0xe0] sm:$0xff] 0.0
    %48 = vst [vmem:[#allocation2 + $0xe8] sm:$0xff] 0.0
    %49 = vst [vmem:[#allocation2 + $0xf0] sm:$0xff] 0.0
    %50 = vst [vmem:[#allocation2 + $0xf8] sm:$0xff] 0.0
    %51 = vst [vmem:[#allocation2 + $0x100] sm:$0xff] 0.0
    %52 = vst [vmem:[#allocation2 + $0x108] sm:$0xff] 0.0
    %53 = vst [vmem:[#allocation2 + $0x110] sm:$0xff] 0.0
    %54 = vst [vmem:[#allocation2 + $0x118] sm:$0xff] 0.0
    %55 = vst [vmem:[#allocation2 + $0x120] sm:$0xff] 0.0
    %56 = vst [vmem:[#allocation2 + $0x128] sm:$0xff] 0.0
    %57 = vst [vmem:[#allocation2 + $0x130] sm:$0xff] 0.0
    %58 = vst [vmem:[#allocation2 + $0x138] sm:$0xff] 0.0
    %59 = vst [vmem:[#allocation2 + $0x140] sm:$0xff] 0.0
    %60 = vst [vmem:[#allocation2 + $0x148] sm:$0xff] 0.0
    %61 = vst [vmem:[#allocation2 + $0x150] sm:$0xff] 0.0
    %62 = vst [vmem:[#allocation2 + $0x158] sm:$0xff] 0.0
    %63 = vst [vmem:[#allocation2 + $0x160] sm:$0xff] 0.0
    %64 = vst [vmem:[#allocation2 + $0x168] sm:$0xff] 0.0
    %65 = vst [vmem:[#allocation2 + $0x170] sm:$0xff] 0.0
    %66 = vst [vmem:[#allocation2 + $0x178] sm:$0xff] 0.0
    %67 = vst [vmem:[#allocation2 + $0x180] sm:$0xff] 0.0
    %68 = vst [vmem:[#allocation2 + $0x188] sm:$0xff] 0.0
    %69 = vst [vmem:[#allocation2 + $0x190] sm:$0xff] 0.0
    %70 = vst [vmem:[#allocation2 + $0x198] sm:$0xff] 0.0
    %71 = vst [vmem:[#allocation2 + $0x1a0] sm:$0xff] 0.0
    %72 = vst [vmem:[#allocation2 + $0x1a8] sm:$0xff] 0.0
    %73 = vst [vmem:[#allocation2 + $0x1b0] sm:$0xff] 0.0
    %74 = vst [vmem:[#allocation2 + $0x1b8] sm:$0xff] 0.0
    %75 = vst [vmem:[#allocation2 + $0x1c0] sm:$0xff] 0.0
    %76 = vst [vmem:[#allocation2 + $0x1c8] sm:$0xff] 0.0
    %77 = vst [vmem:[#allocation2 + $0x1d0] sm:$0xff] 0.0
    %78 = vst [vmem:[#allocation2 + $0x1d8] sm:$0xff] 0.0
    %79 = vst [vmem:[#allocation2 + $0x1e0] sm:$0xff] 0.0
    %80 = vst [vmem:[#allocation2 + $0x1e8] sm:$0xff] 0.0
    %81 = vst [vmem:[#allocation2 + $0x1f0] sm:$0xff] 0.0
    %82 = vst [vmem:[#allocation2 + $0x1f8] sm:$0xff] 0.0
    %83 = vst [vmem:[#allocation2 + $0x200] sm:$0xff] 0.0
    %84 = vst [vmem:[#allocation2 + $0x208] sm:$0xff] 0.0
    %85 = vst [vmem:[#allocation2 + $0x210] sm:$0xff] 0.0
    %86 = vst [vmem:[#allocation2 + $0x218] sm:$0xff] 0.0
    %87 = vst [vmem:[#allocation2 + $0x220] sm:$0xff] 0.0
    %88 = vst [vmem:[#allocation2 + $0x228] sm:$0xff] 0.0
    %89 = vst [vmem:[#allocation2 + $0x230] sm:$0xff] 0.0
    %90 = vst [vmem:[#allocation2 + $0x238] sm:$0xff] 0.0
    %91 = vst [vmem:[#allocation2 + $0x240] sm:$0xff] 0.0
  $region17: #{generator_forward.15} parent=0 // pred_fallthru
    _
  %v92 = vld [vmem:[#allocation2] sm:$0xff]
  %v93 = vld [vmem:[#allocation2 + $0x8] sm:$0xff]
  %v94 = vld [vmem:[#allocation2 + $0x10] sm:$0xff]
  %v95 = vld [vmem:[#allocation2 + $0x18] sm:$0xff]
  %v96 = vld [vmem:[#allocation2 + $0x20] sm:$0xff]
  %v97 = vld [vmem:[#allocation2 + $0x28] sm:$0xff]
  %v98 = vld [vmem:[#allocation2 + $0x30] sm:$0xff]
  %v99 = vld [vmem:[#allocation2 + $0x38] sm:$0xff]
  %v100 = vld [vmem:[#allocation2 + $0x40] sm:$0xff]
  %v101 = vld [vmem:[#allocation2 + $0x48] sm:$0xff]
  %v102 = vld [vmem:[#allocation2 + $0x50] sm:$0xff]
  %v103 = vld [vmem:[#allocation2 + $0x58] sm:$0xff]
  %v104 = vld [vmem:[#allocation2 + $0x60] sm:$0xff]
  %v105 = vld [vmem:[#allocation2 + $0x68] sm:$0xff]
  %v106 = vld [vmem:[#allocation2 + $0x70] sm:$0xff]
  %v107 = vld [vmem:[#allocation2 + $0x78] sm:$0xff]
  %v108 = vld [vmem:[#allocation2 + $0x80] sm:$0xff]
  %v109 = vld [vmem:[#allocation2 + $0x88] sm:$0xff]
  %v110 = vld [vmem:[#allocation2 + $0x90] sm:$0xff]
  %v111 = vld [vmem:[#allocation2 + $0x98] sm:$0xff]
  %v112 = vld [vmem:[#allocation2 + $0xa0] sm:$0xff]
  %v113 = vld [vmem:[#allocation2 + $0xa8] sm:$0xff]
  %v114 = vld [vmem:[#allocation2 + $0xb0] sm:$0xff]
  %v115 = vld [vmem:[#allocation2 + $0xb8] sm:$0xff]
  %v116 = vld [vmem:[#allocation2 + $0xc0] sm:$0xff]
  %v117 = vld [vmem:[#allocation2 + $0xc8] sm:$0xff]
  %v118 = vld [vmem:[#allocation2 + $0xd0] sm:$0xff]
  %v119 = vld [vmem:[#allocation2 + $0xd8] sm:$0xff]
  %v120 = vld [vmem:[#allocation2 + $0xe0] sm:$0xff]
  %v121 = vld [vmem:[#allocation2 + $0xe8] sm:$0xff]
  %v122 = vld [vmem:[#allocation2 + $0xf0] sm:$0xff]
  %v123 = vld [vmem:[#allocation2 + $0xf8] sm:$0xff]
  %v124 = vld [vmem:[#allocation2 + $0x100] sm:$0xff]
  %v125 = vld [vmem:[#allocation2 + $0x108] sm:$0xff]
  %v126 = vld [vmem:[#allocation2 + $0x110] sm:$0xff]
  %v127 = vld [vmem:[#allocation2 + $0x118] sm:$0xff]
  %v128 = vld [vmem:[#allocation2 + $0x120] sm:$0xff]
  %v129 = vld [vmem:[#allocation2 + $0x128] sm:$0xff]
  %v130 = vld [vmem:[#allocation2 + $0x130] sm:$0xff]
  %v131 = vld [vmem:[#allocation2 + $0x138] sm:$0xff]
  %v132 = vld [vmem:[#allocation2 + $0x140] sm:$0xff]
  %v133 = vld [vmem:[#allocation2 + $0x148] sm:$0xff]
  %v134 = vld [vmem:[#allocation2 + $0x150] sm:$0xff]
  %v135 = vld [vmem:[#allocation2 + $0x158] sm:$0xff]
  %v136 = vld [vmem:[#allocation2 + $0x160] sm:$0xff]
  %v137 = vld [vmem:[#allocation2 + $0x168] sm:$0xff]
  %v138 = vld [vmem:[#allocation2 + $0x170] sm:$0xff]
  %v139 = vld [vmem:[#allocation2 + $0x178] sm:$0xff]
  %v140 = vld [vmem:[#allocation2 + $0x180] sm:$0xff]
  %v141 = vld [vmem:[#allocation2 + $0x188] sm:$0xff]
  %v142 = vld [vmem:[#allocation2 + $0x190] sm:$0xff]
  %v143 = vld [vmem:[#allocation2 + $0x198] sm:$0xff]
  %v144 = vld [vmem:[#allocation2 + $0x1a0] sm:$0xff]
  %v145 = vld [vmem:[#allocation2 + $0x1a8] sm:$0xff]
  %v146 = vld [vmem:[#allocation2 + $0x1b0] sm:$0xff]
  %v147 = vld [vmem:[#allocation2 + $0x1b8] sm:$0xff]
  %v148 = vld [vmem:[#allocation2 + $0x1c0] sm:$0xff]
  %v149 = vld [vmem:[#allocation2 + $0x1c8] sm:$0xff]
  %v150 = vld [vmem:[#allocation2 + $0x1d0] sm:$0xff]
  %v151 = vld [vmem:[#allocation2 + $0x1d8] sm:$0xff]
  %v152 = vld [vmem:[#allocation2 + $0x1e0] sm:$0xff]
  %v153 = vld [vmem:[#allocation2 + $0x1e8] sm:$0xff]
  %v154 = vld [vmem:[#allocation2 + $0x1f0] sm:$0xff]
  %v155 = vld [vmem:[#allocation2 + $0x1f8] sm:$0xff]
  %v156 = vld [vmem:[#allocation2 + $0x200] sm:$0xff]
  %v157 = vld [vmem:[#allocation2 + $0x208] sm:$0xff]
  %v158 = vld [vmem:[#allocation2 + $0x210] sm:$0xff]
  %v159 = vld [vmem:[#allocation2 + $0x218] sm:$0xff]
  %v160 = vld [vmem:[#allocation2 + $0x220] sm:$0xff]
  %v161 = vld [vmem:[#allocation2 + $0x228] sm:$0xff]
  %v162 = vld [vmem:[#allocation2 + $0x230] sm:$0xff]
  %v163 = vld [vmem:[#allocation2 + $0x238] sm:$0xff]
  %v164 = vld [vmem:[#allocation2 + $0x240] sm:$0xff]
  %v165 = vld [vmem:[%s0] sm:$0xf]
  %v166 = vld [vmem:[%s0 + $0x4] sm:$0xf]
  %v167 = vld [vmem:[%s0 + $0x8] sm:$0xf]
  %v168 = vld [vmem:[%s0 + $0xc] sm:$0xf]
  %v169 = vld [vmem:[%s0 + $0x10] sm:$0xf]
  %v170 = vld [vmem:[%s0 + $0x14] sm:$0xf]
  %v171 = vld [vmem:[%s0 + $0x18] sm:$0xf]
  %v172 = vld [vmem:[%s0 + $0x1c] sm:$0xf]
  %v173 = vld [vmem:[%s0 + $0x20] sm:$0xf]
  %v174 = vld [vmem:[%s0 + $0x24] sm:$0xf]
  %v175 = vld [vmem:[%s0 + $0x28] sm:$0xf]
  %v176 = vld [vmem:[%s0 + $0x2c] sm:$0xf]
  %v177 = vld [vmem:[%s0 + $0x30] sm:$0xf]
  %v178 = vld [vmem:[%s0 + $0x34] sm:$0xf]
  %v179 = vld [vmem:[%s0 + $0x38] sm:$0xf]
  %v180 = vld [vmem:[%s0 + $0x3c] sm:$0xf]
  %v181 = vld [vmem:[%s0 + $0x40] sm:$0xf]
  %v182 = vld [vmem:[%s0 + $0x44] sm:$0xf]
  %v183 = vld [vmem:[%s0 + $0x48] sm:$0xf]
  %v184 = vld [vmem:[%s0 + $0x4c] sm:$0xf]
  %v185 = vld [vmem:[%s0 + $0x50] sm:$0xf]
  %v186 = vld [vmem:[%s0 + $0x54] sm:$0xf]
  %v187 = vld [vmem:[%s0 + $0x58] sm:$0xf]
  %v188 = vld [vmem:[%s0 + $0x5c] sm:$0xf]
  %v189 = vld [vmem:[%s0 + $0x60] sm:$0xf]
  %v190 = vld [vmem:[%s0 + $0x64] sm:$0xf]
  %v191 = vld [vmem:[%s0 + $0x68] sm:$0xf]
  %v192 = vld [vmem:[%s0 + $0x6c] sm:$0xf]
  %v193 = vld [vmem:[%s0 + $0x70] sm:$0xf]
  %v194 = vld [vmem:[%s0 + $0x74] sm:$0xf]
  %v195 = vld [vmem:[%s0 + $0x78] sm:$0xf]
  %v196 = vld [vmem:[%s0 + $0x7c] sm:$0xf]
  %v197 = vld [vmem:[%s0 + $0x80] sm:$0xf]
  %v198 = vld [vmem:[%s0 + $0x84] sm:$0xf]
  %v199 = vld [vmem:[%s0 + $0x88] sm:$0xf]
  %v200 = vld [vmem:[%s0 + $0x8c] sm:$0xf]
  %v201 = vld [vmem:[%s0 + $0x90] sm:$0xf]
  %v202 = vld [vmem:[%s0 + $0x94] sm:$0xf]
  %v203 = vld [vmem:[%s0 + $0x98] sm:$0xf]
  %v204 = vld [vmem:[%s0 + $0x9c] sm:$0xf]
  %v205 = vld [vmem:[%s0 + $0xa0] sm:$0xf]
  %v206 = vld [vmem:[%s0 + $0xa4] sm:$0xf]
  %v207 = vld [vmem:[%s0 + $0xa8] sm:$0xf]
  %v208 = vld [vmem:[%s0 + $0xac] sm:$0xf]
  %v209 = vld [vmem:[%s0 + $0xb0] sm:$0xf]
  %v210 = vld [vmem:[%s0 + $0xb4] sm:$0xf]
  %v211 = vld [vmem:[%s0 + $0xb8] sm:$0xf]
  %v212 = vld [vmem:[%s0 + $0xbc] sm:$0xf]
  %v213 = vld [vmem:[%s0 + $0xc0] sm:$0xf]
  %v214 = vld [vmem:[%s0 + $0xc4] sm:$0xf]
  %v215 = vld [vmem:[%s0 + $0xc8] sm:$0xf]
  %v216 = vld [vmem:[%s0 + $0xcc] sm:$0xf]
  %v217 = vld [vmem:[%s0 + $0xd0] sm:$0xf]
  %v218 = vld [vmem:[%s0 + $0xd4] sm:$0xf]
  %v219 = vld [vmem:[%s0 + $0xd8] sm:$0xf]
  %v220 = vld [vmem:[%s0 + $0xdc] sm:$0xf]
  %v221 = vld [vmem:[%s0 + $0xe0] sm:$0xf]
  %v222 = vld [vmem:[%s0 + $0xe4] sm:$0xf]
  %v223 = vld [vmem:[%s0 + $0xe8] sm:$0xf]
  %v224 = vld [vmem:[%s0 + $0xec] sm:$0xf]
  %v225 = vld [vmem:[%s0 + $0xf0] sm:$0xf]
  %v226 = vld [vmem:[%s0 + $0xf4] sm:$0xf]
  %v227 = vld [vmem:[%s0 + $0xf8] sm:$0xf]
  %v228 = vld [vmem:[%s0 + $0xfc] sm:$0xf]
  %v229 = vld [vmem:[%s0 + $0x100] sm:$0xf]
  %v230 = vld [vmem:[%s0 + $0x104] sm:$0xf]
  %v231 = vld [vmem:[%s0 + $0x108] sm:$0xf]
  %v232 = vld [vmem:[%s0 + $0x10c] sm:$0xf]
  %v233 = vld [vmem:[%s0 + $0x110] sm:$0xf]
  %v234 = vld [vmem:[%s0 + $0x114] sm:$0xf]
  %v235 = vld [vmem:[%s0 + $0x118] sm:$0xf]
  %v236 = vld [vmem:[%s0 + $0x11c] sm:$0xf]
  %v237 = vld [vmem:[%s0 + $0x120] sm:$0xf]
  %v238 = vld [vmem:[%s1] sm:$0xf]
  %v239 = vld [vmem:[%s1 + $0x4] sm:$0xf]
  %v240 = vld [vmem:[%s1 + $0x8] sm:$0xf]
  %v241 = vld [vmem:[%s1 + $0xc] sm:$0xf]
  %v242 = vld [vmem:[%s1 + $0x10] sm:$0xf]
  %v243 = vld [vmem:[%s1 + $0x14] sm:$0xf]
  %v244 = vld [vmem:[%s1 + $0x18] sm:$0xf]
  %v245 = vld [vmem:[%s1 + $0x1c] sm:$0xf]
  %v246 = vld [vmem:[%s1 + $0x20] sm:$0xf]
  %v247 = vld [vmem:[%s1 + $0x24] sm:$0xf]
  %v248 = vld [vmem:[%s1 + $0x28] sm:$0xf]
  %v249 = vld [vmem:[%s1 + $0x2c] sm:$0xf]
  %v250 = vld [vmem:[%s1 + $0x30] sm:$0xf]
  %v251 = vld [vmem:[%s1 + $0x34] sm:$0xf]
  %v252 = vld [vmem:[%s1 + $0x38] sm:$0xf]
  %v253 = vld [vmem:[%s1 + $0x3c] sm:$0xf]
  %v327 = vunpack.c.l.b16 %v165
  %v328 = vunpack.c.l.b16 %v166
  %v329 = vunpack.c.l.b16 %v167
  %v330 = vunpack.c.l.b16 %v168
  %v331 = vunpack.c.l.b16 %v169
  %v332 = vunpack.c.l.b16 %v170
  %v333 = vunpack.c.l.b16 %v171
  %v334 = vunpack.c.l.b16 %v172
  %v335 = vunpack.c.l.b16 %v173
  %v336 = vunpack.c.l.b16 %v174
  %v337 = vunpack.c.l.b16 %v175
  %v338 = vunpack.c.l.b16 %v176
  %v339 = vunpack.c.l.b16 %v177
  %v340 = vunpack.c.l.b16 %v178
  %v341 = vunpack.c.l.b16 %v179
  %v342 = vunpack.c.l.b16 %v180
  %v343 = vunpack.c.l.b16 %v181
  %v344 = vunpack.c.l.b16 %v182
  %v345 = vunpack.c.l.b16 %v183
  %v346 = vunpack.c.l.b16 %v184
  %v347 = vunpack.c.l.b16 %v185
  %v348 = vunpack.c.l.b16 %v186
  %v349 = vunpack.c.l.b16 %v187
  %v350 = vunpack.c.l.b16 %v188
  %v351 = vunpack.c.l.b16 %v189
  %v352 = vunpack.c.l.b16 %v190
  %v353 = vunpack.c.l.b16 %v191
  %v354 = vunpack.c.l.b16 %v192
  %v355 = vunpack.c.l.b16 %v193
  %v356 = vunpack.c.l.b16 %v194
  %v357 = vunpack.c.l.b16 %v195
  %v358 = vunpack.c.l.b16 %v196
  %v359 = vunpack.c.l.b16 %v197
  %v360 = vunpack.c.l.b16 %v198
  %v361 = vunpack.c.l.b16 %v199
  %v362 = vunpack.c.l.b16 %v200
  %v363 = vunpack.c.l.b16 %v201
  %v364 = vunpack.c.l.b16 %v202
  %v365 = vunpack.c.l.b16 %v203
  %v366 = vunpack.c.l.b16 %v204
  %v367 = vunpack.c.l.b16 %v205
  %v368 = vunpack.c.l.b16 %v206
  %v369 = vunpack.c.l.b16 %v207
  %v370 = vunpack.c.l.b16 %v208
  %v371 = vunpack.c.l.b16 %v209
  %v372 = vunpack.c.l.b16 %v210
  %v373 = vunpack.c.l.b16 %v211
  %v374 = vunpack.c.l.b16 %v212
  %v375 = vunpack.c.l.b16 %v213
  %v376 = vunpack.c.l.b16 %v214
  %v377 = vunpack.c.l.b16 %v215
  %v378 = vunpack.c.l.b16 %v216
  %v379 = vunpack.c.l.b16 %v217
  %v380 = vunpack.c.l.b16 %v218
  %v381 = vunpack.c.l.b16 %v219
  %v382 = vunpack.c.l.b16 %v220
  %v383 = vunpack.c.l.b16 %v221
  %v384 = vunpack.c.l.b16 %v222
  %v385 = vunpack.c.l.b16 %v223
  %v386 = vunpack.c.l.b16 %v224
  %v387 = vunpack.c.l.b16 %v225
  %v388 = vunpack.c.l.b16 %v226
  %v389 = vunpack.c.l.b16 %v227
  %v390 = vunpack.c.l.b16 %v228
  %v391 = vunpack.c.l.b16 %v229
  %v392 = vunpack.c.l.b16 %v230
  %v393 = vunpack.c.l.b16 %v231
  %v394 = vunpack.c.l.b16 %v232
  %v395 = vunpack.c.l.b16 %v233
  %v396 = vunpack.c.l.b16 %v234
  %v397 = vunpack.c.l.b16 %v235
  %v398 = vunpack.c.l.b16 %v236
  %v399 = vunpack.c.l.b16 %v237
  %v400 = vpack.c.b16 %v328, %v327
  %v401 = vpack.c.b16 %v330, %v329
  %v402 = vpack.c.b16 %v332, %v331
  %v403 = vpack.c.b16 %v334, %v333
  %v404 = vpack.c.b16 %v336, %v335
  %v405 = vpack.c.b16 %v338, %v337
  %v406 = vpack.c.b16 %v340, %v339
  %v407 = vpack.c.b16 %v342, %v341
  %v408 = vpack.c.b16 %v344, %v343
  %v409 = vpack.c.b16 %v346, %v345
  %v410 = vpack.c.b16 %v348, %v347
  %v411 = vpack.c.b16 %v350, %v349
  %v412 = vpack.c.b16 %v352, %v351
  %v413 = vpack.c.b16 %v354, %v353
  %v414 = vpack.c.b16 %v356, %v355
  %v415 = vpack.c.b16 %v358, %v357
  %v416 = vpack.c.b16 %v360, %v359
  %v417 = vpack.c.b16 %v362, %v361
  %v418 = vpack.c.b16 %v364, %v363
  %v419 = vpack.c.b16 %v366, %v365
  %v420 = vpack.c.b16 %v368, %v367
  %v421 = vpack.c.b16 %v370, %v369
  %v422 = vpack.c.b16 %v372, %v371
  %v423 = vpack.c.b16 %v374, %v373
  %v424 = vpack.c.b16 %v376, %v375
  %v425 = vpack.c.b16 %v378, %v377
  %v426 = vpack.c.b16 %v380, %v379
  %v427 = vpack.c.b16 %v382, %v381
  %v428 = vpack.c.b16 %v384, %v383
  %v429 = vpack.c.b16 %v386, %v385
  %v430 = vpack.c.b16 %v388, %v387
  %v431 = vpack.c.b16 %v390, %v389
  %v432 = vpack.c.b16 %v392, %v391
  %v433 = vpack.c.b16 %v394, %v393
  %v434 = vpack.c.b16 %v396, %v395
  %v435 = vpack.c.b16 %v398, %v397
  %v436 = vpack.c.b16 %v399, %v399
  %v490 = vunpack.c.l.b16 %v238
  %v491 = vunpack.c.l.b16 %v239
  %v492 = vunpack.c.l.b16 %v240
  %v493 = vunpack.c.l.b16 %v241
  %v494 = vunpack.c.l.b16 %v242
  %v495 = vunpack.c.l.b16 %v243
  %v496 = vunpack.c.l.b16 %v244
  %v497 = vunpack.c.l.b16 %v245
  %v498 = vunpack.c.l.b16 %v246
  %v499 = vunpack.c.l.b16 %v247
  %v500 = vunpack.c.l.b16 %v248
  %v501 = vunpack.c.l.b16 %v249
  %v502 = vunpack.c.l.b16 %v250
  %v503 = vunpack.c.l.b16 %v251
  %v504 = vunpack.c.l.b16 %v252
  %v505 = vunpack.c.l.b16 %v253
  %v506 = vpack.c.b16 %v491, %v490
  %v507 = vpack.c.b16 %v493, %v492
  %v508 = vpack.c.b16 %v495, %v494
  %v509 = vpack.c.b16 %v497, %v496
  %v510 = vpack.c.b16 %v499, %v498
  %v511 = vpack.c.b16 %v501, %v500
  %v512 = vpack.c.b16 %v503, %v502
  %v513 = vpack.c.b16 %v505, %v504
  %522 = vmatprep.subr.bf16.mxu0 0
  %523 = vmatpush1.bf16.msra.mxu0 %v506
  %524 = vmatprep.subr.bf16.mxu0 0
  %525 = vmatpush1.bf16.msra.mxu0 %v507
  %526 = vmatprep.subr.bf16.mxu0 0
  %527 = vmatpush1.bf16.msra.mxu0 %v508
  %528 = vmatprep.subr.bf16.mxu0 0
  %529 = vmatpush1.bf16.msra.mxu0 %v509
  %530 = vmatprep.subr.bf16.mxu0 0
  %531 = vmatpush1.bf16.msra.mxu0 %v510
  %532 = vmatprep.subr.bf16.mxu0 0
  %533 = vmatpush1.bf16.msra.mxu0 %v511
  %534 = vmatprep.subr.bf16.mxu0 0
  %535 = vmatpush1.bf16.msra.mxu0 %v512
  %536 = vmatprep.subr.bf16.mxu0 0
  %537 = vmatpush1.bf16.msra.mxu0 %v513
  %538 = vmatprep.subr.bf16.mxu0 0
  %539 = vmatpush1.bf16.msra.mxu0 0
  %540 = vmatprep.subr.bf16.mxu0 0
  %541 = vmatpush1.bf16.msra.mxu0 0
  %542 = vmatprep.subr.bf16.mxu0 0
  %543 = vmatpush1.bf16.msra.mxu0 0
  %544 = vmatprep.subr.bf16.mxu0 0
  %545 = vmatpush1.bf16.msra.mxu0 0
  %546 = vmatprep.subr.bf16.mxu0 0
  %547 = vmatpush1.bf16.msra.mxu0 0
  %548 = vmatprep.subr.bf16.mxu0 0
  %549 = vmatpush1.bf16.msra.mxu0 0
  %550 = vmatprep.subr.bf16.mxu0 0
  %551 = vmatpush1.bf16.msra.mxu0 0
  %552 = vmatprep.subr.bf16.mxu0 0
  %553 = vmatpush1.bf16.msra.mxu0 0
  %554 = vmatprep.mubr.bf16.mxu0 0
  %555 = vmatmul.mubr.bf16.gmra.mrb[0].mxu0 %v400
  %v556 = vpop.f32.mrb[0].mxu0
  %v557 = vadd.f32 0.0, %v556
  %v558 = vpop.f32.mrb[0].mxu0
  %v559 = vpop.f32.mrb[0].mxu0
  %v560 = vadd.f32 0.0, %v559
  %v561 = vpop.f32.mrb[0].mxu0
  %562 = vmatprep.mubr.bf16.mxu0 0
  %563 = vmatmul.mubr.bf16.gmra.mrb[0].mxu0 %v401
  %v564 = vpop.f32.mrb[0].mxu0
  %v565 = vadd.f32 0.0, %v564
  %v566 = vpop.f32.mrb[0].mxu0
  %v567 = vpop.f32.mrb[0].mxu0
  %v568 = vadd.f32 0.0, %v567
  %v569 = vpop.f32.mrb[0].mxu0
  %570 = vmatprep.mubr.bf16.mxu0 0
  %571 = vmatmul.mubr.bf16.gmra.mrb[0].mxu0 %v402
  %v572 = vpop.f32.mrb[0].mxu0
  %v573 = vadd.f32 0.0, %v572
  %v574 = vpop.f32.mrb[0].mxu0
  %v575 = vpop.f32.mrb[0].mxu0
  %v576 = vadd.f32 0.0, %v575
  %v577 = vpop.f32.mrb[0].mxu0
  %578 = vmatprep.mubr.bf16.mxu0 0
  %579 = vmatmul.mubr.bf16.gmra.mrb[0].mxu0 %v403
  %v580 = vpop.f32.mrb[0].mxu0
  %v581 = vadd.f32 0.0, %v580
  %v582 = vpop.f32.mrb[0].mxu0
  %v583 = vpop.f32.mrb[0].mxu0
  %v584 = vadd.f32 0.0, %v583
  %v585 = vpop.f32.mrb[0].mxu0
  %586 = vmatprep.mubr.bf16.mxu0 0
  %587 = vmatmul.mubr.bf16.gmra.mrb[0].mxu0 %v404
  %v588 = vpop.f32.mrb[0].mxu0
  %v589 = vadd.f32 0.0, %v588
  %v590 = vpop.f32.mrb[0].mxu0
  %v591 = vpop.f32.mrb[0].mxu0
  %v592 = vadd.f32 0.0, %v591
  %v593 = vpop.f32.mrb[0].mxu0
  %594 = vmatprep.mubr.bf16.mxu0 0
  %595 = vmatmul.mubr.bf16.gmra.mrb[0].mxu0 %v405
  %v596 = vpop.f32.mrb[0].mxu0
  %v597 = vadd.f32 0.0, %v596
  %v598 = vpop.f32.mrb[0].mxu0
  %v599 = vpop.f32.mrb[0].mxu0
  %v600 = vadd.f32 0.0, %v599
  %v601 = vpop.f32.mrb[0].mxu0
  %602 = vmatprep.mubr.bf16.mxu0 0
  %603 = vmatmul.mubr.bf16.gmra.mrb[0].mxu0 %v406
  %v604 = vpop.f32.mrb[0].mxu0
  %v605 = vadd.f32 0.0, %v604
  %v606 = vpop.f32.mrb[0].mxu0
  %v607 = vpop.f32.mrb[0].mxu0
  %v608 = vadd.f32 0.0, %v607
  %v609 = vpop.f32.mrb[0].mxu0
  %610 = vmatprep.mubr.bf16.mxu0 0
  %611 = vmatmul.mubr.bf16.gmra.mrb[0].mxu0 %v407
  %v612 = vpop.f32.mrb[0].mxu0
  %v613 = vadd.f32 0.0, %v612
  %v614 = vpop.f32.mrb[0].mxu0
  %v615 = vpop.f32.mrb[0].mxu0
  %v616 = vadd.f32 0.0, %v615
  %v617 = vpop.f32.mrb[0].mxu0
  %618 = vmatprep.mubr.bf16.mxu0 0
  %619 = vmatmul.mubr.bf16.gmra.mrb[0].mxu0 %v408
  %v620 = vpop.f32.mrb[0].mxu0
  %v621 = vadd.f32 0.0, %v620
  %v622 = vpop.f32.mrb[0].mxu0
  %v623 = vpop.f32.mrb[0].mxu0
  %v624 = vadd.f32 0.0, %v623
  %v625 = vpop.f32.mrb[0].mxu0
  %626 = vmatprep.mubr.bf16.mxu0 0
  %627 = vmatmul.mubr.bf16.gmra.mrb[0].mxu0 %v409
  %v628 = vpop.f32.mrb[0].mxu0
  %v629 = vadd.f32 0.0, %v628
  %v630 = vpop.f32.mrb[0].mxu0
  %v631 = vpop.f32.mrb[0].mxu0
  %v632 = vadd.f32 0.0, %v631
  %v633 = vpop.f32.mrb[0].mxu0
  %634 = vmatprep.mubr.bf16.mxu0 0
  %635 = vmatmul.mubr.bf16.gmra.mrb[0].mxu0 %v410
  %v636 = vpop.f32.mrb[0].mxu0
  %v637 = vadd.f32 0.0, %v636
  %v638 = vpop.f32.mrb[0].mxu0
  %v639 = vpop.f32.mrb[0].mxu0
  %v640 = vadd.f32 0.0, %v639
  %v641 = vpop.f32.mrb[0].mxu0
  %642 = vmatprep.mubr.bf16.mxu0 0
  %643 = vmatmul.mubr.bf16.gmra.mrb[0].mxu0 %v411
  %v644 = vpop.f32.mrb[0].mxu0
  %v645 = vadd.f32 0.0, %v644
  %v646 = vpop.f32.mrb[0].mxu0
  %v647 = vpop.f32.mrb[0].mxu0
  %v648 = vadd.f32 0.0, %v647
  %v649 = vpop.f32.mrb[0].mxu0
  %650 = vmatprep.mubr.bf16.mxu0 0
  %651 = vmatmul.mubr.bf16.gmra.mrb[0].mxu0 %v412
  %v652 = vpop.f32.mrb[0].mxu0
  %v653 = vadd.f32 0.0, %v652
  %v654 = vpop.f32.mrb[0].mxu0
  %v655 = vpop.f32.mrb[0].mxu0
  %v656 = vadd.f32 0.0, %v655
  %v657 = vpop.f32.mrb[0].mxu0
  %658 = vmatprep.mubr.bf16.mxu0 0
  %659 = vmatmul.mubr.bf16.gmra.mrb[0].mxu0 %v413
  %v660 = vpop.f32.mrb[0].mxu0
  %v661 = vadd.f32 0.0, %v660
  %v662 = vpop.f32.mrb[0].mxu0
  %v663 = vpop.f32.mrb[0].mxu0
  %v664 = vadd.f32 0.0, %v663
  %v665 = vpop.f32.mrb[0].mxu0
  %666 = vmatprep.mubr.bf16.mxu0 0
  %667 = vmatmul.mubr.bf16.gmra.mrb[0].mxu0 %v414
  %v668 = vpop.f32.mrb[0].mxu0
  %v669 = vadd.f32 0.0, %v668
  %v670 = vpop.f32.mrb[0].mxu0
  %v671 = vpop.f32.mrb[0].mxu0
  %v672 = vadd.f32 0.0, %v671
  %v673 = vpop.f32.mrb[0].mxu0
  %674 = vmatprep.mubr.bf16.mxu0 0
  %675 = vmatmul.mubr.bf16.gmra.mrb[0].mxu0 %v415
  %v676 = vpop.f32.mrb[0].mxu0
  %v677 = vadd.f32 0.0, %v676
  %v678 = vpop.f32.mrb[0].mxu0
  %v679 = vpop.f32.mrb[0].mxu0
  %v680 = vadd.f32 0.0, %v679
  %v681 = vpop.f32.mrb[0].mxu0
  %682 = vmatprep.mubr.bf16.mxu0 0
  %683 = vmatmul.mubr.bf16.gmra.mrb[0].mxu0 %v416
  %v684 = vpop.f32.mrb[0].mxu0
  %v685 = vadd.f32 0.0, %v684
  %v686 = vpop.f32.mrb[0].mxu0
  %v687 = vpop.f32.mrb[0].mxu0
  %v688 = vadd.f32 0.0, %v687
  %v689 = vpop.f32.mrb[0].mxu0
  %690 = vmatprep.mubr.bf16.mxu0 0
  %691 = vmatmul.mubr.bf16.gmra.mrb[0].mxu0 %v417
  %v692 = vpop.f32.mrb[0].mxu0
  %v693 = vadd.f32 0.0, %v692
  %v694 = vpop.f32.mrb[0].mxu0
  %v695 = vpop.f32.mrb[0].mxu0
  %v696 = vadd.f32 0.0, %v695
  %v697 = vpop.f32.mrb[0].mxu0
  %698 = vmatprep.mubr.bf16.mxu0 0
  %699 = vmatmul.mubr.bf16.gmra.mrb[0].mxu0 %v418
  %v700 = vpop.f32.mrb[0].mxu0
  %v701 = vadd.f32 0.0, %v700
  %v702 = vpop.f32.mrb[0].mxu0
  %v703 = vpop.f32.mrb[0].mxu0
  %v704 = vadd.f32 0.0, %v703
  %v705 = vpop.f32.mrb[0].mxu0
  %706 = vmatprep.mubr.bf16.mxu0 0
  %707 = vmatmul.mubr.bf16.gmra.mrb[0].mxu0 %v419
  %v708 = vpop.f32.mrb[0].mxu0
  %v709 = vadd.f32 0.0, %v708
  %v710 = vpop.f32.mrb[0].mxu0
  %v711 = vpop.f32.mrb[0].mxu0
  %v712 = vadd.f32 0.0, %v711
  %v713 = vpop.f32.mrb[0].mxu0
  %714 = vmatprep.mubr.bf16.mxu0 0
  %715 = vmatmul.mubr.bf16.gmra.mrb[0].mxu0 %v420
  %v716 = vpop.f32.mrb[0].mxu0
  %v717 = vadd.f32 0.0, %v716
  %v718 = vpop.f32.mrb[0].mxu0
  %v719 = vpop.f32.mrb[0].mxu0
  %v720 = vadd.f32 0.0, %v719
  %v721 = vpop.f32.mrb[0].mxu0
  %722 = vmatprep.mubr.bf16.mxu0 0
  %723 = vmatmul.mubr.bf16.gmra.mrb[0].mxu0 %v421
  %v724 = vpop.f32.mrb[0].mxu0
  %v725 = vadd.f32 0.0, %v724
  %v726 = vpop.f32.mrb[0].mxu0
  %v727 = vpop.f32.mrb[0].mxu0
  %v728 = vadd.f32 0.0, %v727
  %v729 = vpop.f32.mrb[0].mxu0
  %730 = vmatprep.mubr.bf16.mxu0 0
  %731 = vmatmul.mubr.bf16.gmra.mrb[0].mxu0 %v422
  %v732 = vpop.f32.mrb[0].mxu0
  %v733 = vadd.f32 0.0, %v732
  %v734 = vpop.f32.mrb[0].mxu0
  %v735 = vpop.f32.mrb[0].mxu0
  %v736 = vadd.f32 0.0, %v735
  %v737 = vpop.f32.mrb[0].mxu0
  %738 = vmatprep.mubr.bf16.mxu0 0
  %739 = vmatmul.mubr.bf16.gmra.mrb[0].mxu0 %v423
  %v740 = vpop.f32.mrb[0].mxu0
  %v741 = vadd.f32 0.0, %v740
  %v742 = vpop.f32.mrb[0].mxu0
  %v743 = vpop.f32.mrb[0].mxu0
  %v744 = vadd.f32 0.0, %v743
  %v745 = vpop.f32.mrb[0].mxu0
  %746 = vmatprep.mubr.bf16.mxu0 0
  %747 = vmatmul.mubr.bf16.gmra.mrb[0].mxu0 %v424
  %v748 = vpop.f32.mrb[0].mxu0
  %v749 = vadd.f32 0.0, %v748
  %v750 = vpop.f32.mrb[0].mxu0
  %v751 = vpop.f32.mrb[0].mxu0
  %v752 = vadd.f32 0.0, %v751
  %v753 = vpop.f32.mrb[0].mxu0
  %754 = vmatprep.mubr.bf16.mxu0 0
  %755 = vmatmul.mubr.bf16.gmra.mrb[0].mxu0 %v425
  %v756 = vpop.f32.mrb[0].mxu0
  %v757 = vadd.f32 0.0, %v756
  %v758 = vpop.f32.mrb[0].mxu0
  %v759 = vpop.f32.mrb[0].mxu0
  %v760 = vadd.f32 0.0, %v759
  %v761 = vpop.f32.mrb[0].mxu0
  %762 = vmatprep.mubr.bf16.mxu0 0
  %763 = vmatmul.mubr.bf16.gmra.mrb[0].mxu0 %v426
  %v764 = vpop.f32.mrb[0].mxu0
  %v765 = vadd.f32 0.0, %v764
  %v766 = vpop.f32.mrb[0].mxu0
  %v767 = vpop.f32.mrb[0].mxu0
  %v768 = vadd.f32 0.0, %v767
  %v769 = vpop.f32.mrb[0].mxu0
  %770 = vmatprep.mubr.bf16.mxu0 0
  %771 = vmatmul.mubr.bf16.gmra.mrb[0].mxu0 %v427
  %v772 = vpop.f32.mrb[0].mxu0
  %v773 = vadd.f32 0.0, %v772
  %v774 = vpop.f32.mrb[0].mxu0
  %v775 = vpop.f32.mrb[0].mxu0
  %v776 = vadd.f32 0.0, %v775
  %v777 = vpop.f32.mrb[0].mxu0
  %778 = vmatprep.mubr.bf16.mxu0 0
  %779 = vmatmul.mubr.bf16.gmra.mrb[0].mxu0 %v428
  %v780 = vpop.f32.mrb[0].mxu0
  %v781 = vadd.f32 0.0, %v780
  %v782 = vpop.f32.mrb[0].mxu0
  %v783 = vpop.f32.mrb[0].mxu0
  %v784 = vadd.f32 0.0, %v783
  %v785 = vpop.f32.mrb[0].mxu0
  %786 = vmatprep.mubr.bf16.mxu0 0
  %787 = vmatmul.mubr.bf16.gmra.mrb[0].mxu0 %v429
  %v788 = vpop.f32.mrb[0].mxu0
  %v789 = vadd.f32 0.0, %v788
  %v790 = vpop.f32.mrb[0].mxu0
  %v791 = vpop.f32.mrb[0].mxu0
  %v792 = vadd.f32 0.0, %v791
  %v793 = vpop.f32.mrb[0].mxu0
  %794 = vmatprep.mubr.bf16.mxu0 0
  %795 = vmatmul.mubr.bf16.gmra.mrb[0].mxu0 %v430
  %v796 = vpop.f32.mrb[0].mxu0
  %v797 = vadd.f32 0.0, %v796
  %v798 = vpop.f32.mrb[0].mxu0
  %v799 = vpop.f32.mrb[0].mxu0
  %v800 = vadd.f32 0.0, %v799
  %v801 = vpop.f32.mrb[0].mxu0
  %802 = vmatprep.mubr.bf16.mxu0 0
  %803 = vmatmul.mubr.bf16.gmra.mrb[0].mxu0 %v431
  %v804 = vpop.f32.mrb[0].mxu0
  %v805 = vadd.f32 0.0, %v804
  %v806 = vpop.f32.mrb[0].mxu0
  %v807 = vpop.f32.mrb[0].mxu0
  %v808 = vadd.f32 0.0, %v807
  %v809 = vpop.f32.mrb[0].mxu0
  %810 = vmatprep.mubr.bf16.mxu0 0
  %811 = vmatmul.mubr.bf16.gmra.mrb[0].mxu0 %v432
  %v812 = vpop.f32.mrb[0].mxu0
  %v813 = vadd.f32 0.0, %v812
  %v814 = vpop.f32.mrb[0].mxu0
  %v815 = vpop.f32.mrb[0].mxu0
  %v816 = vadd.f32 0.0, %v815
  %v817 = vpop.f32.mrb[0].mxu0
  %818 = vmatprep.mubr.bf16.mxu0 0
  %819 = vmatmul.mubr.bf16.gmra.mrb[0].mxu0 %v433
  %v820 = vpop.f32.mrb[0].mxu0
  %v821 = vadd.f32 0.0, %v820
  %v822 = vpop.f32.mrb[0].mxu0
  %v823 = vpop.f32.mrb[0].mxu0
  %v824 = vadd.f32 0.0, %v823
  %v825 = vpop.f32.mrb[0].mxu0
  %826 = vmatprep.mubr.bf16.mxu0 0
  %827 = vmatmul.mubr.bf16.gmra.mrb[0].mxu0 %v434
  %v828 = vpop.f32.mrb[0].mxu0
  %v829 = vadd.f32 0.0, %v828
  %v830 = vpop.f32.mrb[0].mxu0
  %v831 = vpop.f32.mrb[0].mxu0
  %v832 = vadd.f32 0.0, %v831
  %v833 = vpop.f32.mrb[0].mxu0
  %834 = vmatprep.mubr.bf16.mxu0 0
  %835 = vmatmul.mubr.bf16.gmra.mrb[0].mxu0 %v435
  %v836 = vpop.f32.mrb[0].mxu0
  %v837 = vadd.f32 0.0, %v836
  %v838 = vpop.f32.mrb[0].mxu0
  %v839 = vpop.f32.mrb[0].mxu0
  %v840 = vadd.f32 0.0, %v839
  %v841 = vpop.f32.mrb[0].mxu0
  %842 = vmatprep.mubr.bf16.mxu0 0
  %843 = vmatmul.mubr.bf16.gmra.mrb[0].mxu0 %v436
  %v844 = vpop.f32.mrb[0].mxu0
  %v845 = vadd.f32 0.0, %v844
  %v846 = vpop.f32.mrb[0].mxu0
  %v847 = vpop.f32.mrb[0].mxu0
  %v848 = vpop.f32.mrb[0].mxu0
  %849 = vdwg.mxu0
  %v850 = vadd.f32 %v92, %v557
  %v851 = vadd.f32 %v93, %v560
  %v852 = vadd.f32 %v94, %v565
  %v853 = vadd.f32 %v95, %v568
  %v854 = vadd.f32 %v96, %v573
  %v855 = vadd.f32 %v97, %v576
  %v856 = vadd.f32 %v98, %v581
  %v857 = vadd.f32 %v99, %v584
  %v858 = vadd.f32 %v100, %v589
  %v859 = vadd.f32 %v101, %v592
  %v860 = vadd.f32 %v102, %v597
  %v861 = vadd.f32 %v103, %v600
  %v862 = vadd.f32 %v104, %v605
  %v863 = vadd.f32 %v105, %v608
  %v864 = vadd.f32 %v106, %v613
  %v865 = vadd.f32 %v107, %v616
  %v866 = vadd.f32 %v108, %v621
  %v867 = vadd.f32 %v109, %v624
  %v868 = vadd.f32 %v110, %v629
  %v869 = vadd.f32 %v111, %v632
  %v870 = vadd.f32 %v112, %v637
  %v871 = vadd.f32 %v113, %v640
  %v872 = vadd.f32 %v114, %v645
  %v873 = vadd.f32 %v115, %v648
  %v874 = vadd.f32 %v116, %v653
  %v875 = vadd.f32 %v117, %v656
  %v876 = vadd.f32 %v118, %v661
  %v877 = vadd.f32 %v119, %v664
  %v878 = vadd.f32 %v120, %v669
  %v879 = vadd.f32 %v121, %v672
  %v880 = vadd.f32 %v122, %v677
  %v881 = vadd.f32 %v123, %v680
  %v882 = vadd.f32 %v124, %v685
  %v883 = vadd.f32 %v125, %v688
  %v884 = vadd.f32 %v126, %v693
  %v885 = vadd.f32 %v127, %v696
  %v886 = vadd.f32 %v128, %v701
  %v887 = vadd.f32 %v129, %v704
  %v888 = vadd.f32 %v130, %v709
  %v889 = vadd.f32 %v131, %v712
  %v890 = vadd.f32 %v132, %v717
  %v891 = vadd.f32 %v133, %v720
  %v892 = vadd.f32 %v134, %v725
  %v893 = vadd.f32 %v135, %v728
  %v894 = vadd.f32 %v136, %v733
  %v895 = vadd.f32 %v137, %v736
  %v896 = vadd.f32 %v138, %v741
  %v897 = vadd.f32 %v139, %v744
  %v898 = vadd.f32 %v140, %v749
  %v899 = vadd.f32 %v141, %v752
  %v900 = vadd.f32 %v142, %v757
  %v901 = vadd.f32 %v143, %v760
  %v902 = vadd.f32 %v144, %v765
  %v903 = vadd.f32 %v145, %v768
  %v904 = vadd.f32 %v146, %v773
  %v905 = vadd.f32 %v147, %v776
  %v906 = vadd.f32 %v148, %v781
  %v907 = vadd.f32 %v149, %v784
  %v908 = vadd.f32 %v150, %v789
  %v909 = vadd.f32 %v151, %v792
  %v910 = vadd.f32 %v152, %v797
  %v911 = vadd.f32 %v153, %v800
  %v912 = vadd.f32 %v154, %v805
  %v913 = vadd.f32 %v155, %v808
  %v914 = vadd.f32 %v156, %v813
  %v915 = vadd.f32 %v157, %v816
  %v916 = vadd.f32 %v158, %v821
  %v917 = vadd.f32 %v159, %v824
  %v918 = vadd.f32 %v160, %v829
  %v919 = vadd.f32 %v161, %v832
  %v920 = vadd.f32 %v162, %v837
  %v921 = vadd.f32 %v163, %v840
  %v922 = vadd.f32 %v164, %v845
  %923 = vst [vmem:[#allocation2] sm:$0xff] %v850
  %924 = vst [vmem:[#allocation2 + $0x8] sm:$0xff] %v851
  %925 = vst [vmem:[#allocation2 + $0x10] sm:$0xff] %v852
  %926 = vst [vmem:[#allocation2 + $0x18] sm:$0xff] %v853
  %927 = vst [vmem:[#allocation2 + $0x20] sm:$0xff] %v854
  %928 = vst [vmem:[#allocation2 + $0x28] sm:$0xff] %v855
  %929 = vst [vmem:[#allocation2 + $0x30] sm:$0xff] %v856
  %930 = vst [vmem:[#allocation2 + $0x38] sm:$0xff] %v857
  %931 = vst [vmem:[#allocation2 + $0x40] sm:$0xff] %v858
  %932 = vst [vmem:[#allocation2 + $0x48] sm:$0xff] %v859
  %933 = vst [vmem:[#allocation2 + $0x50] sm:$0xff] %v860
  %934 = vst [vmem:[#allocation2 + $0x58] sm:$0xff] %v861
  %935 = vst [vmem:[#allocation2 + $0x60] sm:$0xff] %v862
  %936 = vst [vmem:[#allocation2 + $0x68] sm:$0xff] %v863
  %937 = vst [vmem:[#allocation2 + $0x70] sm:$0xff] %v864
  %938 = vst [vmem:[#allocation2 + $0x78] sm:$0xff] %v865
  %939 = vst [vmem:[#allocation2 + $0x80] sm:$0xff] %v866
  %940 = vst [vmem:[#allocation2 + $0x88] sm:$0xff] %v867
  %941 = vst [vmem:[#allocation2 + $0x90] sm:$0xff] %v868
  %942 = vst [vmem:[#allocation2 + $0x98] sm:$0xff] %v869
  %943 = vst [vmem:[#allocation2 + $0xa0] sm:$0xff] %v870
  %944 = vst [vmem:[#allocation2 + $0xa8] sm:$0xff] %v871
  %945 = vst [vmem:[#allocation2 + $0xb0] sm:$0xff] %v872
  %946 = vst [vmem:[#allocation2 + $0xb8] sm:$0xff] %v873
  %947 = vst [vmem:[#allocation2 + $0xc0] sm:$0xff] %v874
  %948 = vst [vmem:[#allocation2 + $0xc8] sm:$0xff] %v875
  %949 = vst [vmem:[#allocation2 + $0xd0] sm:$0xff] %v876
  %950 = vst [vmem:[#allocation2 + $0xd8] sm:$0xff] %v877
  %951 = vst [vmem:[#allocation2 + $0xe0] sm:$0xff] %v878
  %952 = vst [vmem:[#allocation2 + $0xe8] sm:$0xff] %v879
  %953 = vst [vmem:[#allocation2 + $0xf0] sm:$0xff] %v880
  %954 = vst [vmem:[#allocation2 + $0xf8] sm:$0xff] %v881
  %955 = vst [vmem:[#allocation2 + $0x100] sm:$0xff] %v882
  %956 = vst [vmem:[#allocation2 + $0x108] sm:$0xff] %v883
  %957 = vst [vmem:[#allocation2 + $0x110] sm:$0xff] %v884
  %958 = vst [vmem:[#allocation2 + $0x118] sm:$0xff] %v885
  %959 = vst [vmem:[#allocation2 + $0x120] sm:$0xff] %v886
  %960 = vst [vmem:[#allocation2 + $0x128] sm:$0xff] %v887
  %961 = vst [vmem:[#allocation2 + $0x130] sm:$0xff] %v888
  %962 = vst [vmem:[#allocation2 + $0x138] sm:$0xff] %v889
  %963 = vst [vmem:[#allocation2 + $0x140] sm:$0xff] %v890
  %964 = vst [vmem:[#allocation2 + $0x148] sm:$0xff] %v891
  %965 = vst [vmem:[#allocation2 + $0x150] sm:$0xff] %v892
  %966 = vst [vmem:[#allocation2 + $0x158] sm:$0xff] %v893
  %967 = vst [vmem:[#allocation2 + $0x160] sm:$0xff] %v894
  %968 = vst [vmem:[#allocation2 + $0x168] sm:$0xff] %v895
  %969 = vst [vmem:[#allocation2 + $0x170] sm:$0xff] %v896
  %970 = vst [vmem:[#allocation2 + $0x178] sm:$0xff] %v897
  %971 = vst [vmem:[#allocation2 + $0x180] sm:$0xff] %v898
  %972 = vst [vmem:[#allocation2 + $0x188] sm:$0xff] %v899
  %973 = vst [vmem:[#allocation2 + $0x190] sm:$0xff] %v900
  %974 = vst [vmem:[#allocation2 + $0x198] sm:$0xff] %v901
  %975 = vst [vmem:[#allocation2 + $0x1a0] sm:$0xff] %v902
  %976 = vst [vmem:[#allocation2 + $0x1a8] sm:$0xff] %v903
  %977 = vst [vmem:[#allocation2 + $0x1b0] sm:$0xff] %v904
  %978 = vst [vmem:[#allocation2 + $0x1b8] sm:$0xff] %v905
  %979 = vst [vmem:[#allocation2 + $0x1c0] sm:$0xff] %v906
  %980 = vst [vmem:[#allocation2 + $0x1c8] sm:$0xff] %v907
  %981 = vst [vmem:[#allocation2 + $0x1d0] sm:$0xff] %v908
  %982 = vst [vmem:[#allocation2 + $0x1d8] sm:$0xff] %v909
  %983 = vst [vmem:[#allocation2 + $0x1e0] sm:$0xff] %v910
  %984 = vst [vmem:[#allocation2 + $0x1e8] sm:$0xff] %v911
  %985 = vst [vmem:[#allocation2 + $0x1f0] sm:$0xff] %v912
  %986 = vst [vmem:[#allocation2 + $0x1f8] sm:$0xff] %v913
  %987 = vst [vmem:[#allocation2 + $0x200] sm:$0xff] %v914
  %988 = vst [vmem:[#allocation2 + $0x208] sm:$0xff] %v915
  %989 = vst [vmem:[#allocation2 + $0x210] sm:$0xff] %v916
  %990 = vst [vmem:[#allocation2 + $0x218] sm:$0xff] %v917
  %991 = vst [vmem:[#allocation2 + $0x220] sm:$0xff] %v918
  %992 = vst [vmem:[#allocation2 + $0x228] sm:$0xff] %v919
  %993 = vst [vmem:[#allocation2 + $0x230] sm:$0xff] %v920
  %994 = vst [vmem:[#allocation2 + $0x238] sm:$0xff] %v921
  %995 = vst [vmem:[#allocation2 + $0x240] sm:$0xff] %v922
  // Predicated region
  $region18: #{generator_forward.15} parent=0 // pred_check
    %p996 = pneg %p15
  $region19: #{generator_forward.15} parent=0 // pred_check_branch
    %998 = sbr.rel (%p996) target = $region21
  $region20: #{generator_forward.15} parent=0 // pred_region
    %v999 = vld [vmem:[#allocation2] sm:$0xff]
    %v1000 = vld [vmem:[#allocation2 + $0x8] sm:$0xff]
    %v1001 = vld [vmem:[#allocation2 + $0x10] sm:$0xff]
    %v1002 = vld [vmem:[#allocation2 + $0x18] sm:$0xff]
    %v1003 = vld [vmem:[#allocation2 + $0x20] sm:$0xff]
    %v1004 = vld [vmem:[#allocation2 + $0x28] sm:$0xff]
    %v1005 = vld [vmem:[#allocation2 + $0x30] sm:$0xff]
    %v1006 = vld [vmem:[#allocation2 + $0x38] sm:$0xff]
    %v1007 = vld [vmem:[#allocation2 + $0x40] sm:$0xff]
    %v1008 = vld [vmem:[#allocation2 + $0x48] sm:$0xff]
    %v1009 = vld [vmem:[#allocation2 + $0x50] sm:$0xff]
    %v1010 = vld [vmem:[#allocation2 + $0x58] sm:$0xff]
    %v1011 = vld [vmem:[#allocation2 + $0x60] sm:$0xff]
    %v1012 = vld [vmem:[#allocation2 + $0x68] sm:$0xff]
    %v1013 = vld [vmem:[#allocation2 + $0x70] sm:$0xff]
    %v1014 = vld [vmem:[#allocation2 + $0x78] sm:$0xff]
    %v1015 = vld [vmem:[#allocation2 + $0x80] sm:$0xff]
    %v1016 = vld [vmem:[#allocation2 + $0x88] sm:$0xff]
    %v1017 = vld [vmem:[#allocation2 + $0x90] sm:$0xff]
    %v1018 = vld [vmem:[#allocation2 + $0x98] sm:$0xff]
    %v1019 = vld [vmem:[#allocation2 + $0xa0] sm:$0xff]
    %v1020 = vld [vmem:[#allocation2 + $0xa8] sm:$0xff]
    %v1021 = vld [vmem:[#allocation2 + $0xb0] sm:$0xff]
    %v1022 = vld [vmem:[#allocation2 + $0xb8] sm:$0xff]
    %v1023 = vld [vmem:[#allocation2 + $0xc0] sm:$0xff]
    %v1024 = vld [vmem:[#allocation2 + $0xc8] sm:$0xff]
    %v1025 = vld [vmem:[#allocation2 + $0xd0] sm:$0xff]
    %v1026 = vld [vmem:[#allocation2 + $0xd8] sm:$0xff]
    %v1027 = vld [vmem:[#allocation2 + $0xe0] sm:$0xff]
    %v1028 = vld [vmem:[#allocation2 + $0xe8] sm:$0xff]
    %v1029 = vld [vmem:[#allocation2 + $0xf0] sm:$0xff]
    %v1030 = vld [vmem:[#allocation2 + $0xf8] sm:$0xff]
    %v1031 = vld [vmem:[#allocation2 + $0x100] sm:$0xff]
    %v1032 = vld [vmem:[#allocation2 + $0x108] sm:$0xff]
    %v1033 = vld [vmem:[#allocation2 + $0x110] sm:$0xff]
    %v1034 = vld [vmem:[#allocation2 + $0x118] sm:$0xff]
    %v1035 = vld [vmem:[#allocation2 + $0x120] sm:$0xff]
    %v1036 = vld [vmem:[#allocation2 + $0x128] sm:$0xff]
    %v1037 = vld [vmem:[#allocation2 + $0x130] sm:$0xff]
    %v1038 = vld [vmem:[#allocation2 + $0x138] sm:$0xff]
    %v1039 = vld [vmem:[#allocation2 + $0x140] sm:$0xff]
    %v1040 = vld [vmem:[#allocation2 + $0x148] sm:$0xff]
    %v1041 = vld [vmem:[#allocation2 + $0x150] sm:$0xff]
    %v1042 = vld [vmem:[#allocation2 + $0x158] sm:$0xff]
    %v1043 = vld [vmem:[#allocation2 + $0x160] sm:$0xff]
    %v1044 = vld [vmem:[#allocation2 + $0x168] sm:$0xff]
    %v1045 = vld [vmem:[#allocation2 + $0x170] sm:$0xff]
    %v1046 = vld [vmem:[#allocation2 + $0x178] sm:$0xff]
    %v1047 = vld [vmem:[#allocation2 + $0x180] sm:$0xff]
    %v1048 = vld [vmem:[#allocation2 + $0x188] sm:$0xff]
    %v1049 = vld [vmem:[#allocation2 + $0x190] sm:$0xff]
    %v1050 = vld [vmem:[#allocation2 + $0x198] sm:$0xff]
    %v1051 = vld [vmem:[#allocation2 + $0x1a0] sm:$0xff]
    %v1052 = vld [vmem:[#allocation2 + $0x1a8] sm:$0xff]
    %v1053 = vld [vmem:[#allocation2 + $0x1b0] sm:$0xff]
    %v1054 = vld [vmem:[#allocation2 + $0x1b8] sm:$0xff]
    %v1055 = vld [vmem:[#allocation2 + $0x1c0] sm:$0xff]
    %v1056 = vld [vmem:[#allocation2 + $0x1c8] sm:$0xff]
    %v1057 = vld [vmem:[#allocation2 + $0x1d0] sm:$0xff]
    %v1058 = vld [vmem:[#allocation2 + $0x1d8] sm:$0xff]
    %v1059 = vld [vmem:[#allocation2 + $0x1e0] sm:$0xff]
    %v1060 = vld [vmem:[#allocation2 + $0x1e8] sm:$0xff]
    %v1061 = vld [vmem:[#allocation2 + $0x1f0] sm:$0xff]
    %v1062 = vld [vmem:[#allocation2 + $0x1f8] sm:$0xff]
    %v1063 = vld [vmem:[#allocation2 + $0x200] sm:$0xff]
    %v1064 = vld [vmem:[#allocation2 + $0x208] sm:$0xff]
    %v1065 = vld [vmem:[#allocation2 + $0x210] sm:$0xff]
    %v1066 = vld [vmem:[#allocation2 + $0x218] sm:$0xff]
    %v1067 = vld [vmem:[#allocation2 + $0x220] sm:$0xff]
    %v1068 = vld [vmem:[#allocation2 + $0x228] sm:$0xff]
    %v1069 = vld [vmem:[#allocation2 + $0x230] sm:$0xff]
    %v1070 = vld [vmem:[#allocation2 + $0x238] sm:$0xff]
    %v1071 = vld [vmem:[#allocation2 + $0x240] sm:$0xff]
    %v1072 = vld [vmem:[%s2] sm:$0x1]
    %v1074 = vlaneseq
    %v1075 = vshrl.u32 %v1074, 7
    %v1076 = vsub.s32 0, %v1075
    %v1077 = vrot.slane %v1072, %v1076
    %v1079 = vadd.f32 %v999, %v1077
    %v1080 = vadd.f32 %v1000, %v1077
    %v1081 = vadd.f32 %v1001, %v1077
    %v1082 = vadd.f32 %v1002, %v1077
    %v1083 = vadd.f32 %v1003, %v1077
    %v1084 = vadd.f32 %v1004, %v1077
    %v1085 = vadd.f32 %v1005, %v1077
    %v1086 = vadd.f32 %v1006, %v1077
    %v1087 = vadd.f32 %v1007, %v1077
    %v1088 = vadd.f32 %v1008, %v1077
    %v1089 = vadd.f32 %v1009, %v1077
    %v1090 = vadd.f32 %v1010, %v1077
    %v1091 = vadd.f32 %v1011, %v1077
    %v1092 = vadd.f32 %v1012, %v1077
    %v1093 = vadd.f32 %v1013, %v1077
    %v1094 = vadd.f32 %v1014, %v1077
    %v1095 = vadd.f32 %v1015, %v1077
    %v1096 = vadd.f32 %v1016, %v1077
    %v1097 = vadd.f32 %v1017, %v1077
    %v1098 = vadd.f32 %v1018, %v1077
    %v1099 = vadd.f32 %v1019, %v1077
    %v1100 = vadd.f32 %v1020, %v1077
    %v1101 = vadd.f32 %v1021, %v1077
    %v1102 = vadd.f32 %v1022, %v1077
    %v1103 = vadd.f32 %v1023, %v1077
    %v1104 = vadd.f32 %v1024, %v1077
    %v1105 = vadd.f32 %v1025, %v1077
    %v1106 = vadd.f32 %v1026, %v1077
    %v1107 = vadd.f32 %v1027, %v1077
    %v1108 = vadd.f32 %v1028, %v1077
    %v1109 = vadd.f32 %v1029, %v1077
    %v1110 = vadd.f32 %v1030, %v1077
    %v1111 = vadd.f32 %v1031, %v1077
    %v1112 = vadd.f32 %v1032, %v1077
    %v1113 = vadd.f32 %v1033, %v1077
    %v1114 = vadd.f32 %v1034, %v1077
    %v1115 = vadd.f32 %v1035, %v1077
    %v1116 = vadd.f32 %v1036, %v1077
    %v1117 = vadd.f32 %v1037, %v1077
    %v1118 = vadd.f32 %v1038, %v1077
    %v1119 = vadd.f32 %v1039, %v1077
    %v1120 = vadd.f32 %v1040, %v1077
    %v1121 = vadd.f32 %v1041, %v1077
    %v1122 = vadd.f32 %v1042, %v1077
    %v1123 = vadd.f32 %v1043, %v1077
    %v1124 = vadd.f32 %v1044, %v1077
    %v1125 = vadd.f32 %v1045, %v1077
    %v1126 = vadd.f32 %v1046, %v1077
    %v1127 = vadd.f32 %v1047, %v1077
    %v1128 = vadd.f32 %v1048, %v1077
    %v1129 = vadd.f32 %v1049, %v1077
    %v1130 = vadd.f32 %v1050, %v1077
    %v1131 = vadd.f32 %v1051, %v1077
    %v1132 = vadd.f32 %v1052, %v1077
    %v1133 = vadd.f32 %v1053, %v1077
    %v1134 = vadd.f32 %v1054, %v1077
    %v1135 = vadd.f32 %v1055, %v1077
    %v1136 = vadd.f32 %v1056, %v1077
    %v1137 = vadd.f32 %v1057, %v1077
    %v1138 = vadd.f32 %v1058, %v1077
    %v1139 = vadd.f32 %v1059, %v1077
    %v1140 = vadd.f32 %v1060, %v1077
    %v1141 = vadd.f32 %v1061, %v1077
    %v1142 = vadd.f32 %v1062, %v1077
    %v1143 = vadd.f32 %v1063, %v1077
    %v1144 = vadd.f32 %v1064, %v1077
    %v1145 = vadd.f32 %v1065, %v1077
    %v1146 = vadd.f32 %v1066, %v1077
    %v1147 = vadd.f32 %v1067, %v1077
    %v1148 = vadd.f32 %v1068, %v1077
    %v1149 = vadd.f32 %v1069, %v1077
    %v1150 = vadd.f32 %v1070, %v1077
    %v1151 = vadd.f32 %v1071, %v1077
    %v1152 = vtanh.pop %v1079
    %v1153 = vtanh.pop %v1080
    %v1154 = vtanh.pop %v1081
    %v1155 = vtanh.pop %v1082
    %v1156 = vtanh.pop %v1083
    %v1157 = vtanh.pop %v1084
    %v1158 = vtanh.pop %v1085
    %v1159 = vtanh.pop %v1086
    %v1160 = vtanh.pop %v1087
    %v1161 = vtanh.pop %v1088
    %v1162 = vtanh.pop %v1089
    %v1163 = vtanh.pop %v1090
    %v1164 = vtanh.pop %v1091
    %v1165 = vtanh.pop %v1092
    %v1166 = vtanh.pop %v1093
    %v1167 = vtanh.pop %v1094
    %v1168 = vtanh.pop %v1095
    %v1169 = vtanh.pop %v1096
    %v1170 = vtanh.pop %v1097
    %v1171 = vtanh.pop %v1098
    %v1172 = vtanh.pop %v1099
    %v1173 = vtanh.pop %v1100
    %v1174 = vtanh.pop %v1101
    %v1175 = vtanh.pop %v1102
    %v1176 = vtanh.pop %v1103
    %v1177 = vtanh.pop %v1104
    %v1178 = vtanh.pop %v1105
    %v1179 = vtanh.pop %v1106
    %v1180 = vtanh.pop %v1107
    %v1181 = vtanh.pop %v1108
    %v1182 = vtanh.pop %v1109
    %v1183 = vtanh.pop %v1110
    %v1184 = vtanh.pop %v1111
    %v1185 = vtanh.pop %v1112
    %v1186 = vtanh.pop %v1113
    %v1187 = vtanh.pop %v1114
    %v1188 = vtanh.pop %v1115
    %v1189 = vtanh.pop %v1116
    %v1190 = vtanh.pop %v1117
    %v1191 = vtanh.pop %v1118
    %v1192 = vtanh.pop %v1119
    %v1193 = vtanh.pop %v1120
    %v1194 = vtanh.pop %v1121
    %v1195 = vtanh.pop %v1122
    %v1196 = vtanh.pop %v1123
    %v1197 = vtanh.pop %v1124
    %v1198 = vtanh.pop %v1125
    %v1199 = vtanh.pop %v1126
    %v1200 = vtanh.pop %v1127
    %v1201 = vtanh.pop %v1128
    %v1202 = vtanh.pop %v1129
    %v1203 = vtanh.pop %v1130
    %v1204 = vtanh.pop %v1131
    %v1205 = vtanh.pop %v1132
    %v1206 = vtanh.pop %v1133
    %v1207 = vtanh.pop %v1134
    %v1208 = vtanh.pop %v1135
    %v1209 = vtanh.pop %v1136
    %v1210 = vtanh.pop %v1137
    %v1211 = vtanh.pop %v1138
    %v1212 = vtanh.pop %v1139
    %v1213 = vtanh.pop %v1140
    %v1214 = vtanh.pop %v1141
    %v1215 = vtanh.pop %v1142
    %v1216 = vtanh.pop %v1143
    %v1217 = vtanh.pop %v1144
    %v1218 = vtanh.pop %v1145
    %v1219 = vtanh.pop %v1146
    %v1220 = vtanh.pop %v1147
    %v1221 = vtanh.pop %v1148
    %v1222 = vtanh.pop %v1149
    %v1223 = vtanh.pop %v1150
    %v1224 = vtanh.pop %v1151
    %1225 = vst [vmem:[%s3] sm:$0xff] %v1152
    %1226 = vst [vmem:[%s3 + $0x8] sm:$0xff] %v1153
    %1227 = vst [vmem:[%s3 + $0x10] sm:$0xff] %v1154
    %1228 = vst [vmem:[%s3 + $0x18] sm:$0xff] %v1155
    %1229 = vst [vmem:[%s3 + $0x20] sm:$0xff] %v1156
    %1230 = vst [vmem:[%s3 + $0x28] sm:$0xff] %v1157
    %1231 = vst [vmem:[%s3 + $0x30] sm:$0xff] %v1158
    %1232 = vst [vmem:[%s3 + $0x38] sm:$0xff] %v1159
    %1233 = vst [vmem:[%s3 + $0x40] sm:$0xff] %v1160
    %1234 = vst [vmem:[%s3 + $0x48] sm:$0xff] %v1161
    %1235 = vst [vmem:[%s3 + $0x50] sm:$0xff] %v1162
    %1236 = vst [vmem:[%s3 + $0x58] sm:$0xff] %v1163
    %1237 = vst [vmem:[%s3 + $0x60] sm:$0xff] %v1164
    %1238 = vst [vmem:[%s3 + $0x68] sm:$0xff] %v1165
    %1239 = vst [vmem:[%s3 + $0x70] sm:$0xff] %v1166
    %1240 = vst [vmem:[%s3 + $0x78] sm:$0xff] %v1167
    %1241 = vst [vmem:[%s3 + $0x80] sm:$0xff] %v1168
    %1242 = vst [vmem:[%s3 + $0x88] sm:$0xff] %v1169
    %1243 = vst [vmem:[%s3 + $0x90] sm:$0xff] %v1170
    %1244 = vst [vmem:[%s3 + $0x98] sm:$0xff] %v1171
    %1245 = vst [vmem:[%s3 + $0xa0] sm:$0xff] %v1172
    %1246 = vst [vmem:[%s3 + $0xa8] sm:$0xff] %v1173
    %1247 = vst [vmem:[%s3 + $0xb0] sm:$0xff] %v1174
    %1248 = vst [vmem:[%s3 + $0xb8] sm:$0xff] %v1175
    %1249 = vst [vmem:[%s3 + $0xc0] sm:$0xff] %v1176
    %1250 = vst [vmem:[%s3 + $0xc8] sm:$0xff] %v1177
    %1251 = vst [vmem:[%s3 + $0xd0] sm:$0xff] %v1178
    %1252 = vst [vmem:[%s3 + $0xd8] sm:$0xff] %v1179
    %1253 = vst [vmem:[%s3 + $0xe0] sm:$0xff] %v1180
    %1254 = vst [vmem:[%s3 + $0xe8] sm:$0xff] %v1181
    %1255 = vst [vmem:[%s3 + $0xf0] sm:$0xff] %v1182
    %1256 = vst [vmem:[%s3 + $0xf8] sm:$0xff] %v1183
    %1257 = vst [vmem:[%s3 + $0x100] sm:$0xff] %v1184
    %1258 = vst [vmem:[%s3 + $0x108] sm:$0xff] %v1185
    %1259 = vst [vmem:[%s3 + $0x110] sm:$0xff] %v1186
    %1260 = vst [vmem:[%s3 + $0x118] sm:$0xff] %v1187
    %1261 = vst [vmem:[%s3 + $0x120] sm:$0xff] %v1188
    %1262 = vst [vmem:[%s3 + $0x128] sm:$0xff] %v1189
    %1263 = vst [vmem:[%s3 + $0x130] sm:$0xff] %v1190
    %1264 = vst [vmem:[%s3 + $0x138] sm:$0xff] %v1191
    %1265 = vst [vmem:[%s3 + $0x140] sm:$0xff] %v1192
    %1266 = vst [vmem:[%s3 + $0x148] sm:$0xff] %v1193
    %1267 = vst [vmem:[%s3 + $0x150] sm:$0xff] %v1194
    %1268 = vst [vmem:[%s3 + $0x158] sm:$0xff] %v1195
    %1269 = vst [vmem:[%s3 + $0x160] sm:$0xff] %v1196
    %1270 = vst [vmem:[%s3 + $0x168] sm:$0xff] %v1197
    %1271 = vst [vmem:[%s3 + $0x170] sm:$0xff] %v1198
    %1272 = vst [vmem:[%s3 + $0x178] sm:$0xff] %v1199
    %1273 = vst [vmem:[%s3 + $0x180] sm:$0xff] %v1200
    %1274 = vst [vmem:[%s3 + $0x188] sm:$0xff] %v1201
    %1275 = vst [vmem:[%s3 + $0x190] sm:$0xff] %v1202
    %1276 = vst [vmem:[%s3 + $0x198] sm:$0xff] %v1203
    %1277 = vst [vmem:[%s3 + $0x1a0] sm:$0xff] %v1204
    %1278 = vst [vmem:[%s3 + $0x1a8] sm:$0xff] %v1205
    %1279 = vst [vmem:[%s3 + $0x1b0] sm:$0xff] %v1206
    %1280 = vst [vmem:[%s3 + $0x1b8] sm:$0xff] %v1207
    %1281 = vst [vmem:[%s3 + $0x1c0] sm:$0xff] %v1208
    %1282 = vst [vmem:[%s3 + $0x1c8] sm:$0xff] %v1209
    %1283 = vst [vmem:[%s3 + $0x1d0] sm:$0xff] %v1210
    %1284 = vst [vmem:[%s3 + $0x1d8] sm:$0xff] %v1211
    %1285 = vst [vmem:[%s3 + $0x1e0] sm:$0xff] %v1212
    %1286 = vst [vmem:[%s3 + $0x1e8] sm:$0xff] %v1213
    %1287 = vst [vmem:[%s3 + $0x1f0] sm:$0xff] %v1214
    %1288 = vst [vmem:[%s3 + $0x1f8] sm:$0xff] %v1215
    %1289 = vst [vmem:[%s3 + $0x200] sm:$0xff] %v1216
    %1290 = vst [vmem:[%s3 + $0x208] sm:$0xff] %v1217
    %1291 = vst [vmem:[%s3 + $0x210] sm:$0xff] %v1218
    %1292 = vst [vmem:[%s3 + $0x218] sm:$0xff] %v1219
    %1293 = vst [vmem:[%s3 + $0x220] sm:$0xff] %v1220
    %1294 = vst [vmem:[%s3 + $0x228] sm:$0xff] %v1221
    %1295 = vst [vmem:[%s3 + $0x230] sm:$0xff] %v1222
    %1296 = vst [vmem:[%s3 + $0x238] sm:$0xff] %v1223
    %1297 = vst [vmem:[%s3 + $0x240] sm:$0xff] %v1224
  $region21: #{generator_forward.15} parent=0 // pred_fallthru
    _
  // Predicated region
  $region22: #{generator_forward.15} parent=0 // pred_check
    _
  $region23: #{generator_forward.15} parent=0 // pred_check_branch
    %1299 = sbr.rel (0) target = $region25
  $region24: #{generator_forward.15} parent=0 // pred_region
    _
  $region25: #{generator_forward.15} parent=0 // pred_fallthru
    _
  // Predicated region
  $region26: #{generator_forward.15} parent=0 // pred_check
    _
  $region27: #{generator_forward.15} parent=0 // pred_check_branch
    %1301 = sbr.rel (0) target = $region29
  $region28: #{generator_forward.15} parent=0 // pred_region
    _
  $region29: #{generator_forward.15} parent=0 // pred_fallthru
    _

</llo_original>
